<compile_context>
chip_gen: v7x
topology: tpu7x:2x2x1
jax: 0.10.0
libtpu: 0.0.40
codegen_flags: <defaults>
</compile_context>

<pallas_src>
import functools

import numpy as np

import jax
import jax.numpy as jnp
from jax.experimental import pallas as pl
from jax.experimental.pallas import tpu as pltpu

OUT_LANES = 128        # lane-padded output width -> unmasked stores
_NEG_SLOPE = 0.2
_BN_EPS = 1e-5


def _pick_taps_per_chunk():
    """conv2 contraction depth = TPC*F1: 128 on <=v5 MXUs, 256 on v6e/v7x."""
    try:
        kind = jax.devices()[0].device_kind.lower()
    except Exception:
        return 16
    if any(v in kind for v in ("v2", "v3", "v4", "v5")):
        return 16
    return 32


def _leaky(x):
    return jnp.where(x > 0, x, _NEG_SLOPE * x)


# ---------------------------------------------------------------------------
# Fused kernel: one grid step = one chunk of TPC conv2 taps
# ---------------------------------------------------------------------------
def _fused_disc_kernel(x_ref, mask_ref, w1_ref, b1_ref, w2c_ref,
                       w3l_ref, sel_ref, bc_ref, o_ref, acc_ref, *,
                       taps_per_chunk, n_pos, out_dim, eps):
    c = pl.program_id(0)

    @pl.when(c == 0)
    def _init():
        acc_ref[...] = jnp.zeros_like(acc_ref)

    # ---- conv1 (+bias+LeakyReLU) on this chunk's composed im2col columns ----
    # ONE (F1, K1) @ (K1, TPC*NPOS) bf16 MXU matmul with f32 accumulation.
    yc = jnp.dot(w1_ref[...], x_ref[...], preferred_element_type=jnp.float32)
    yc = _leaky(yc + b1_ref[...])
    # conv2 zero-padding columns MUST be zeroed AFTER bias+activation: they are
    # padding of the conv2 *input* (the conv1 activation), not of the raw input.
    yc = yc * mask_ref[...]

    # ---- stack the TPC lane-tile-aligned tap slices onto sublanes ----------
    # (F1, TPC*NPOS) -> (TPC*F1, NPOS); every slice is a whole (8,128) f32 tile
    # at a 128-lane-aligned offset, so this lowers to plain vreg copies.
    ystack = jnp.concatenate(
        [yc[:, j * n_pos:(j + 1) * n_pos] for j in range(taps_per_chunk)],
        axis=0).astype(jnp.bfloat16)

    # ---- conv2 for this chunk: ONE big-K MXU matmul (K = TPC*F1) ------------
    acc_ref[...] += jnp.dot(w2c_ref[...], ystack,
                            preferred_element_type=jnp.float32)

    # ---- epilogue on the last chunk -----------------------------------------
    @pl.when(c == pl.num_programs(0) - 1)
    def _epilogue():
        acc = acc_ref[...]                            # (F2, NPOS)
        # conv2 bias is skipped: exact no-op under training-mode BatchNorm3d
        # (gamma=1, beta=0) since BN subtracts the per-channel batch mean.
        mean = jnp.mean(acc, axis=1, keepdims=True)
        var = jnp.mean((acc - mean) ** 2, axis=1, keepdims=True)
        h2 = _leaky((acc - mean) * jax.lax.rsqrt(var + eps))   # (F2, NPOS)

        # conv3 (full-volume contraction) + flatten + Linear composed into one
        # weight; loop over the OD slabs instead of replicating h2.
        sel = sel_ref[...]                            # (NPOS, OUT_LANES)
        rows = []
        for o in range(out_dim):
            e = w3l_ref[o] * h2                       # (F2, NPOS)
            per_b = jnp.dot(e, sel, preferred_element_type=jnp.float32)
            rows.append(jnp.sum(per_b, axis=0, keepdims=True))   # (1, OUT_LANES)
        out = jnp.concatenate(rows, axis=0) + bc_ref[...]        # (OD, OUT_LANES)
        o_ref[...] = jax.nn.sigmoid(out)


# ---------------------------------------------------------------------------
# Wrapper: static composed-im2col index maps, one bf16 gather, one pallas_call
# ---------------------------------------------------------------------------
def discriminator_forward(params, z):
    w1, b1 = params["w1"], params["b1"]
    w2 = params["w2"]                       # b2 omitted: exact no-op under BN
    w3, b3 = params["w3"], params["b3"]
    wl, bl = params["w_lin"], params["b_lin"]

    B, C0, D0, _, _ = z.shape
    F1, F2, OD = w1.shape[0], w2.shape[0], w3.shape[0]
    K = w1.shape[2]                         # 4
    D1 = (D0 + 2 - K) // 2 + 1              # conv1 output spatial (8)
    D2 = (D1 + 2 - K) // 2 + 1              # conv2 output spatial (4)
    SP2 = D2 ** 3
    NPOS = B * SP2                          # conv2 output positions
    TAPS = K ** 3                           # 64
    K1 = C0 * TAPS                          # conv1 contraction depth (128)
    Dp = D0 + 2                             # padded input side

    TPC = _pick_taps_per_chunk()
    if TAPS % TPC:
        TPC = 16
    NCH = TAPS // TPC
    CC = TPC * NPOS

    assert NPOS % 128 == 0, "layout assumes 128-aligned (batch*spatial) lanes"
    assert B <= OUT_LANES

    # ---------- static (numpy) composed conv1-im2col ∘ conv2-colmap ----------
    t = np.arange(TAPS)
    kd2, kh2, kw2 = t // (K * K), (t // K) % K, t % K
    pos = np.arange(NPOS)
    bidx, r = pos // SP2, pos % SP2
    do, ho, wo = r // (D2 * D2), (r // D2) % D2, r % D2
    # conv1-output coords addressed by each (conv2 tap, conv2 position)
    c1d = 2 * do[None, :] + kd2[:, None] - 1
    c1h = 2 * ho[None, :] + kh2[:, None] - 1
    c1w = 2 * wo[None, :] + kw2[:, None] - 1
    valid = ((c1d >= 0) & (c1d < D1) & (c1h >= 0) & (c1h < D1)
             & (c1w >= 0) & (c1w < D1))
    c1dc = np.clip(c1d, 0, D1 - 1)
    c1hc = np.clip(c1h, 0, D1 - 1)
    c1wc = np.clip(c1w, 0, D1 - 1)

    kk = np.arange(K1)
    cin, rr = kk // TAPS, kk % TAPS
    kd1, kh1, kw1 = rr // (K * K), (rr // K) % K, rr % K

    # flat index into zp.reshape(-1) is separable: row offset + tap/pos base
    row_off = (((cin * Dp + kd1) * Dp + kh1) * Dp + kw1).astype(np.int32)       # (K1,)
    pos_base = (((bidx[None, :] * C0 * Dp + 2 * c1dc) * Dp + 2 * c1hc) * Dp
                + 2 * c1wc).astype(np.int32)                                    # (TAPS, NPOS)
    pos_base_ch = pos_base.reshape(NCH, CC)
    mask_ch = jnp.asarray(valid.astype(np.float32).reshape(NCH, 1, CC))

    # ---------- ONE bf16 gather from the padded input ----------
    zp = jnp.pad(z.astype(jnp.bfloat16),
                 ((0, 0), (0, 0), (1, 1), (1, 1), (1, 1)))
    idx = (jnp.asarray(row_off)[None, :, None]
           + jnp.asarray(pos_base_ch)[:, None, :])              # (NCH, K1, CC)
    x_ch = zp.reshape(-1)[idx]                                  # (NCH, K1, CC) bf16

    # ---------- weight re-arrangements (lane-dense) ----------
    w1_flat = w1.reshape(F1, K1).astype(jnp.bfloat16)           # (F1, K1)
    b1r = b1.reshape(F1, 1).astype(jnp.float32)
    # conv2: TPC taps concatenated along the contraction (lane) axis per chunk
    w2c = (w2.transpose(2, 3, 4, 0, 1)                          # (kd,kh,kw,F2,F1)
             .reshape(NCH, TPC, F2, F1)
             .transpose(0, 2, 1, 3)
             .reshape(NCH, F2, TPC * F1)
             .astype(jnp.bfloat16))                             # (NCH, F2, TPC*F1)

    # conv3 + Linear composed: wc[o, f2, sp] = sum_o' wl[o, o'] * w3[o', f2, sp]
    wc = (wl @ w3.reshape(OD, F2 * SP2)).reshape(OD, F2, SP2)
    w3l = jnp.broadcast_to(wc[:, :, None, :],
                           (OD, F2, B, SP2)).reshape(OD, F2, NPOS).astype(jnp.float32)
    sel_np = np.zeros((NPOS, OUT_LANES), np.float32)            # batch selector
    sel_np[np.arange(NPOS), np.arange(NPOS) // SP2] = 1.0
    sel = jnp.asarray(sel_np)
    bc = (wl @ b3 + bl).reshape(OD, 1).astype(jnp.float32)

    kernel = functools.partial(_fused_disc_kernel, taps_per_chunk=TPC,
                               n_pos=NPOS, out_dim=OD, eps=_BN_EPS)

    grid_spec = pltpu.PrefetchScalarGridSpec(
        num_scalar_prefetch=0,
        grid=(NCH,),
        in_specs=[
            pl.BlockSpec((None, K1, CC), lambda c: (c, 0, 0)),        # x chunk
            pl.BlockSpec((None, 1, CC), lambda c: (c, 0, 0)),         # pad mask chunk
            pl.BlockSpec((F1, K1), lambda c: (0, 0)),                 # conv1 weight
            pl.BlockSpec((F1, 1), lambda c: (0, 0)),                  # conv1 bias
            pl.BlockSpec((None, F2, TPC * F1), lambda c: (c, 0, 0)),  # conv2 chunk weight
            pl.BlockSpec((OD, F2, NPOS), lambda c: (0, 0, 0)),        # conv3+linear weight
            pl.BlockSpec((NPOS, OUT_LANES), lambda c: (0, 0)),        # batch selector
            pl.BlockSpec((OD, 1), lambda c: (0, 0)),                  # composed bias
        ],
        out_specs=pl.BlockSpec((OD, OUT_LANES), lambda c: (0, 0)),
        scratch_shapes=[pltpu.VMEM((F2, NPOS), jnp.float32)],
    )

    out_pad = pl.pallas_call(
        kernel,
        out_shape=jax.ShapeDtypeStruct((OD, OUT_LANES), jnp.float32),
        grid_spec=grid_spec,
        compiler_params=pltpu.CompilerParams(
            dimension_semantics=("arbitrary",)),
    )(x_ch, mask_ch, w1_flat, b1r, w2c, w3l, sel, bc)

    # out_pad[o, b] = final[b, o]; lanes >= B are padding
    return out_pad[:, :B].T


# ---------------------------------------------------------------------------
# Pure-JAX reference (correctness sanity check)
# ---------------------------------------------------------------------------
def ref_forward(params, z):
    dn = ("NCDHW", "OIDHW", "NCDHW")

    def conv(x, w, b, s, p):
        y = jax.lax.conv_general_dilated(
            x, w, (s, s, s), [(p, p)] * 3, dimension_numbers=dn)
        return y + b[None, :, None, None, None]

    h = conv(z, params["w1"], params["b1"], 2, 1)
    h = jnp.where(h > 0, h, 0.2 * h)
    h = conv(h, params["w2"], params["b2"], 2, 1)
    mean = h.mean(axis=(0, 2, 3, 4), keepdims=True)
    var = ((h - mean) ** 2).mean(axis=(0, 2, 3, 4), keepdims=True)
    h = (h - mean) * jax.lax.rsqrt(var + 1e-5)
    h = jnp.where(h > 0, h, 0.2 * h)
    o = conv(h, params["w3"], params["b3"], 4, 0)
    o = o.reshape(o.shape[0], -1)
    o = o @ params["w_lin"].T + params["b_lin"]
    return jax.nn.sigmoid(o)


# ---------------------------------------------------------------------------
# Main
# ---------------------------------------------------------------------------
if __name__ == "__main__":
    # Hyper-parameters consistent with the forward pass: Linear(4, output_dim)
    # requires the flattened output-conv size (== output_dim of conv3) to be 4.
    input_dim, label_dim = 2, 3
    num_filters = [8, 16]
    output_dim = 4

    key = jax.random.PRNGKey(0)
    k1, k2, k3, k4, kz = jax.random.split(key, 5)

    params = {
        # Conv weights ~ N(0, 0.02), biases = 0 (matches torch init in __init__)
        "w1": 0.02 * jax.random.normal(k1, (num_filters[0], input_dim, 4, 4, 4), jnp.float32),
        "b1": jnp.zeros((num_filters[0],), jnp.float32),
        "w2": 0.02 * jax.random.normal(k2, (num_filters[1], num_filters[0], 4, 4, 4), jnp.float32),
        "b2": jnp.zeros((num_filters[1],), jnp.float32),
        "w3": 0.02 * jax.random.normal(k3, (output_dim, num_filters[1], 4, 4, 4), jnp.float32),
        "b3": jnp.zeros((output_dim,), jnp.float32),
        # Linear(4, output_dim): weight (out_features, in_features), bias = 0
        "w_lin": 0.02 * jax.random.normal(k4, (output_dim, 4), jnp.float32),
        "b_lin": jnp.zeros((output_dim,), jnp.float32),
    }

    # Input z: (B, input_dim, D, H, W) = (2, 2, 16, 16, 16)
    z = jax.random.normal(kz, (2, input_dim, 16, 16, 16), jnp.float32)

    out = jax.jit(discriminator_forward)(params, z)
    out = jax.block_until_ready(out)

    ref = jax.block_until_ready(ref_forward(params, z))
    assert out.shape == (2, output_dim), out.shape
    assert jnp.max(jnp.abs(out - ref)) < 1e-2, "mismatch vs reference"

    print("KERNEL_OK")
</pallas_src>

<mosaic_0001>
module attributes {stable_mosaic.version = 11 : i64} {
  func.func @_fused_disc_kernel(%arg0: i32, %arg1: memref<1x128x4096xbf16, #tpu.memory_space<vmem>>, %arg2: memref<1x1x4096xf32, #tpu.memory_space<vmem>>, %arg3: memref<8x128xbf16, #tpu.memory_space<vmem>>, %arg4: memref<8x1xf32, #tpu.memory_space<vmem>>, %arg5: memref<1x16x256xbf16, #tpu.memory_space<vmem>>, %arg6: memref<4x16x128xf32, #tpu.memory_space<vmem>>, %arg7: memref<128x128xf32, #tpu.memory_space<vmem>>, %arg8: memref<4x1xf32, #tpu.memory_space<vmem>>, %arg9: memref<4x128xf32, #tpu.memory_space<vmem>>, %arg10: memref<16x128xf32, #tpu.memory_space<vmem>>) attributes {dimension_semantics = [#tpu.dimension_semantics<arbitrary>], iteration_bounds = array<i64: 2>, scalar_prefetch = 0 : i64, scratch_operands = 1 : i64, tpu.core_type = #tpu.core_type<tc>, window_params = [{transform_indices = @transform_0, window_bounds = array<i64: 1, 128, 4096>}, {transform_indices = @transform_1, window_bounds = array<i64: 1, 1, 4096>}, {pipeline_mode = #tpu.pipeline_mode<synchronous>, transform_indices = @transform_2, window_bounds = array<i64: 8, 128>}, {pipeline_mode = #tpu.pipeline_mode<synchronous>, transform_indices = @transform_3, window_bounds = array<i64: 8, 1>}, {transform_indices = @transform_4, window_bounds = array<i64: 1, 16, 256>}, {pipeline_mode = #tpu.pipeline_mode<synchronous>, transform_indices = @transform_5, window_bounds = array<i64: 4, 16, 128>}, {pipeline_mode = #tpu.pipeline_mode<synchronous>, transform_indices = @transform_6, window_bounds = array<i64: 128, 128>}, {pipeline_mode = #tpu.pipeline_mode<synchronous>, transform_indices = @transform_7, window_bounds = array<i64: 4, 1>}, {pipeline_mode = #tpu.pipeline_mode<synchronous>, transform_indices = @transform_8, window_bounds = array<i64: 4, 128>}]} {
    %c0_i32 = arith.constant 0 : i32
    %0 = arith.cmpi eq, %arg0, %c0_i32 : i32
    %1 = arith.extui %0 : i1 to i32
    %c0_i32_0 = arith.constant 0 : i32
    %2 = arith.cmpi ne, %1, %c0_i32_0 : i32
    scf.if %2 {
      %cst_21 = arith.constant 0.000000e+00 : f32
      %64 = vector.broadcast %cst_21 : f32 to vector<16x128xf32>
      %c0_22 = arith.constant 0 : index
      %c0_23 = arith.constant 0 : index
      %65 = vector.load %arg10[%c0_22, %c0_23] : memref<16x128xf32, #tpu.memory_space<vmem>>, vector<16x128xf32>
      tpu.vector_store %arg10[%c0_22, %c0_23], %64 {strides = array<i32>} : memref<16x128xf32, #tpu.memory_space<vmem>>, vector<16x128xf32>,
    } else {
    }
    %c0 = arith.constant 0 : index
    %c0_1 = arith.constant 0 : index
    %3 = vector.load %arg3[%c0, %c0_1] : memref<8x128xbf16, #tpu.memory_space<vmem>>, vector<8x128xbf16>
    %c0_2 = arith.constant 0 : index
    %c0_3 = arith.constant 0 : index
    %c0_4 = arith.constant 0 : index
    %4 = vector.load %arg1[%c0_2, %c0_3, %c0_4] : memref<1x128x4096xbf16, #tpu.memory_space<vmem>>, vector<1x128x4096xbf16>
    %5 = vector.shape_cast %4 : vector<1x128x4096xbf16> to vector<128x4096xbf16>
    %cst = arith.constant dense<0.000000e+00> : vector<8x4096xf32>
    %6 = tpu.matmul %3, %5, %cst {dimension_numbers = #tpu.dot_dimension_numbers<[1], [0], [0], [1], [0, 0, 1, 1], [], []>} : vector<8x128xbf16>, vector<128x4096xbf16>, vector<8x4096xf32> -> vector<8x4096xf32>
    %c0_5 = arith.constant 0 : index
    %c0_6 = arith.constant 0 : index
    %7 = vector.load %arg4[%c0_5, %c0_6] : memref<8x1xf32, #tpu.memory_space<vmem>>, vector<8x1xf32>
    %8 = vector.broadcast %7 : vector<8x1xf32> to vector<8x4096xf32>
    %9 = arith.addf %6, %8 : vector<8x4096xf32>
    %cst_7 = arith.constant 0.000000e+00 : f32
    %10 = vector.broadcast %cst_7 : f32 to vector<8x4096xf32>
    %11 = arith.cmpf ogt, %9, %10 : vector<8x4096xf32>
    %cst_8 = arith.constant 2.000000e-01 : f32
    %12 = vector.broadcast %cst_8 : f32 to vector<8x4096xf32>
    %13 = arith.mulf %12, %9 : vector<8x4096xf32>
    %14 = arith.select %11, %9, %13 : vector<8x4096xi1>, vector<8x4096xf32>
    %c0_9 = arith.constant 0 : index
    %c0_10 = arith.constant 0 : index
    %c0_11 = arith.constant 0 : index
    %15 = vector.load %arg2[%c0_9, %c0_10, %c0_11] : memref<1x1x4096xf32, #tpu.memory_space<vmem>>, vector<1x1x4096xf32>
    %16 = vector.shape_cast %15 : vector<1x1x4096xf32> to vector<1x4096xf32>
    %17 = vector.broadcast %16 : vector<1x4096xf32> to vector<8x4096xf32>
    %18 = arith.mulf %14, %17 : vector<8x4096xf32>
    %19 = vector.extract_strided_slice %18 {offsets = [0, 0], sizes = [8, 128], strides = [1, 1]} : vector<8x4096xf32> to vector<8x128xf32>
    %20 = vector.extract_strided_slice %18 {offsets = [0, 128], sizes = [8, 128], strides = [1, 1]} : vector<8x4096xf32> to vector<8x128xf32>
    %21 = vector.extract_strided_slice %18 {offsets = [0, 256], sizes = [8, 128], strides = [1, 1]} : vector<8x4096xf32> to vector<8x128xf32>
    %22 = vector.extract_strided_slice %18 {offsets = [0, 384], sizes = [8, 128], strides = [1, 1]} : vector<8x4096xf32> to vector<8x128xf32>
    %23 = vector.extract_strided_slice %18 {offsets = [0, 512], sizes = [8, 128], strides = [1, 1]} : vector<8x4096xf32> to vector<8x128xf32>
    %24 = vector.extract_strided_slice %18 {offsets = [0, 640], sizes = [8, 128], strides = [1, 1]} : vector<8x4096xf32> to vector<8x128xf32>
    %25 = vector.extract_strided_slice %18 {offsets = [0, 768], sizes = [8, 128], strides = [1, 1]} : vector<8x4096xf32> to vector<8x128xf32>
    %26 = vector.extract_strided_slice %18 {offsets = [0, 896], sizes = [8, 128], strides = [1, 1]} : vector<8x4096xf32> to vector<8x128xf32>
    %27 = vector.extract_strided_slice %18 {offsets = [0, 1024], sizes = [8, 128], strides = [1, 1]} : vector<8x4096xf32> to vector<8x128xf32>
    %28 = vector.extract_strided_slice %18 {offsets = [0, 1152], sizes = [8, 128], strides = [1, 1]} : vector<8x4096xf32> to vector<8x128xf32>
    %29 = vector.extract_strided_slice %18 {offsets = [0, 1280], sizes = [8, 128], strides = [1, 1]} : vector<8x4096xf32> to vector<8x128xf32>
    %30 = vector.extract_strided_slice %18 {offsets = [0, 1408], sizes = [8, 128], strides = [1, 1]} : vector<8x4096xf32> to vector<8x128xf32>
    %31 = vector.extract_strided_slice %18 {offsets = [0, 1536], sizes = [8, 128], strides = [1, 1]} : vector<8x4096xf32> to vector<8x128xf32>
    %32 = vector.extract_strided_slice %18 {offsets = [0, 1664], sizes = [8, 128], strides = [1, 1]} : vector<8x4096xf32> to vector<8x128xf32>
    %33 = vector.extract_strided_slice %18 {offsets = [0, 1792], sizes = [8, 128], strides = [1, 1]} : vector<8x4096xf32> to vector<8x128xf32>
    %34 = vector.extract_strided_slice %18 {offsets = [0, 1920], sizes = [8, 128], strides = [1, 1]} : vector<8x4096xf32> to vector<8x128xf32>
    %35 = vector.extract_strided_slice %18 {offsets = [0, 2048], sizes = [8, 128], strides = [1, 1]} : vector<8x4096xf32> to vector<8x128xf32>
    %36 = vector.extract_strided_slice %18 {offsets = [0, 2176], sizes = [8, 128], strides = [1, 1]} : vector<8x4096xf32> to vector<8x128xf32>
    %37 = vector.extract_strided_slice %18 {offsets = [0, 2304], sizes = [8, 128], strides = [1, 1]} : vector<8x4096xf32> to vector<8x128xf32>
    %38 = vector.extract_strided_slice %18 {offsets = [0, 2432], sizes = [8, 128], strides = [1, 1]} : vector<8x4096xf32> to vector<8x128xf32>
    %39 = vector.extract_strided_slice %18 {offsets = [0, 2560], sizes = [8, 128], strides = [1, 1]} : vector<8x4096xf32> to vector<8x128xf32>
    %40 = vector.extract_strided_slice %18 {offsets = [0, 2688], sizes = [8, 128], strides = [1, 1]} : vector<8x4096xf32> to vector<8x128xf32>
    %41 = vector.extract_strided_slice %18 {offsets = [0, 2816], sizes = [8, 128], strides = [1, 1]} : vector<8x4096xf32> to vector<8x128xf32>
    %42 = vector.extract_strided_slice %18 {offsets = [0, 2944], sizes = [8, 128], strides = [1, 1]} : vector<8x4096xf32> to vector<8x128xf32>
    %43 = vector.extract_strided_slice %18 {offsets = [0, 3072], sizes = [8, 128], strides = [1, 1]} : vector<8x4096xf32> to vector<8x128xf32>
    %44 = vector.extract_strided_slice %18 {offsets = [0, 3200], sizes = [8, 128], strides = [1, 1]} : vector<8x4096xf32> to vector<8x128xf32>
    %45 = vector.extract_strided_slice %18 {offsets = [0, 3328], sizes = [8, 128], strides = [1, 1]} : vector<8x4096xf32> to vector<8x128xf32>
    %46 = vector.extract_strided_slice %18 {offsets = [0, 3456], sizes = [8, 128], strides = [1, 1]} : vector<8x4096xf32> to vector<8x128xf32>
    %47 = vector.extract_strided_slice %18 {offsets = [0, 3584], sizes = [8, 128], strides = [1, 1]} : vector<8x4096xf32> to vector<8x128xf32>
    %48 = vector.extract_strided_slice %18 {offsets = [0, 3712], sizes = [8, 128], strides = [1, 1]} : vector<8x4096xf32> to vector<8x128xf32>
    %49 = vector.extract_strided_slice %18 {offsets = [0, 3840], sizes = [8, 128], strides = [1, 1]} : vector<8x4096xf32> to vector<8x128xf32>
    %50 = vector.extract_strided_slice %18 {offsets = [0, 3968], sizes = [8, 128], strides = [1, 1]} : vector<8x4096xf32> to vector<8x128xf32>
    %51 = tpu.concatenate %19, %20, %21, %22, %23, %24, %25, %26, %27, %28, %29, %30, %31, %32, %33, %34 in 0 : vector<8x128xf32>, vector<8x128xf32>, vector<8x128xf32>, vector<8x128xf32>, vector<8x128xf32>, vector<8x128xf32>, vector<8x128xf32>, vector<8x128xf32>, vector<8x128xf32>, vector<8x128xf32>, vector<8x128xf32>, vector<8x128xf32>, vector<8x128xf32>, vector<8x128xf32>, vector<8x128xf32>, vector<8x128xf32> -> vector<128x128xf32>
    %52 = tpu.concatenate %35, %36, %37, %38, %39, %40, %41, %42, %43, %44, %45, %46, %47, %48, %49, %50 in 0 : vector<8x128xf32>, vector<8x128xf32>, vector<8x128xf32>, vector<8x128xf32>, vector<8x128xf32>, vector<8x128xf32>, vector<8x128xf32>, vector<8x128xf32>, vector<8x128xf32>, vector<8x128xf32>, vector<8x128xf32>, vector<8x128xf32>, vector<8x128xf32>, vector<8x128xf32>, vector<8x128xf32>, vector<8x128xf32> -> vector<128x128xf32>
    %53 = tpu.concatenate %51, %52 in 0 : vector<128x128xf32>, vector<128x128xf32> -> vector<256x128xf32>
    %54 = arith.truncf %53 : vector<256x128xf32> to vector<256x128xbf16>
    %c0_12 = arith.constant 0 : index
    %c0_13 = arith.constant 0 : index
    %55 = vector.load %arg10[%c0_12, %c0_13] : memref<16x128xf32, #tpu.memory_space<vmem>>, vector<16x128xf32>
    %c0_14 = arith.constant 0 : index
    %c0_15 = arith.constant 0 : index
    %c0_16 = arith.constant 0 : index
    %56 = vector.load %arg5[%c0_14, %c0_15, %c0_16] : memref<1x16x256xbf16, #tpu.memory_space<vmem>>, vector<1x16x256xbf16>
    %57 = vector.shape_cast %56 : vector<1x16x256xbf16> to vector<16x256xbf16>
    %cst_17 = arith.constant dense<0.000000e+00> : vector<16x128xf32>
    %58 = tpu.matmul %57, %54, %cst_17 {dimension_numbers = #tpu.dot_dimension_numbers<[1], [0], [0], [1], [0, 0, 1, 1], [], []>} : vector<16x256xbf16>, vector<256x128xbf16>, vector<16x128xf32> -> vector<16x128xf32>
    %59 = arith.addf %55, %58 : vector<16x128xf32>
    %c0_18 = arith.constant 0 : index
    %c0_19 = arith.constant 0 : index
    %60 = vector.load %arg10[%c0_18, %c0_19] : memref<16x128xf32, #tpu.memory_space<vmem>>, vector<16x128xf32>
    tpu.vector_store %arg10[%c0_18, %c0_19], %59 {strides = array<i32>} : memref<16x128xf32, #tpu.memory_space<vmem>>, vector<16x128xf32>,
    %c1_i32 = arith.constant 1 : i32
    %61 = arith.cmpi eq, %arg0, %c1_i32 : i32
    %62 = arith.extui %61 : i1 to i32
    %c0_i32_20 = arith.constant 0 : i32
    %63 = arith.cmpi ne, %62, %c0_i32_20 : i32
    scf.if %63 {
      %c0_21 = arith.constant 0 : index
      %c0_22 = arith.constant 0 : index
      %64 = vector.load %arg10[%c0_21, %c0_22] : memref<16x128xf32, #tpu.memory_space<vmem>>, vector<16x128xf32>
      %cst_23 = arith.constant dense<0.000000e+00> : vector<16xf32>
      %65 = vector.multi_reduction <add>, %64, %cst_23 [1] : vector<16x128xf32> to vector<16xf32>
      %66 = vector.shape_cast %65 : vector<16xf32> to vector<16x1xf32>
      %cst_24 = arith.constant 1.280000e+02 : f32
      %67 = vector.broadcast %cst_24 : f32 to vector<16x1xf32>
      %68 = arith.divf %66, %67 : vector<16x1xf32>
      %69 = vector.broadcast %68 : vector<16x1xf32> to vector<16x128xf32>
      %70 = arith.subf %64, %69 : vector<16x128xf32>
      %71 = arith.mulf %70, %70 : vector<16x128xf32>
      %cst_25 = arith.constant dense<0.000000e+00> : vector<16xf32>
      %72 = vector.multi_reduction <add>, %71, %cst_25 [1] : vector<16x128xf32> to vector<16xf32>
      %73 = vector.shape_cast %72 : vector<16xf32> to vector<16x1xf32>
      %cst_26 = arith.constant 1.280000e+02 : f32
      %74 = vector.broadcast %cst_26 : f32 to vector<16x1xf32>
      %75 = arith.divf %73, %74 : vector<16x1xf32>
      %76 = vector.broadcast %68 : vector<16x1xf32> to vector<16x128xf32>
      %77 = arith.subf %64, %76 : vector<16x128xf32>
      %cst_27 = arith.constant 9.99999974E-6 : f32
      %78 = vector.broadcast %cst_27 : f32 to vector<16x1xf32>
      %79 = arith.addf %75, %78 : vector<16x1xf32>
      %80 = math.rsqrt %79 : vector<16x1xf32>
      %81 = vector.broadcast %80 : vector<16x1xf32> to vector<16x128xf32>
      %82 = arith.mulf %77, %81 : vector<16x128xf32>
      %cst_28 = arith.constant 0.000000e+00 : f32
      %83 = vector.broadcast %cst_28 : f32 to vector<16x128xf32>
      %84 = arith.cmpf ogt, %82, %83 : vector<16x128xf32>
      %cst_29 = arith.constant 2.000000e-01 : f32
      %85 = vector.broadcast %cst_29 : f32 to vector<16x128xf32>
      %86 = arith.mulf %85, %82 : vector<16x128xf32>
      %87 = arith.select %84, %82, %86 : vector<16x128xi1>, vector<16x128xf32>
      %c0_30 = arith.constant 0 : index
      %c0_31 = arith.constant 0 : index
      %88 = vector.load %arg7[%c0_30, %c0_31] : memref<128x128xf32, #tpu.memory_space<vmem>>, vector<128x128xf32>
      %c0_32 = arith.constant 0 : index
      %c0_33 = arith.constant 0 : index
      %c0_34 = arith.constant 0 : index
      %89 = vector.load %arg6[%c0_32, %c0_33, %c0_34] : memref<4x16x128xf32, #tpu.memory_space<vmem>>, vector<1x16x128xf32>
      %90 = vector.shape_cast %89 : vector<1x16x128xf32> to vector<16x128xf32>
      %91 = arith.mulf %90, %87 : vector<16x128xf32>
      %cst_35 = arith.constant dense<0.000000e+00> : vector<16x128xf32>
      %92 = tpu.matmul %91, %88, %cst_35 {dimension_numbers = #tpu.dot_dimension_numbers<[1], [0], [0], [1], [0, 0, 1, 1], [], []>} : vector<16x128xf32>, vector<128x128xf32>, vector<16x128xf32> -> vector<16x128xf32>
      %cst_36 = arith.constant dense<0.000000e+00> : vector<128xf32>
      %93 = vector.multi_reduction <add>, %92, %cst_36 [0] : vector<16x128xf32> to vector<128xf32>
      %94 = vector.shape_cast %93 : vector<128xf32> to vector<1x128xf32>
      %c1 = arith.constant 1 : index
      %c0_37 = arith.constant 0 : index
      %c0_38 = arith.constant 0 : index
      %95 = vector.load %arg6[%c1, %c0_37, %c0_38] : memref<4x16x128xf32, #tpu.memory_space<vmem>>, vector<1x16x128xf32>
      %96 = vector.shape_cast %95 : vector<1x16x128xf32> to vector<16x128xf32>
      %97 = arith.mulf %96, %87 : vector<16x128xf32>
      %cst_39 = arith.constant dense<0.000000e+00> : vector<16x128xf32>
      %98 = tpu.matmul %97, %88, %cst_39 {dimension_numbers = #tpu.dot_dimension_numbers<[1], [0], [0], [1], [0, 0, 1, 1], [], []>} : vector<16x128xf32>, vector<128x128xf32>, vector<16x128xf32> -> vector<16x128xf32>
      %cst_40 = arith.constant dense<0.000000e+00> : vector<128xf32>
      %99 = vector.multi_reduction <add>, %98, %cst_40 [0] : vector<16x128xf32> to vector<128xf32>
      %100 = vector.shape_cast %99 : vector<128xf32> to vector<1x128xf32>
      %c2 = arith.constant 2 : index
      %c0_41 = arith.constant 0 : index
      %c0_42 = arith.constant 0 : index
      %101 = vector.load %arg6[%c2, %c0_41, %c0_42] : memref<4x16x128xf32, #tpu.memory_space<vmem>>, vector<1x16x128xf32>
      %102 = vector.shape_cast %101 : vector<1x16x128xf32> to vector<16x128xf32>
      %103 = arith.mulf %102, %87 : vector<16x128xf32>
      %cst_43 = arith.constant dense<0.000000e+00> : vector<16x128xf32>
      %104 = tpu.matmul %103, %88, %cst_43 {dimension_numbers = #tpu.dot_dimension_numbers<[1], [0], [0], [1], [0, 0, 1, 1], [], []>} : vector<16x128xf32>, vector<128x128xf32>, vector<16x128xf32> -> vector<16x128xf32>
      %cst_44 = arith.constant dense<0.000000e+00> : vector<128xf32>
      %105 = vector.multi_reduction <add>, %104, %cst_44 [0] : vector<16x128xf32> to vector<128xf32>
      %106 = vector.shape_cast %105 : vector<128xf32> to vector<1x128xf32>
      %c3 = arith.constant 3 : index
      %c0_45 = arith.constant 0 : index
      %c0_46 = arith.constant 0 : index
      %107 = vector.load %arg6[%c3, %c0_45, %c0_46] : memref<4x16x128xf32, #tpu.memory_space<vmem>>, vector<1x16x128xf32>
      %108 = vector.shape_cast %107 : vector<1x16x128xf32> to vector<16x128xf32>
      %109 = arith.mulf %108, %87 : vector<16x128xf32>
      %cst_47 = arith.constant dense<0.000000e+00> : vector<16x128xf32>
      %110 = tpu.matmul %109, %88, %cst_47 {dimension_numbers = #tpu.dot_dimension_numbers<[1], [0], [0], [1], [0, 0, 1, 1], [], []>} : vector<16x128xf32>, vector<128x128xf32>, vector<16x128xf32> -> vector<16x128xf32>
      %cst_48 = arith.constant dense<0.000000e+00> : vector<128xf32>
      %111 = vector.multi_reduction <add>, %110, %cst_48 [0] : vector<16x128xf32> to vector<128xf32>
      %112 = vector.shape_cast %111 : vector<128xf32> to vector<1x128xf32>
      %113 = tpu.concatenate %94, %100, %106, %112 in 0 : vector<1x128xf32>, vector<1x128xf32>, vector<1x128xf32>, vector<1x128xf32> -> vector<4x128xf32>
      %c0_49 = arith.constant 0 : index
      %c0_50 = arith.constant 0 : index
      %114 = vector.load %arg8[%c0_49, %c0_50] : memref<4x1xf32, #tpu.memory_space<vmem>>, vector<4x1xf32>
      %115 = vector.broadcast %114 : vector<4x1xf32> to vector<4x128xf32>
      %116 = arith.addf %113, %115 : vector<4x128xf32>
      %117 = arith.negf %116 : vector<4x128xf32>
      %118 = math.exp %117 : vector<4x128xf32>
      %cst_51 = arith.constant 1.000000e+00 : f32
      %119 = vector.broadcast %cst_51 : f32 to vector<4x128xf32>
      %120 = arith.addf %119, %118 : vector<4x128xf32>
      %121 = arith.divf %119, %120 : vector<4x128xf32>
      %c0_52 = arith.constant 0 : index
      %c0_53 = arith.constant 0 : index
      %122 = vector.load %arg9[%c0_52, %c0_53] : memref<4x128xf32, #tpu.memory_space<vmem>>, vector<4x128xf32>
      tpu.vector_store %arg9[%c0_52, %c0_53], %121 {strides = array<i32>} : memref<4x128xf32, #tpu.memory_space<vmem>>, vector<4x128xf32>,
    } else {
    }
    return
  }
  func.func @transform_0(%arg0: i32) -> (i32, i32, i32) {
    %c0_i32 = arith.constant 0 : i32
    %c0_i32_0 = arith.constant 0 : i32
    %c0_i32_1 = arith.constant 0 : i32
    return %arg0, %c0_i32, %c0_i32_0 : i32, i32, i32
  }
  func.func @transform_1(%arg0: i32) -> (i32, i32, i32) {
    %c0_i32 = arith.constant 0 : i32
    %c0_i32_0 = arith.constant 0 : i32
    %c0_i32_1 = arith.constant 0 : i32
    return %arg0, %c0_i32, %c0_i32_0 : i32, i32, i32
  }
  func.func @transform_2(%arg0: i32) -> (i32, i32) {
    %c0_i32 = arith.constant 0 : i32
    %c0_i32_0 = arith.constant 0 : i32
    %c0_i32_1 = arith.constant 0 : i32
    return %c0_i32, %c0_i32_0 : i32, i32
  }
  func.func @transform_3(%arg0: i32) -> (i32, i32) {
    %c0_i32 = arith.constant 0 : i32
    %c0_i32_0 = arith.constant 0 : i32
    %c0_i32_1 = arith.constant 0 : i32
    return %c0_i32, %c0_i32_0 : i32, i32
  }
  func.func @transform_4(%arg0: i32) -> (i32, i32, i32) {
    %c0_i32 = arith.constant 0 : i32
    %c0_i32_0 = arith.constant 0 : i32
    %c0_i32_1 = arith.constant 0 : i32
    return %arg0, %c0_i32, %c0_i32_0 : i32, i32, i32
  }
  func.func @transform_5(%arg0: i32) -> (i32, i32, i32) {
    %c0_i32 = arith.constant 0 : i32
    %c0_i32_0 = arith.constant 0 : i32
    %c0_i32_1 = arith.constant 0 : i32
    %c0_i32_2 = arith.constant 0 : i32
    return %c0_i32, %c0_i32_0, %c0_i32_1 : i32, i32, i32
  }
  func.func @transform_6(%arg0: i32) -> (i32, i32) {
    %c0_i32 = arith.constant 0 : i32
    %c0_i32_0 = arith.constant 0 : i32
    %c0_i32_1 = arith.constant 0 : i32
    return %c0_i32, %c0_i32_0 : i32, i32
  }
  func.func @transform_7(%arg0: i32) -> (i32, i32) {
    %c0_i32 = arith.constant 0 : i32
    %c0_i32_0 = arith.constant 0 : i32
    %c0_i32_1 = arith.constant 0 : i32
    return %c0_i32, %c0_i32_0 : i32, i32
  }
  func.func @transform_8(%arg0: i32) -> (i32, i32) {
    %c0_i32 = arith.constant 0 : i32
    %c0_i32_0 = arith.constant 0 : i32
    %c0_i32_1 = arith.constant 0 : i32
    return %c0_i32, %c0_i32_0 : i32, i32
  }
}

</mosaic_0001>

<llo_original>
// kernel: discriminator_forward.1
$region0: #{discriminator_forward.1}
  #allocation0 [shape = 'u32[]', space=smem, size = 0x4, offset = 0x4, fixed_abs, tag = 'smem constant byte address 0x4 - core index']
  #allocation1 [shape = 'u32[144,128]{1,0:T(1,128)}', space=vmem, size = 0x12000, scoped, tag = 'internal scratch']
  #allocation2 [shape = 'f32[16,128]{1,0:T(8,128)}', space=vmem, size = 0x2000, scoped, tag = 'scratch operand']
  %s0 = inlined_call_operand.vmem [shape: bf16[2,128,4096], index: 0, kind: input, shape index: {}]
  %s1 = inlined_call_operand.vmem [shape: f32[2,1,4096], index: 1, kind: input, shape index: {}]
  %s2 = inlined_call_operand.vmem [shape: bf16[8,128], index: 2, kind: input, shape index: {}]
  %s3 = inlined_call_operand.vmem [shape: f32[8,1], index: 3, kind: input, shape index: {}]
  %s4 = inlined_call_operand.vmem [shape: bf16[2,16,256], index: 4, kind: input, shape index: {}]
  %s5 = inlined_call_operand.vmem [shape: f32[4,16,128], index: 5, kind: input, shape index: {}]
  %s6 = inlined_call_operand.vmem [shape: f32[128,128], index: 6, kind: input, shape index: {}]
  %s7 = inlined_call_operand.vmem [shape: f32[4,1], index: 7, kind: input, shape index: {}]
  %s8 = inlined_call_operand.vmem [shape: f32[4,128], index: 8, kind: output, shape index: {}]
  %s9 = sld [smem:[#allocation0]]
  $region73: #{discriminator_forward.1} parent=0
    _
  %s11 = ssub.s32 1, %s9
  %s12 = scalar_select 0, %s11, %s9
  loop: start=0, step=1, limit=4
  $region2: #{discriminator_forward.1} parent=0 // loop_pre_header
    _
  $region3: #{discriminator_forward.1} parent=0 // loop_header
    %s14 = sphi 0, %s18
    %p15 = scmp.ge.s32.totalorder %s14, 4
    %s24 = sphi 0, %s26
    %s27 = sphi 0, %s24
    %s28 = sphi 0, %s27
    %s44 = sphi 0, %s28
    %s50 = sphi 0, %s52
    %s53 = sphi 0, %s50
    %s54 = sphi 0, %s53
    %s70 = sphi 0, %s54
    %s74 = sphi 0, %s74
    %s76 = sphi 0, %s74
    %s77 = sphi 0, %s76
    %s91 = sphi 0, %s77
    %s95 = sphi 0, %s95
    %s97 = sphi 0, %s95
    %s98 = sphi 0, %s97
    %s112 = sphi 0, %s98
    %s118 = sphi 0, %s120
    %s121 = sphi 0, %s118
    %s122 = sphi 0, %s121
    %s138 = sphi 0, %s122
    %s142 = sphi 0, %s142
    %s144 = sphi 0, %s142
    %s145 = sphi 0, %s144
    %s159 = sphi 0, %s145
    %s163 = sphi 0, %s163
    %s165 = sphi 0, %s163
    %s166 = sphi 0, %s165
    %s180 = sphi 0, %s166
    %s184 = sphi 0, %s184
    %s186 = sphi 0, %s184
    %s187 = sphi 0, %s186
    %s201 = sphi 0, %s187
    %s205 = sphi 0, %s205
    %s207 = sphi 0, %s205
    %s208 = sphi 0, %s207
    %s222 = sphi 0, %s208
  $region4: #{discriminator_forward.1} parent=0 // loop_header_branch
    %17 = sbr.rel (%p15) target = $region8
  $region5: #{discriminator_forward.1} parent=0 // loop_body
    %s19 = ssub.s32 %s14, 1
    %s20 = ssub.s32 %s14, 2
    %s21 = sadd.s32 %s14, 1
    %s22 = ssub.s32 %s14, %s21
    %p23 = scmp.eq.s32.totalorder %s22, 0
    %s25 = sadd.s32 %s24, 1
    %s26 = scalar_select %p23, %s24, %s25
    %p29 = pneg %p23
    %p30 = scmp.eq.s32.totalorder %s14, 1
    %p31 = por %p29, %p30
    %p32 = scmp.ne.s32.totalorder %s24, %s27
    %p33 = scmp.eq.s32.totalorder %s14, 0
    %p34 = por %p32, %p33
    %p35 = scmp.ne.s32.totalorder %s24, %s27
    %p36 = scmp.eq.s32.totalorder %s19, 1
    %p37 = por %p35, %p36
    %p38 = scmp.ne.s32.totalorder %s27, %s28
    %p39 = scmp.eq.s32.totalorder %s19, 0
    %p40 = por %p38, %p39
    %p41 = scmp.ne.s32.totalorder %s27, %s28
    %p42 = scmp.eq.s32.totalorder %s20, 1
    %p43 = por %p41, %p42
    %p45 = scmp.ne.s32.totalorder %s28, %s44
    %p46 = scmp.eq.s32.totalorder %s20, 0
    %p47 = por %p45, %p46
    %s48 = ssub.s32 %s14, %s21
    %p49 = scmp.eq.s32.totalorder %s48, 0
    %s51 = sadd.s32 %s50, 1
    %s52 = scalar_select %p49, %s50, %s51
    %p55 = pneg %p49
    %p56 = scmp.eq.s32.totalorder %s14, 1
    %p57 = por %p55, %p56
    %p58 = scmp.ne.s32.totalorder %s50, %s53
    %p59 = scmp.eq.s32.totalorder %s14, 0
    %p60 = por %p58, %p59
    %p61 = scmp.ne.s32.totalorder %s50, %s53
    %p62 = scmp.eq.s32.totalorder %s19, 1
    %p63 = por %p61, %p62
    %p64 = scmp.ne.s32.totalorder %s53, %s54
    %p65 = scmp.eq.s32.totalorder %s19, 0
    %p66 = por %p64, %p65
    %p67 = scmp.ne.s32.totalorder %s53, %s54
    %p68 = scmp.eq.s32.totalorder %s20, 1
    %p69 = por %p67, %p68
    %p71 = scmp.ne.s32.totalorder %s54, %s70
    %p72 = scmp.eq.s32.totalorder %s20, 0
    %p73 = por %p71, %p72
    %s75 = sadd.s32 %s74, 1
    %p78 = scmp.eq.s32.totalorder %s14, 1
    %p79 = scmp.ne.s32.totalorder %s74, %s76
    %p80 = scmp.eq.s32.totalorder %s14, 0
    %p81 = por %p79, %p80
    %p82 = scmp.ne.s32.totalorder %s74, %s76
    %p83 = scmp.eq.s32.totalorder %s19, 1
    %p84 = por %p82, %p83
    %p85 = scmp.ne.s32.totalorder %s76, %s77
    %p86 = scmp.eq.s32.totalorder %s19, 0
    %p87 = por %p85, %p86
    %p88 = scmp.ne.s32.totalorder %s76, %s77
    %p89 = scmp.eq.s32.totalorder %s20, 1
    %p90 = por %p88, %p89
    %p92 = scmp.ne.s32.totalorder %s77, %s91
    %p93 = scmp.eq.s32.totalorder %s20, 0
    %p94 = por %p92, %p93
    %s96 = sadd.s32 %s95, 1
    %p99 = scmp.eq.s32.totalorder %s14, 1
    %p100 = scmp.ne.s32.totalorder %s95, %s97
    %p101 = scmp.eq.s32.totalorder %s14, 0
    %p102 = por %p100, %p101
    %p103 = scmp.ne.s32.totalorder %s95, %s97
    %p104 = scmp.eq.s32.totalorder %s19, 1
    %p105 = por %p103, %p104
    %p106 = scmp.ne.s32.totalorder %s97, %s98
    %p107 = scmp.eq.s32.totalorder %s19, 0
    %p108 = por %p106, %p107
    %p109 = scmp.ne.s32.totalorder %s97, %s98
    %p110 = scmp.eq.s32.totalorder %s20, 1
    %p111 = por %p109, %p110
    %p113 = scmp.ne.s32.totalorder %s98, %s112
    %p114 = scmp.eq.s32.totalorder %s20, 0
    %p115 = por %p113, %p114
    %s116 = ssub.s32 %s14, %s21
    %p117 = scmp.eq.s32.totalorder %s116, 0
    %s119 = sadd.s32 %s118, 1
    %s120 = scalar_select %p117, %s118, %s119
    %p123 = pneg %p117
    %p124 = scmp.eq.s32.totalorder %s14, 1
    %p125 = por %p123, %p124
    %p126 = scmp.ne.s32.totalorder %s118, %s121
    %p127 = scmp.eq.s32.totalorder %s14, 0
    %p128 = por %p126, %p127
    %p129 = scmp.ne.s32.totalorder %s118, %s121
    %p130 = scmp.eq.s32.totalorder %s19, 1
    %p131 = por %p129, %p130
    %p132 = scmp.ne.s32.totalorder %s121, %s122
    %p133 = scmp.eq.s32.totalorder %s19, 0
    %p134 = por %p132, %p133
    %p135 = scmp.ne.s32.totalorder %s121, %s122
    %p136 = scmp.eq.s32.totalorder %s20, 1
    %p137 = por %p135, %p136
    %p139 = scmp.ne.s32.totalorder %s122, %s138
    %p140 = scmp.eq.s32.totalorder %s20, 0
    %p141 = por %p139, %p140
    %s143 = sadd.s32 %s142, 1
    %p146 = scmp.eq.s32.totalorder %s14, 1
    %p147 = scmp.ne.s32.totalorder %s142, %s144
    %p148 = scmp.eq.s32.totalorder %s14, 0
    %p149 = por %p147, %p148
    %p150 = scmp.ne.s32.totalorder %s142, %s144
    %p151 = scmp.eq.s32.totalorder %s19, 1
    %p152 = por %p150, %p151
    %p153 = scmp.ne.s32.totalorder %s144, %s145
    %p154 = scmp.eq.s32.totalorder %s19, 0
    %p155 = por %p153, %p154
    %p156 = scmp.ne.s32.totalorder %s144, %s145
    %p157 = scmp.eq.s32.totalorder %s20, 1
    %p158 = por %p156, %p157
    %p160 = scmp.ne.s32.totalorder %s145, %s159
    %p161 = scmp.eq.s32.totalorder %s20, 0
    %p162 = por %p160, %p161
    %s164 = sadd.s32 %s163, 1
    %p167 = scmp.eq.s32.totalorder %s14, 1
    %p168 = scmp.ne.s32.totalorder %s163, %s165
    %p169 = scmp.eq.s32.totalorder %s14, 0
    %p170 = por %p168, %p169
    %p171 = scmp.ne.s32.totalorder %s163, %s165
    %p172 = scmp.eq.s32.totalorder %s19, 1
    %p173 = por %p171, %p172
    %p174 = scmp.ne.s32.totalorder %s165, %s166
    %p175 = scmp.eq.s32.totalorder %s19, 0
    %p176 = por %p174, %p175
    %p177 = scmp.ne.s32.totalorder %s165, %s166
    %p178 = scmp.eq.s32.totalorder %s20, 1
    %p179 = por %p177, %p178
    %p181 = scmp.ne.s32.totalorder %s166, %s180
    %p182 = scmp.eq.s32.totalorder %s20, 0
    %p183 = por %p181, %p182
    %s185 = sadd.s32 %s184, 1
    %p188 = scmp.eq.s32.totalorder %s14, 1
    %p189 = scmp.ne.s32.totalorder %s184, %s186
    %p190 = scmp.eq.s32.totalorder %s14, 0
    %p191 = por %p189, %p190
    %p192 = scmp.ne.s32.totalorder %s184, %s186
    %p193 = scmp.eq.s32.totalorder %s19, 1
    %p194 = por %p192, %p193
    %p195 = scmp.ne.s32.totalorder %s186, %s187
    %p196 = scmp.eq.s32.totalorder %s19, 0
    %p197 = por %p195, %p196
    %p198 = scmp.ne.s32.totalorder %s186, %s187
    %p199 = scmp.eq.s32.totalorder %s20, 1
    %p200 = por %p198, %p199
    %p202 = scmp.ne.s32.totalorder %s187, %s201
    %p203 = scmp.eq.s32.totalorder %s20, 0
    %p204 = por %p202, %p203
    %s206 = sadd.s32 %s205, 1
    %p209 = scmp.eq.s32.totalorder %s14, 1
    %p210 = scmp.ne.s32.totalorder %s205, %s207
    %p211 = scmp.eq.s32.totalorder %s14, 0
    %p212 = por %p210, %p211
    %p213 = scmp.ne.s32.totalorder %s205, %s207
    %p214 = scmp.eq.s32.totalorder %s19, 1
    %p215 = por %p213, %p214
    %p216 = scmp.ne.s32.totalorder %s207, %s208
    %p217 = scmp.eq.s32.totalorder %s19, 0
    %p218 = por %p216, %p217
    %p219 = scmp.ne.s32.totalorder %s207, %s208
    %p220 = scmp.eq.s32.totalorder %s20, 1
    %p221 = por %p219, %p220
    %p223 = scmp.ne.s32.totalorder %s208, %s222
    %p224 = scmp.eq.s32.totalorder %s20, 0
    %p225 = por %p223, %p224
    %p226 = scmp.le.s32.totalorder 1, %s14
    %p227 = scmp.lt.s32.totalorder %s14, 3
    %p228 = pnand %p226, %p227
    %p229 = pneg %p228
    // Predicated region
    $region9: #{discriminator_forward.1} parent=5 // pred_check
      _
    $region10: #{discriminator_forward.1} parent=5 // pred_check_branch
      %231 = sbr.rel (%p228) target = $region12
    $region11: #{discriminator_forward.1} parent=5 // pred_region
      %s232 = ssub.s32 %s14, 1
      // Predicated region
      $region13: #{discriminator_forward.1} parent=11 // pred_check
        %p233 = pneg %p87
      $region14: #{discriminator_forward.1} parent=11 // pred_check_branch
        %235 = sbr.rel (%p233) target = $region16
      $region15: #{discriminator_forward.1} parent=11 // pred_region
        _
      $region16: #{discriminator_forward.1} parent=11 // pred_fallthru
        _
      // Predicated region
      $region17: #{discriminator_forward.1} parent=11 // pred_check
        %p236 = pneg %p108
      $region18: #{discriminator_forward.1} parent=11 // pred_check_branch
        %238 = sbr.rel (%p236) target = $region20
      $region19: #{discriminator_forward.1} parent=11 // pred_region
        _
      $region20: #{discriminator_forward.1} parent=11 // pred_fallthru
        _
      // Predicated region
      $region21: #{discriminator_forward.1} parent=11 // pred_check
        %p239 = pneg %p155
      $region22: #{discriminator_forward.1} parent=11 // pred_check_branch
        %241 = sbr.rel (%p239) target = $region24
      $region23: #{discriminator_forward.1} parent=11 // pred_region
        _
      $region24: #{discriminator_forward.1} parent=11 // pred_fallthru
        _
      // Predicated region
      $region25: #{discriminator_forward.1} parent=11 // pred_check
        %p242 = pneg %p176
      $region26: #{discriminator_forward.1} parent=11 // pred_check_branch
        %244 = sbr.rel (%p242) target = $region28
      $region27: #{discriminator_forward.1} parent=11 // pred_region
        _
      $region28: #{discriminator_forward.1} parent=11 // pred_fallthru
        _
      // Predicated region
      $region29: #{discriminator_forward.1} parent=11 // pred_check
        %p245 = pneg %p197
      $region30: #{discriminator_forward.1} parent=11 // pred_check_branch
        %247 = sbr.rel (%p245) target = $region32
      $region31: #{discriminator_forward.1} parent=11 // pred_region
        _
      $region32: #{discriminator_forward.1} parent=11 // pred_fallthru
        _
    $region12: #{discriminator_forward.1} parent=5 // pred_fallthru
      _
    %p248 = scmp.lt.s32.totalorder %s14, 2
    // Predicated region
    $region33: #{discriminator_forward.1} parent=5 // pred_check
      %p249 = pneg %p248
    $region34: #{discriminator_forward.1} parent=5 // pred_check_branch
      %251 = sbr.rel (%p249) target = $region36
    $region35: #{discriminator_forward.1} parent=5 // pred_region
      // Predicated region
      $region37: #{discriminator_forward.1} parent=35 // pred_check
        %p252 = pneg %p34
      $region38: #{discriminator_forward.1} parent=35 // pred_check_branch
        %254 = sbr.rel (%p252) target = $region40
      $region39: #{discriminator_forward.1} parent=35 // pred_region
        %p255 = scmp.lt.s32.totalorder %s14, 1
        %s256 = scalar_select %p255, %s14, 1
        %s257 = smul.addr %s256, 512
        %s258 = smul.addr %s257, 4
        %s259 = scalar_lea.vmem %s0, %s258
      $region40: #{discriminator_forward.1} parent=35 // pred_fallthru
        _
      // Predicated region
      $region41: #{discriminator_forward.1} parent=35 // pred_check
        %p260 = pneg %p60
      $region42: #{discriminator_forward.1} parent=35 // pred_check_branch
        %262 = sbr.rel (%p260) target = $region44
      $region43: #{discriminator_forward.1} parent=35 // pred_region
        %p263 = scmp.lt.s32.totalorder %s14, 1
        %s264 = scalar_select %p263, %s14, 1
        %s265 = smul.addr %s264, 32
        %s266 = scalar_lea.vmem %s1, %s265
      $region44: #{discriminator_forward.1} parent=35 // pred_fallthru
        _
      // Predicated region
      $region45: #{discriminator_forward.1} parent=35 // pred_check
        %p267 = pneg %p128
      $region46: #{discriminator_forward.1} parent=35 // pred_check_branch
        %269 = sbr.rel (%p267) target = $region48
      $region47: #{discriminator_forward.1} parent=35 // pred_region
        %p270 = scmp.lt.s32.totalorder %s14, 1
        %s271 = scalar_select %p270, %s14, 1
        %s272 = smul.addr %s271, 4
        %s273 = smul.addr %s272, 4
        %s274 = scalar_lea.vmem %s4, %s273
      $region48: #{discriminator_forward.1} parent=35 // pred_fallthru
        _
    $region36: #{discriminator_forward.1} parent=5 // pred_fallthru
      _
    %p275 = scmp.le.s32.totalorder 1, %s14
    %p276 = scmp.lt.s32.totalorder %s14, 3
    %p277 = pnand %p275, %p276
    %p278 = pneg %p277
    // Predicated region
    $region49: #{discriminator_forward.1} parent=5 // pred_check
      _
    $region50: #{discriminator_forward.1} parent=5 // pred_check_branch
      %280 = sbr.rel (%p277) target = $region52
    $region51: #{discriminator_forward.1} parent=5 // pred_region
      %s281 = ssub.s32 %s14, 1
      %p282 = scmp.lt.s32.totalorder %s19, 1
      %s283 = scalar_select %p282, %s19, 1
      %s284 = smul.addr %s283, 512
      %s285 = smul.addr %s284, 4
      %s286 = scalar_lea.vmem %s0, %s285
      %p287 = pneg %p40
      %p288 = pneg %p37
      %p289 = scmp.lt.s32.totalorder %s19, 1
      %s290 = scalar_select %p289, %s19, 1
      %s291 = smul.addr %s290, 32
      %s292 = scalar_lea.vmem %s1, %s291
      %p293 = pneg %p66
      %p294 = pneg %p63
      %p295 = pneg %p87
      %p296 = pneg %p84
      %p297 = pneg %p108
      %p298 = pneg %p105
      %p299 = scmp.lt.s32.totalorder %s19, 1
      %s300 = scalar_select %p299, %s19, 1
      %s301 = smul.addr %s300, 4
      %s302 = smul.addr %s301, 4
      %s303 = scalar_lea.vmem %s4, %s302
      %p304 = pneg %p134
      %p305 = pneg %p131
      %p306 = pneg %p155
      %p307 = pneg %p152
      %p308 = pneg %p176
      %p309 = pneg %p173
      %p310 = pneg %p197
      %p311 = pneg %p194
      %p312 = pneg %p218
      %p313 = pneg %p215
      %p314 = scmp.lt.s32.totalorder %s19, 1
      %s315 = scalar_select %p314, %s19, 1
      %s316 = smul.addr %s315, 512
      %s317 = smul.addr %s316, 4
      %s318 = scalar_lea.vmem %s0, %s317
      %p319 = scmp.lt.s32.totalorder %s19, 1
      %s320 = scalar_select %p319, %s19, 1
      %s321 = smul.addr %s320, 32
      %s322 = scalar_lea.vmem %s1, %s321
      %p323 = scmp.lt.s32.totalorder %s19, 1
      %s324 = scalar_select %p323, %s19, 1
      %s325 = smul.addr %s324, 4
      %s326 = smul.addr %s325, 4
      %s327 = scalar_lea.vmem %s4, %s326
      %p329 = scmp.eq.s32.totalorder %s19, 0
      // Predicated region
      $region53: #{discriminator_forward.1} parent=51 // pred_check
        %p330 = pneg %p329
      $region54: #{discriminator_forward.1} parent=51 // pred_check_branch
        %332 = sbr.rel (%p330) target = $region56
      $region55: #{discriminator_forward.1} parent=51 // pred_region
        %333 = vst [vmem:[#allocation2] sm:$0xff] 0.0
        %334 = vst [vmem:[#allocation2 + $0x8] sm:$0xff] 0.0
      $region56: #{discriminator_forward.1} parent=51 // pred_fallthru
        _
      %v335 = vld [vmem:[%s2] sm:$0xf]
      %v336 = vld [vmem:[%s318] sm:$0xff]
      %v337 = vld [vmem:[%s318 + $0x8] sm:$0xff]
      %v338 = vld [vmem:[%s318 + $0x10] sm:$0xff]
      %v339 = vld [vmem:[%s318 + $0x18] sm:$0xff]
      %v340 = vld [vmem:[%s318 + $0x20] sm:$0xff]
      %v341 = vld [vmem:[%s318 + $0x28] sm:$0xff]
      %v342 = vld [vmem:[%s318 + $0x30] sm:$0xff]
      %v343 = vld [vmem:[%s318 + $0x38] sm:$0xff]
      %v344 = vld [vmem:[%s318 + $0x40] sm:$0xff]
      %v345 = vld [vmem:[%s318 + $0x48] sm:$0xff]
      %v346 = vld [vmem:[%s318 + $0x50] sm:$0xff]
      %v347 = vld [vmem:[%s318 + $0x58] sm:$0xff]
      %v348 = vld [vmem:[%s318 + $0x60] sm:$0xff]
      %v349 = vld [vmem:[%s318 + $0x68] sm:$0xff]
      %v350 = vld [vmem:[%s318 + $0x70] sm:$0xff]
      %v351 = vld [vmem:[%s318 + $0x78] sm:$0xff]
      %v352 = vld [vmem:[%s318 + $0x80] sm:$0xff]
      %v353 = vld [vmem:[%s318 + $0x88] sm:$0xff]
      %v354 = vld [vmem:[%s318 + $0x90] sm:$0xff]
      %v355 = vld [vmem:[%s318 + $0x98] sm:$0xff]
      %v356 = vld [vmem:[%s318 + $0xa0] sm:$0xff]
      %v357 = vld [vmem:[%s318 + $0xa8] sm:$0xff]
      %v358 = vld [vmem:[%s318 + $0xb0] sm:$0xff]
      %v359 = vld [vmem:[%s318 + $0xb8] sm:$0xff]
      %v360 = vld [vmem:[%s318 + $0xc0] sm:$0xff]
      %v361 = vld [vmem:[%s318 + $0xc8] sm:$0xff]
      %v362 = vld [vmem:[%s318 + $0xd0] sm:$0xff]
      %v363 = vld [vmem:[%s318 + $0xd8] sm:$0xff]
      %v364 = vld [vmem:[%s318 + $0xe0] sm:$0xff]
      %v365 = vld [vmem:[%s318 + $0xe8] sm:$0xff]
      %v366 = vld [vmem:[%s318 + $0xf0] sm:$0xff]
      %v367 = vld [vmem:[%s318 + $0xf8] sm:$0xff]
      %v368 = vld [vmem:[%s318 + $0x100] sm:$0xff]
      %v369 = vld [vmem:[%s318 + $0x108] sm:$0xff]
      %v370 = vld [vmem:[%s318 + $0x110] sm:$0xff]
      %v371 = vld [vmem:[%s318 + $0x118] sm:$0xff]
      %v372 = vld [vmem:[%s318 + $0x120] sm:$0xff]
      %v373 = vld [vmem:[%s318 + $0x128] sm:$0xff]
      %v374 = vld [vmem:[%s318 + $0x130] sm:$0xff]
      %v375 = vld [vmem:[%s318 + $0x138] sm:$0xff]
      %v376 = vld [vmem:[%s318 + $0x140] sm:$0xff]
      %v377 = vld [vmem:[%s318 + $0x148] sm:$0xff]
      %v378 = vld [vmem:[%s318 + $0x150] sm:$0xff]
      %v379 = vld [vmem:[%s318 + $0x158] sm:$0xff]
      %v380 = vld [vmem:[%s318 + $0x160] sm:$0xff]
      %v381 = vld [vmem:[%s318 + $0x168] sm:$0xff]
      %v382 = vld [vmem:[%s318 + $0x170] sm:$0xff]
      %v383 = vld [vmem:[%s318 + $0x178] sm:$0xff]
      %v384 = vld [vmem:[%s318 + $0x180] sm:$0xff]
      %v385 = vld [vmem:[%s318 + $0x188] sm:$0xff]
      %v386 = vld [vmem:[%s318 + $0x190] sm:$0xff]
      %v387 = vld [vmem:[%s318 + $0x198] sm:$0xff]
      %v388 = vld [vmem:[%s318 + $0x1a0] sm:$0xff]
      %v389 = vld [vmem:[%s318 + $0x1a8] sm:$0xff]
      %v390 = vld [vmem:[%s318 + $0x1b0] sm:$0xff]
      %v391 = vld [vmem:[%s318 + $0x1b8] sm:$0xff]
      %v392 = vld [vmem:[%s318 + $0x1c0] sm:$0xff]
      %v393 = vld [vmem:[%s318 + $0x1c8] sm:$0xff]
      %v394 = vld [vmem:[%s318 + $0x1d0] sm:$0xff]
      %v395 = vld [vmem:[%s318 + $0x1d8] sm:$0xff]
      %v396 = vld [vmem:[%s318 + $0x1e0] sm:$0xff]
      %v397 = vld [vmem:[%s318 + $0x1e8] sm:$0xff]
      %v398 = vld [vmem:[%s318 + $0x1f0] sm:$0xff]
      %v399 = vld [vmem:[%s318 + $0x1f8] sm:$0xff]
      %v400 = vld [vmem:[%s318 + $0x200] sm:$0xff]
      %v401 = vld [vmem:[%s318 + $0x208] sm:$0xff]
      %v402 = vld [vmem:[%s318 + $0x210] sm:$0xff]
      %v403 = vld [vmem:[%s318 + $0x218] sm:$0xff]
      %v404 = vld [vmem:[%s318 + $0x220] sm:$0xff]
      %v405 = vld [vmem:[%s318 + $0x228] sm:$0xff]
      %v406 = vld [vmem:[%s318 + $0x230] sm:$0xff]
      %v407 = vld [vmem:[%s318 + $0x238] sm:$0xff]
      %v408 = vld [vmem:[%s318 + $0x240] sm:$0xff]
      %v409 = vld [vmem:[%s318 + $0x248] sm:$0xff]
      %v410 = vld [vmem:[%s318 + $0x250] sm:$0xff]
      %v411 = vld [vmem:[%s318 + $0x258] sm:$0xff]
      %v412 = vld [vmem:[%s318 + $0x260] sm:$0xff]
      %v413 = vld [vmem:[%s318 + $0x268] sm:$0xff]
      %v414 = vld [vmem:[%s318 + $0x270] sm:$0xff]
      %v415 = vld [vmem:[%s318 + $0x278] sm:$0xff]
      %v416 = vld [vmem:[%s318 + $0x280] sm:$0xff]
      %v417 = vld [vmem:[%s318 + $0x288] sm:$0xff]
      %v418 = vld [vmem:[%s318 + $0x290] sm:$0xff]
      %v419 = vld [vmem:[%s318 + $0x298] sm:$0xff]
      %v420 = vld [vmem:[%s318 + $0x2a0] sm:$0xff]
      %v421 = vld [vmem:[%s318 + $0x2a8] sm:$0xff]
      %v422 = vld [vmem:[%s318 + $0x2b0] sm:$0xff]
      %v423 = vld [vmem:[%s318 + $0x2b8] sm:$0xff]
      %v424 = vld [vmem:[%s318 + $0x2c0] sm:$0xff]
      %v425 = vld [vmem:[%s318 + $0x2c8] sm:$0xff]
      %v426 = vld [vmem:[%s318 + $0x2d0] sm:$0xff]
      %v427 = vld [vmem:[%s318 + $0x2d8] sm:$0xff]
      %v428 = vld [vmem:[%s318 + $0x2e0] sm:$0xff]
      %v429 = vld [vmem:[%s318 + $0x2e8] sm:$0xff]
      %v430 = vld [vmem:[%s318 + $0x2f0] sm:$0xff]
      %v431 = vld [vmem:[%s318 + $0x2f8] sm:$0xff]
      %v432 = vld [vmem:[%s318 + $0x300] sm:$0xff]
      %v433 = vld [vmem:[%s318 + $0x308] sm:$0xff]
      %v434 = vld [vmem:[%s318 + $0x310] sm:$0xff]
      %v435 = vld [vmem:[%s318 + $0x318] sm:$0xff]
      %v436 = vld [vmem:[%s318 + $0x320] sm:$0xff]
      %v437 = vld [vmem:[%s318 + $0x328] sm:$0xff]
      %v438 = vld [vmem:[%s318 + $0x330] sm:$0xff]
      %v439 = vld [vmem:[%s318 + $0x338] sm:$0xff]
      %v440 = vld [vmem:[%s318 + $0x340] sm:$0xff]
      %v441 = vld [vmem:[%s318 + $0x348] sm:$0xff]
      %v442 = vld [vmem:[%s318 + $0x350] sm:$0xff]
      %v443 = vld [vmem:[%s318 + $0x358] sm:$0xff]
      %v444 = vld [vmem:[%s318 + $0x360] sm:$0xff]
      %v445 = vld [vmem:[%s318 + $0x368] sm:$0xff]
      %v446 = vld [vmem:[%s318 + $0x370] sm:$0xff]
      %v447 = vld [vmem:[%s318 + $0x378] sm:$0xff]
      %v448 = vld [vmem:[%s318 + $0x380] sm:$0xff]
      %v449 = vld [vmem:[%s318 + $0x388] sm:$0xff]
      %v450 = vld [vmem:[%s318 + $0x390] sm:$0xff]
      %v451 = vld [vmem:[%s318 + $0x398] sm:$0xff]
      %v452 = vld [vmem:[%s318 + $0x3a0] sm:$0xff]
      %v453 = vld [vmem:[%s318 + $0x3a8] sm:$0xff]
      %v454 = vld [vmem:[%s318 + $0x3b0] sm:$0xff]
      %v455 = vld [vmem:[%s318 + $0x3b8] sm:$0xff]
      %v456 = vld [vmem:[%s318 + $0x3c0] sm:$0xff]
      %v457 = vld [vmem:[%s318 + $0x3c8] sm:$0xff]
      %v458 = vld [vmem:[%s318 + $0x3d0] sm:$0xff]
      %v459 = vld [vmem:[%s318 + $0x3d8] sm:$0xff]
      %v460 = vld [vmem:[%s318 + $0x3e0] sm:$0xff]
      %v461 = vld [vmem:[%s318 + $0x3e8] sm:$0xff]
      %v462 = vld [vmem:[%s318 + $0x3f0] sm:$0xff]
      %v463 = vld [vmem:[%s318 + $0x3f8] sm:$0xff]
      %v464 = vld [vmem:[%s318 + $0x400] sm:$0xff]
      %v465 = vld [vmem:[%s318 + $0x408] sm:$0xff]
      %v466 = vld [vmem:[%s318 + $0x410] sm:$0xff]
      %v467 = vld [vmem:[%s318 + $0x418] sm:$0xff]
      %v468 = vld [vmem:[%s318 + $0x420] sm:$0xff]
      %v469 = vld [vmem:[%s318 + $0x428] sm:$0xff]
      %v470 = vld [vmem:[%s318 + $0x430] sm:$0xff]
      %v471 = vld [vmem:[%s318 + $0x438] sm:$0xff]
      %v472 = vld [vmem:[%s318 + $0x440] sm:$0xff]
      %v473 = vld [vmem:[%s318 + $0x448] sm:$0xff]
      %v474 = vld [vmem:[%s318 + $0x450] sm:$0xff]
      %v475 = vld [vmem:[%s318 + $0x458] sm:$0xff]
      %v476 = vld [vmem:[%s318 + $0x460] sm:$0xff]
      %v477 = vld [vmem:[%s318 + $0x468] sm:$0xff]
      %v478 = vld [vmem:[%s318 + $0x470] sm:$0xff]
      %v479 = vld [vmem:[%s318 + $0x478] sm:$0xff]
      %v480 = vld [vmem:[%s318 + $0x480] sm:$0xff]
      %v481 = vld [vmem:[%s318 + $0x488] sm:$0xff]
      %v482 = vld [vmem:[%s318 + $0x490] sm:$0xff]
      %v483 = vld [vmem:[%s318 + $0x498] sm:$0xff]
      %v484 = vld [vmem:[%s318 + $0x4a0] sm:$0xff]
      %v485 = vld [vmem:[%s318 + $0x4a8] sm:$0xff]
      %v486 = vld [vmem:[%s318 + $0x4b0] sm:$0xff]
      %v487 = vld [vmem:[%s318 + $0x4b8] sm:$0xff]
      %v488 = vld [vmem:[%s318 + $0x4c0] sm:$0xff]
      %v489 = vld [vmem:[%s318 + $0x4c8] sm:$0xff]
      %v490 = vld [vmem:[%s318 + $0x4d0] sm:$0xff]
      %v491 = vld [vmem:[%s318 + $0x4d8] sm:$0xff]
      %v492 = vld [vmem:[%s318 + $0x4e0] sm:$0xff]
      %v493 = vld [vmem:[%s318 + $0x4e8] sm:$0xff]
      %v494 = vld [vmem:[%s318 + $0x4f0] sm:$0xff]
      %v495 = vld [vmem:[%s318 + $0x4f8] sm:$0xff]
      %v496 = vld [vmem:[%s318 + $0x500] sm:$0xff]
      %v497 = vld [vmem:[%s318 + $0x508] sm:$0xff]
      %v498 = vld [vmem:[%s318 + $0x510] sm:$0xff]
      %v499 = vld [vmem:[%s318 + $0x518] sm:$0xff]
      %v500 = vld [vmem:[%s318 + $0x520] sm:$0xff]
      %v501 = vld [vmem:[%s318 + $0x528] sm:$0xff]
      %v502 = vld [vmem:[%s318 + $0x530] sm:$0xff]
      %v503 = vld [vmem:[%s318 + $0x538] sm:$0xff]
      %v504 = vld [vmem:[%s318 + $0x540] sm:$0xff]
      %v505 = vld [vmem:[%s318 + $0x548] sm:$0xff]
      %v506 = vld [vmem:[%s318 + $0x550] sm:$0xff]
      %v507 = vld [vmem:[%s318 + $0x558] sm:$0xff]
      %v508 = vld [vmem:[%s318 + $0x560] sm:$0xff]
      %v509 = vld [vmem:[%s318 + $0x568] sm:$0xff]
      %v510 = vld [vmem:[%s318 + $0x570] sm:$0xff]
      %v511 = vld [vmem:[%s318 + $0x578] sm:$0xff]
      %v512 = vld [vmem:[%s318 + $0x580] sm:$0xff]
      %v513 = vld [vmem:[%s318 + $0x588] sm:$0xff]
      %v514 = vld [vmem:[%s318 + $0x590] sm:$0xff]
      %v515 = vld [vmem:[%s318 + $0x598] sm:$0xff]
      %v516 = vld [vmem:[%s318 + $0x5a0] sm:$0xff]
      %v517 = vld [vmem:[%s318 + $0x5a8] sm:$0xff]
      %v518 = vld [vmem:[%s318 + $0x5b0] sm:$0xff]
      %v519 = vld [vmem:[%s318 + $0x5b8] sm:$0xff]
      %v520 = vld [vmem:[%s318 + $0x5c0] sm:$0xff]
      %v521 = vld [vmem:[%s318 + $0x5c8] sm:$0xff]
      %v522 = vld [vmem:[%s318 + $0x5d0] sm:$0xff]
      %v523 = vld [vmem:[%s318 + $0x5d8] sm:$0xff]
      %v524 = vld [vmem:[%s318 + $0x5e0] sm:$0xff]
      %v525 = vld [vmem:[%s318 + $0x5e8] sm:$0xff]
      %v526 = vld [vmem:[%s318 + $0x5f0] sm:$0xff]
      %v527 = vld [vmem:[%s318 + $0x5f8] sm:$0xff]
      %v528 = vld [vmem:[%s318 + $0x600] sm:$0xff]
      %v529 = vld [vmem:[%s318 + $0x608] sm:$0xff]
      %v530 = vld [vmem:[%s318 + $0x610] sm:$0xff]
      %v531 = vld [vmem:[%s318 + $0x618] sm:$0xff]
      %v532 = vld [vmem:[%s318 + $0x620] sm:$0xff]
      %v533 = vld [vmem:[%s318 + $0x628] sm:$0xff]
      %v534 = vld [vmem:[%s318 + $0x630] sm:$0xff]
      %v535 = vld [vmem:[%s318 + $0x638] sm:$0xff]
      %v536 = vld [vmem:[%s318 + $0x640] sm:$0xff]
      %v537 = vld [vmem:[%s318 + $0x648] sm:$0xff]
      %v538 = vld [vmem:[%s318 + $0x650] sm:$0xff]
      %v539 = vld [vmem:[%s318 + $0x658] sm:$0xff]
      %v540 = vld [vmem:[%s318 + $0x660] sm:$0xff]
      %v541 = vld [vmem:[%s318 + $0x668] sm:$0xff]
      %v542 = vld [vmem:[%s318 + $0x670] sm:$0xff]
      %v543 = vld [vmem:[%s318 + $0x678] sm:$0xff]
      %v544 = vld [vmem:[%s318 + $0x680] sm:$0xff]
      %v545 = vld [vmem:[%s318 + $0x688] sm:$0xff]
      %v546 = vld [vmem:[%s318 + $0x690] sm:$0xff]
      %v547 = vld [vmem:[%s318 + $0x698] sm:$0xff]
      %v548 = vld [vmem:[%s318 + $0x6a0] sm:$0xff]
      %v549 = vld [vmem:[%s318 + $0x6a8] sm:$0xff]
      %v550 = vld [vmem:[%s318 + $0x6b0] sm:$0xff]
      %v551 = vld [vmem:[%s318 + $0x6b8] sm:$0xff]
      %v552 = vld [vmem:[%s318 + $0x6c0] sm:$0xff]
      %v553 = vld [vmem:[%s318 + $0x6c8] sm:$0xff]
      %v554 = vld [vmem:[%s318 + $0x6d0] sm:$0xff]
      %v555 = vld [vmem:[%s318 + $0x6d8] sm:$0xff]
      %v556 = vld [vmem:[%s318 + $0x6e0] sm:$0xff]
      %v557 = vld [vmem:[%s318 + $0x6e8] sm:$0xff]
      %v558 = vld [vmem:[%s318 + $0x6f0] sm:$0xff]
      %v559 = vld [vmem:[%s318 + $0x6f8] sm:$0xff]
      %v560 = vld [vmem:[%s318 + $0x700] sm:$0xff]
      %v561 = vld [vmem:[%s318 + $0x708] sm:$0xff]
      %v562 = vld [vmem:[%s318 + $0x710] sm:$0xff]
      %v563 = vld [vmem:[%s318 + $0x718] sm:$0xff]
      %v564 = vld [vmem:[%s318 + $0x720] sm:$0xff]
      %v565 = vld [vmem:[%s318 + $0x728] sm:$0xff]
      %v566 = vld [vmem:[%s318 + $0x730] sm:$0xff]
      %v567 = vld [vmem:[%s318 + $0x738] sm:$0xff]
      %v568 = vld [vmem:[%s318 + $0x740] sm:$0xff]
      %v569 = vld [vmem:[%s318 + $0x748] sm:$0xff]
      %v570 = vld [vmem:[%s318 + $0x750] sm:$0xff]
      %v571 = vld [vmem:[%s318 + $0x758] sm:$0xff]
      %v572 = vld [vmem:[%s318 + $0x760] sm:$0xff]
      %v573 = vld [vmem:[%s318 + $0x768] sm:$0xff]
      %v574 = vld [vmem:[%s318 + $0x770] sm:$0xff]
      %v575 = vld [vmem:[%s318 + $0x778] sm:$0xff]
      %v576 = vld [vmem:[%s318 + $0x780] sm:$0xff]
      %v577 = vld [vmem:[%s318 + $0x788] sm:$0xff]
      %v578 = vld [vmem:[%s318 + $0x790] sm:$0xff]
      %v579 = vld [vmem:[%s318 + $0x798] sm:$0xff]
      %v580 = vld [vmem:[%s318 + $0x7a0] sm:$0xff]
      %v581 = vld [vmem:[%s318 + $0x7a8] sm:$0xff]
      %v582 = vld [vmem:[%s318 + $0x7b0] sm:$0xff]
      %v583 = vld [vmem:[%s318 + $0x7b8] sm:$0xff]
      %v584 = vld [vmem:[%s318 + $0x7c0] sm:$0xff]
      %v585 = vld [vmem:[%s318 + $0x7c8] sm:$0xff]
      %v586 = vld [vmem:[%s318 + $0x7d0] sm:$0xff]
      %v587 = vld [vmem:[%s318 + $0x7d8] sm:$0xff]
      %v588 = vld [vmem:[%s318 + $0x7e0] sm:$0xff]
      %v589 = vld [vmem:[%s318 + $0x7e8] sm:$0xff]
      %v590 = vld [vmem:[%s318 + $0x7f0] sm:$0xff]
      %v591 = vld [vmem:[%s318 + $0x7f8] sm:$0xff]
      %v592 = vld [vmem:[%s3] sm:$0xff]
      %594 = vset.pattern.permute.xlu0 0
      %595 = vperm.xlu0 %594, %v592
      %v596 = vpop.permute.xlu0 %595
      %v854 = vunpack.c.l.b16 %v336
      %v855 = vunpack.c.h.b16 %v336
      %v856 = vunpack.c.l.b16 %v337
      %v857 = vunpack.c.h.b16 %v337
      %v858 = vunpack.c.l.b16 %v338
      %v859 = vunpack.c.h.b16 %v338
      %v860 = vunpack.c.l.b16 %v339
      %v861 = vunpack.c.h.b16 %v339
      %v862 = vunpack.c.l.b16 %v340
      %v863 = vunpack.c.h.b16 %v340
      %v864 = vunpack.c.l.b16 %v341
      %v865 = vunpack.c.h.b16 %v341
      %v866 = vunpack.c.l.b16 %v342
      %v867 = vunpack.c.h.b16 %v342
      %v868 = vunpack.c.l.b16 %v343
      %v869 = vunpack.c.h.b16 %v343
      %v870 = vunpack.c.l.b16 %v344
      %v871 = vunpack.c.h.b16 %v344
      %v872 = vunpack.c.l.b16 %v345
      %v873 = vunpack.c.h.b16 %v345
      %v874 = vunpack.c.l.b16 %v346
      %v875 = vunpack.c.h.b16 %v346
      %v876 = vunpack.c.l.b16 %v347
      %v877 = vunpack.c.h.b16 %v347
      %v878 = vunpack.c.l.b16 %v348
      %v879 = vunpack.c.h.b16 %v348
      %v880 = vunpack.c.l.b16 %v349
      %v881 = vunpack.c.h.b16 %v349
      %v882 = vunpack.c.l.b16 %v350
      %v883 = vunpack.c.h.b16 %v350
      %v884 = vunpack.c.l.b16 %v351
      %v885 = vunpack.c.h.b16 %v351
      %v886 = vunpack.c.l.b16 %v352
      %v887 = vunpack.c.h.b16 %v352
      %v888 = vunpack.c.l.b16 %v353
      %v889 = vunpack.c.h.b16 %v353
      %v890 = vunpack.c.l.b16 %v354
      %v891 = vunpack.c.h.b16 %v354
      %v892 = vunpack.c.l.b16 %v355
      %v893 = vunpack.c.h.b16 %v355
      %v894 = vunpack.c.l.b16 %v356
      %v895 = vunpack.c.h.b16 %v356
      %v896 = vunpack.c.l.b16 %v357
      %v897 = vunpack.c.h.b16 %v357
      %v898 = vunpack.c.l.b16 %v358
      %v899 = vunpack.c.h.b16 %v358
      %v900 = vunpack.c.l.b16 %v359
      %v901 = vunpack.c.h.b16 %v359
      %v902 = vunpack.c.l.b16 %v360
      %v903 = vunpack.c.h.b16 %v360
      %v904 = vunpack.c.l.b16 %v361
      %v905 = vunpack.c.h.b16 %v361
      %v906 = vunpack.c.l.b16 %v362
      %v907 = vunpack.c.h.b16 %v362
      %v908 = vunpack.c.l.b16 %v363
      %v909 = vunpack.c.h.b16 %v363
      %v910 = vunpack.c.l.b16 %v364
      %v911 = vunpack.c.h.b16 %v364
      %v912 = vunpack.c.l.b16 %v365
      %v913 = vunpack.c.h.b16 %v365
      %v914 = vunpack.c.l.b16 %v366
      %v915 = vunpack.c.h.b16 %v366
      %v916 = vunpack.c.l.b16 %v367
      %v917 = vunpack.c.h.b16 %v367
      %v918 = vunpack.c.l.b16 %v368
      %v919 = vunpack.c.h.b16 %v368
      %v920 = vunpack.c.l.b16 %v369
      %v921 = vunpack.c.h.b16 %v369
      %v922 = vunpack.c.l.b16 %v370
      %v923 = vunpack.c.h.b16 %v370
      %v924 = vunpack.c.l.b16 %v371
      %v925 = vunpack.c.h.b16 %v371
      %v926 = vunpack.c.l.b16 %v372
      %v927 = vunpack.c.h.b16 %v372
      %v928 = vunpack.c.l.b16 %v373
      %v929 = vunpack.c.h.b16 %v373
      %v930 = vunpack.c.l.b16 %v374
      %v931 = vunpack.c.h.b16 %v374
      %v932 = vunpack.c.l.b16 %v375
      %v933 = vunpack.c.h.b16 %v375
      %v934 = vunpack.c.l.b16 %v376
      %v935 = vunpack.c.h.b16 %v376
      %v936 = vunpack.c.l.b16 %v377
      %v937 = vunpack.c.h.b16 %v377
      %v938 = vunpack.c.l.b16 %v378
      %v939 = vunpack.c.h.b16 %v378
      %v940 = vunpack.c.l.b16 %v379
      %v941 = vunpack.c.h.b16 %v379
      %v942 = vunpack.c.l.b16 %v380
      %v943 = vunpack.c.h.b16 %v380
      %v944 = vunpack.c.l.b16 %v381
      %v945 = vunpack.c.h.b16 %v381
      %v946 = vunpack.c.l.b16 %v382
      %v947 = vunpack.c.h.b16 %v382
      %v948 = vunpack.c.l.b16 %v383
      %v949 = vunpack.c.h.b16 %v383
      %v950 = vunpack.c.l.b16 %v384
      %v951 = vunpack.c.h.b16 %v384
      %v952 = vunpack.c.l.b16 %v385
      %v953 = vunpack.c.h.b16 %v385
      %v954 = vunpack.c.l.b16 %v386
      %v955 = vunpack.c.h.b16 %v386
      %v956 = vunpack.c.l.b16 %v387
      %v957 = vunpack.c.h.b16 %v387
      %v958 = vunpack.c.l.b16 %v388
      %v959 = vunpack.c.h.b16 %v388
      %v960 = vunpack.c.l.b16 %v389
      %v961 = vunpack.c.h.b16 %v389
      %v962 = vunpack.c.l.b16 %v390
      %v963 = vunpack.c.h.b16 %v390
      %v964 = vunpack.c.l.b16 %v391
      %v965 = vunpack.c.h.b16 %v391
      %v966 = vunpack.c.l.b16 %v392
      %v967 = vunpack.c.h.b16 %v392
      %v968 = vunpack.c.l.b16 %v393
      %v969 = vunpack.c.h.b16 %v393
      %v970 = vunpack.c.l.b16 %v394
      %v971 = vunpack.c.h.b16 %v394
      %v972 = vunpack.c.l.b16 %v395
      %v973 = vunpack.c.h.b16 %v395
      %v974 = vunpack.c.l.b16 %v396
      %v975 = vunpack.c.h.b16 %v396
      %v976 = vunpack.c.l.b16 %v397
      %v977 = vunpack.c.h.b16 %v397
      %v978 = vunpack.c.l.b16 %v398
      %v979 = vunpack.c.h.b16 %v398
      %v980 = vunpack.c.l.b16 %v399
      %v981 = vunpack.c.h.b16 %v399
      %v982 = vunpack.c.l.b16 %v400
      %v983 = vunpack.c.h.b16 %v400
      %v984 = vunpack.c.l.b16 %v401
      %v985 = vunpack.c.h.b16 %v401
      %v986 = vunpack.c.l.b16 %v402
      %v987 = vunpack.c.h.b16 %v402
      %v988 = vunpack.c.l.b16 %v403
      %v989 = vunpack.c.h.b16 %v403
      %v990 = vunpack.c.l.b16 %v404
      %v991 = vunpack.c.h.b16 %v404
      %v992 = vunpack.c.l.b16 %v405
      %v993 = vunpack.c.h.b16 %v405
      %v994 = vunpack.c.l.b16 %v406
      %v995 = vunpack.c.h.b16 %v406
      %v996 = vunpack.c.l.b16 %v407
      %v997 = vunpack.c.h.b16 %v407
      %v998 = vunpack.c.l.b16 %v408
      %v999 = vunpack.c.h.b16 %v408
      %v1000 = vunpack.c.l.b16 %v409
      %v1001 = vunpack.c.h.b16 %v409
      %v1002 = vunpack.c.l.b16 %v410
      %v1003 = vunpack.c.h.b16 %v410
      %v1004 = vunpack.c.l.b16 %v411
      %v1005 = vunpack.c.h.b16 %v411
      %v1006 = vunpack.c.l.b16 %v412
      %v1007 = vunpack.c.h.b16 %v412
      %v1008 = vunpack.c.l.b16 %v413
      %v1009 = vunpack.c.h.b16 %v413
      %v1010 = vunpack.c.l.b16 %v414
      %v1011 = vunpack.c.h.b16 %v414
      %v1012 = vunpack.c.l.b16 %v415
      %v1013 = vunpack.c.h.b16 %v415
      %v1014 = vunpack.c.l.b16 %v416
      %v1015 = vunpack.c.h.b16 %v416
      %v1016 = vunpack.c.l.b16 %v417
      %v1017 = vunpack.c.h.b16 %v417
      %v1018 = vunpack.c.l.b16 %v418
      %v1019 = vunpack.c.h.b16 %v418
      %v1020 = vunpack.c.l.b16 %v419
      %v1021 = vunpack.c.h.b16 %v419
      %v1022 = vunpack.c.l.b16 %v420
      %v1023 = vunpack.c.h.b16 %v420
      %v1024 = vunpack.c.l.b16 %v421
      %v1025 = vunpack.c.h.b16 %v421
      %v1026 = vunpack.c.l.b16 %v422
      %v1027 = vunpack.c.h.b16 %v422
      %v1028 = vunpack.c.l.b16 %v423
      %v1029 = vunpack.c.h.b16 %v423
      %v1030 = vunpack.c.l.b16 %v424
      %v1031 = vunpack.c.h.b16 %v424
      %v1032 = vunpack.c.l.b16 %v425
      %v1033 = vunpack.c.h.b16 %v425
      %v1034 = vunpack.c.l.b16 %v426
      %v1035 = vunpack.c.h.b16 %v426
      %v1036 = vunpack.c.l.b16 %v427
      %v1037 = vunpack.c.h.b16 %v427
      %v1038 = vunpack.c.l.b16 %v428
      %v1039 = vunpack.c.h.b16 %v428
      %v1040 = vunpack.c.l.b16 %v429
      %v1041 = vunpack.c.h.b16 %v429
      %v1042 = vunpack.c.l.b16 %v430
      %v1043 = vunpack.c.h.b16 %v430
      %v1044 = vunpack.c.l.b16 %v431
      %v1045 = vunpack.c.h.b16 %v431
      %v1046 = vunpack.c.l.b16 %v432
      %v1047 = vunpack.c.h.b16 %v432
      %v1048 = vunpack.c.l.b16 %v433
      %v1049 = vunpack.c.h.b16 %v433
      %v1050 = vunpack.c.l.b16 %v434
      %v1051 = vunpack.c.h.b16 %v434
      %v1052 = vunpack.c.l.b16 %v435
      %v1053 = vunpack.c.h.b16 %v435
      %v1054 = vunpack.c.l.b16 %v436
      %v1055 = vunpack.c.h.b16 %v436
      %v1056 = vunpack.c.l.b16 %v437
      %v1057 = vunpack.c.h.b16 %v437
      %v1058 = vunpack.c.l.b16 %v438
      %v1059 = vunpack.c.h.b16 %v438
      %v1060 = vunpack.c.l.b16 %v439
      %v1061 = vunpack.c.h.b16 %v439
      %v1062 = vunpack.c.l.b16 %v440
      %v1063 = vunpack.c.h.b16 %v440
      %v1064 = vunpack.c.l.b16 %v441
      %v1065 = vunpack.c.h.b16 %v441
      %v1066 = vunpack.c.l.b16 %v442
      %v1067 = vunpack.c.h.b16 %v442
      %v1068 = vunpack.c.l.b16 %v443
      %v1069 = vunpack.c.h.b16 %v443
      %v1070 = vunpack.c.l.b16 %v444
      %v1071 = vunpack.c.h.b16 %v444
      %v1072 = vunpack.c.l.b16 %v445
      %v1073 = vunpack.c.h.b16 %v445
      %v1074 = vunpack.c.l.b16 %v446
      %v1075 = vunpack.c.h.b16 %v446
      %v1076 = vunpack.c.l.b16 %v447
      %v1077 = vunpack.c.h.b16 %v447
      %v1078 = vunpack.c.l.b16 %v448
      %v1079 = vunpack.c.h.b16 %v448
      %v1080 = vunpack.c.l.b16 %v449
      %v1081 = vunpack.c.h.b16 %v449
      %v1082 = vunpack.c.l.b16 %v450
      %v1083 = vunpack.c.h.b16 %v450
      %v1084 = vunpack.c.l.b16 %v451
      %v1085 = vunpack.c.h.b16 %v451
      %v1086 = vunpack.c.l.b16 %v452
      %v1087 = vunpack.c.h.b16 %v452
      %v1088 = vunpack.c.l.b16 %v453
      %v1089 = vunpack.c.h.b16 %v453
      %v1090 = vunpack.c.l.b16 %v454
      %v1091 = vunpack.c.h.b16 %v454
      %v1092 = vunpack.c.l.b16 %v455
      %v1093 = vunpack.c.h.b16 %v455
      %v1094 = vunpack.c.l.b16 %v456
      %v1095 = vunpack.c.h.b16 %v456
      %v1096 = vunpack.c.l.b16 %v457
      %v1097 = vunpack.c.h.b16 %v457
      %v1098 = vunpack.c.l.b16 %v458
      %v1099 = vunpack.c.h.b16 %v458
      %v1100 = vunpack.c.l.b16 %v459
      %v1101 = vunpack.c.h.b16 %v459
      %v1102 = vunpack.c.l.b16 %v460
      %v1103 = vunpack.c.h.b16 %v460
      %v1104 = vunpack.c.l.b16 %v461
      %v1105 = vunpack.c.h.b16 %v461
      %v1106 = vunpack.c.l.b16 %v462
      %v1107 = vunpack.c.h.b16 %v462
      %v1108 = vunpack.c.l.b16 %v463
      %v1109 = vunpack.c.h.b16 %v463
      %v1110 = vunpack.c.l.b16 %v464
      %v1111 = vunpack.c.h.b16 %v464
      %v1112 = vunpack.c.l.b16 %v465
      %v1113 = vunpack.c.h.b16 %v465
      %v1114 = vunpack.c.l.b16 %v466
      %v1115 = vunpack.c.h.b16 %v466
      %v1116 = vunpack.c.l.b16 %v467
      %v1117 = vunpack.c.h.b16 %v467
      %v1118 = vunpack.c.l.b16 %v468
      %v1119 = vunpack.c.h.b16 %v468
      %v1120 = vunpack.c.l.b16 %v469
      %v1121 = vunpack.c.h.b16 %v469
      %v1122 = vunpack.c.l.b16 %v470
      %v1123 = vunpack.c.h.b16 %v470
      %v1124 = vunpack.c.l.b16 %v471
      %v1125 = vunpack.c.h.b16 %v471
      %v1126 = vunpack.c.l.b16 %v472
      %v1127 = vunpack.c.h.b16 %v472
      %v1128 = vunpack.c.l.b16 %v473
      %v1129 = vunpack.c.h.b16 %v473
      %v1130 = vunpack.c.l.b16 %v474
      %v1131 = vunpack.c.h.b16 %v474
      %v1132 = vunpack.c.l.b16 %v475
      %v1133 = vunpack.c.h.b16 %v475
      %v1134 = vunpack.c.l.b16 %v476
      %v1135 = vunpack.c.h.b16 %v476
      %v1136 = vunpack.c.l.b16 %v477
      %v1137 = vunpack.c.h.b16 %v477
      %v1138 = vunpack.c.l.b16 %v478
      %v1139 = vunpack.c.h.b16 %v478
      %v1140 = vunpack.c.l.b16 %v479
      %v1141 = vunpack.c.h.b16 %v479
      %v1142 = vunpack.c.l.b16 %v480
      %v1143 = vunpack.c.h.b16 %v480
      %v1144 = vunpack.c.l.b16 %v481
      %v1145 = vunpack.c.h.b16 %v481
      %v1146 = vunpack.c.l.b16 %v482
      %v1147 = vunpack.c.h.b16 %v482
      %v1148 = vunpack.c.l.b16 %v483
      %v1149 = vunpack.c.h.b16 %v483
      %v1150 = vunpack.c.l.b16 %v484
      %v1151 = vunpack.c.h.b16 %v484
      %v1152 = vunpack.c.l.b16 %v485
      %v1153 = vunpack.c.h.b16 %v485
      %v1154 = vunpack.c.l.b16 %v486
      %v1155 = vunpack.c.h.b16 %v486
      %v1156 = vunpack.c.l.b16 %v487
      %v1157 = vunpack.c.h.b16 %v487
      %v1158 = vunpack.c.l.b16 %v488
      %v1159 = vunpack.c.h.b16 %v488
      %v1160 = vunpack.c.l.b16 %v489
      %v1161 = vunpack.c.h.b16 %v489
      %v1162 = vunpack.c.l.b16 %v490
      %v1163 = vunpack.c.h.b16 %v490
      %v1164 = vunpack.c.l.b16 %v491
      %v1165 = vunpack.c.h.b16 %v491
      %v1166 = vunpack.c.l.b16 %v492
      %v1167 = vunpack.c.h.b16 %v492
      %v1168 = vunpack.c.l.b16 %v493
      %v1169 = vunpack.c.h.b16 %v493
      %v1170 = vunpack.c.l.b16 %v494
      %v1171 = vunpack.c.h.b16 %v494
      %v1172 = vunpack.c.l.b16 %v495
      %v1173 = vunpack.c.h.b16 %v495
      %v1174 = vunpack.c.l.b16 %v496
      %v1175 = vunpack.c.h.b16 %v496
      %v1176 = vunpack.c.l.b16 %v497
      %v1177 = vunpack.c.h.b16 %v497
      %v1178 = vunpack.c.l.b16 %v498
      %v1179 = vunpack.c.h.b16 %v498
      %v1180 = vunpack.c.l.b16 %v499
      %v1181 = vunpack.c.h.b16 %v499
      %v1182 = vunpack.c.l.b16 %v500
      %v1183 = vunpack.c.h.b16 %v500
      %v1184 = vunpack.c.l.b16 %v501
      %v1185 = vunpack.c.h.b16 %v501
      %v1186 = vunpack.c.l.b16 %v502
      %v1187 = vunpack.c.h.b16 %v502
      %v1188 = vunpack.c.l.b16 %v503
      %v1189 = vunpack.c.h.b16 %v503
      %v1190 = vunpack.c.l.b16 %v504
      %v1191 = vunpack.c.h.b16 %v504
      %v1192 = vunpack.c.l.b16 %v505
      %v1193 = vunpack.c.h.b16 %v505
      %v1194 = vunpack.c.l.b16 %v506
      %v1195 = vunpack.c.h.b16 %v506
      %v1196 = vunpack.c.l.b16 %v507
      %v1197 = vunpack.c.h.b16 %v507
      %v1198 = vunpack.c.l.b16 %v508
      %v1199 = vunpack.c.h.b16 %v508
      %v1200 = vunpack.c.l.b16 %v509
      %v1201 = vunpack.c.h.b16 %v509
      %v1202 = vunpack.c.l.b16 %v510
      %v1203 = vunpack.c.h.b16 %v510
      %v1204 = vunpack.c.l.b16 %v511
      %v1205 = vunpack.c.h.b16 %v511
      %v1206 = vunpack.c.l.b16 %v512
      %v1207 = vunpack.c.h.b16 %v512
      %v1208 = vunpack.c.l.b16 %v513
      %v1209 = vunpack.c.h.b16 %v513
      %v1210 = vunpack.c.l.b16 %v514
      %v1211 = vunpack.c.h.b16 %v514
      %v1212 = vunpack.c.l.b16 %v515
      %v1213 = vunpack.c.h.b16 %v515
      %v1214 = vunpack.c.l.b16 %v516
      %v1215 = vunpack.c.h.b16 %v516
      %v1216 = vunpack.c.l.b16 %v517
      %v1217 = vunpack.c.h.b16 %v517
      %v1218 = vunpack.c.l.b16 %v518
      %v1219 = vunpack.c.h.b16 %v518
      %v1220 = vunpack.c.l.b16 %v519
      %v1221 = vunpack.c.h.b16 %v519
      %v1222 = vunpack.c.l.b16 %v520
      %v1223 = vunpack.c.h.b16 %v520
      %v1224 = vunpack.c.l.b16 %v521
      %v1225 = vunpack.c.h.b16 %v521
      %v1226 = vunpack.c.l.b16 %v522
      %v1227 = vunpack.c.h.b16 %v522
      %v1228 = vunpack.c.l.b16 %v523
      %v1229 = vunpack.c.h.b16 %v523
      %v1230 = vunpack.c.l.b16 %v524
      %v1231 = vunpack.c.h.b16 %v524
      %v1232 = vunpack.c.l.b16 %v525
      %v1233 = vunpack.c.h.b16 %v525
      %v1234 = vunpack.c.l.b16 %v526
      %v1235 = vunpack.c.h.b16 %v526
      %v1236 = vunpack.c.l.b16 %v527
      %v1237 = vunpack.c.h.b16 %v527
      %v1238 = vunpack.c.l.b16 %v528
      %v1239 = vunpack.c.h.b16 %v528
      %v1240 = vunpack.c.l.b16 %v529
      %v1241 = vunpack.c.h.b16 %v529
      %v1242 = vunpack.c.l.b16 %v530
      %v1243 = vunpack.c.h.b16 %v530
      %v1244 = vunpack.c.l.b16 %v531
      %v1245 = vunpack.c.h.b16 %v531
      %v1246 = vunpack.c.l.b16 %v532
      %v1247 = vunpack.c.h.b16 %v532
      %v1248 = vunpack.c.l.b16 %v533
      %v1249 = vunpack.c.h.b16 %v533
      %v1250 = vunpack.c.l.b16 %v534
      %v1251 = vunpack.c.h.b16 %v534
      %v1252 = vunpack.c.l.b16 %v535
      %v1253 = vunpack.c.h.b16 %v535
      %v1254 = vunpack.c.l.b16 %v536
      %v1255 = vunpack.c.h.b16 %v536
      %v1256 = vunpack.c.l.b16 %v537
      %v1257 = vunpack.c.h.b16 %v537
      %v1258 = vunpack.c.l.b16 %v538
      %v1259 = vunpack.c.h.b16 %v538
      %v1260 = vunpack.c.l.b16 %v539
      %v1261 = vunpack.c.h.b16 %v539
      %v1262 = vunpack.c.l.b16 %v540
      %v1263 = vunpack.c.h.b16 %v540
      %v1264 = vunpack.c.l.b16 %v541
      %v1265 = vunpack.c.h.b16 %v541
      %v1266 = vunpack.c.l.b16 %v542
      %v1267 = vunpack.c.h.b16 %v542
      %v1268 = vunpack.c.l.b16 %v543
      %v1269 = vunpack.c.h.b16 %v543
      %v1270 = vunpack.c.l.b16 %v544
      %v1271 = vunpack.c.h.b16 %v544
      %v1272 = vunpack.c.l.b16 %v545
      %v1273 = vunpack.c.h.b16 %v545
      %v1274 = vunpack.c.l.b16 %v546
      %v1275 = vunpack.c.h.b16 %v546
      %v1276 = vunpack.c.l.b16 %v547
      %v1277 = vunpack.c.h.b16 %v547
      %v1278 = vunpack.c.l.b16 %v548
      %v1279 = vunpack.c.h.b16 %v548
      %v1280 = vunpack.c.l.b16 %v549
      %v1281 = vunpack.c.h.b16 %v549
      %v1282 = vunpack.c.l.b16 %v550
      %v1283 = vunpack.c.h.b16 %v550
      %v1284 = vunpack.c.l.b16 %v551
      %v1285 = vunpack.c.h.b16 %v551
      %v1286 = vunpack.c.l.b16 %v552
      %v1287 = vunpack.c.h.b16 %v552
      %v1288 = vunpack.c.l.b16 %v553
      %v1289 = vunpack.c.h.b16 %v553
      %v1290 = vunpack.c.l.b16 %v554
      %v1291 = vunpack.c.h.b16 %v554
      %v1292 = vunpack.c.l.b16 %v555
      %v1293 = vunpack.c.h.b16 %v555
      %v1294 = vunpack.c.l.b16 %v556
      %v1295 = vunpack.c.h.b16 %v556
      %v1296 = vunpack.c.l.b16 %v557
      %v1297 = vunpack.c.h.b16 %v557
      %v1298 = vunpack.c.l.b16 %v558
      %v1299 = vunpack.c.h.b16 %v558
      %v1300 = vunpack.c.l.b16 %v559
      %v1301 = vunpack.c.h.b16 %v559
      %v1302 = vunpack.c.l.b16 %v560
      %v1303 = vunpack.c.h.b16 %v560
      %v1304 = vunpack.c.l.b16 %v561
      %v1305 = vunpack.c.h.b16 %v561
      %v1306 = vunpack.c.l.b16 %v562
      %v1307 = vunpack.c.h.b16 %v562
      %v1308 = vunpack.c.l.b16 %v563
      %v1309 = vunpack.c.h.b16 %v563
      %v1310 = vunpack.c.l.b16 %v564
      %v1311 = vunpack.c.h.b16 %v564
      %v1312 = vunpack.c.l.b16 %v565
      %v1313 = vunpack.c.h.b16 %v565
      %v1314 = vunpack.c.l.b16 %v566
      %v1315 = vunpack.c.h.b16 %v566
      %v1316 = vunpack.c.l.b16 %v567
      %v1317 = vunpack.c.h.b16 %v567
      %v1318 = vunpack.c.l.b16 %v568
      %v1319 = vunpack.c.h.b16 %v568
      %v1320 = vunpack.c.l.b16 %v569
      %v1321 = vunpack.c.h.b16 %v569
      %v1322 = vunpack.c.l.b16 %v570
      %v1323 = vunpack.c.h.b16 %v570
      %v1324 = vunpack.c.l.b16 %v571
      %v1325 = vunpack.c.h.b16 %v571
      %v1326 = vunpack.c.l.b16 %v572
      %v1327 = vunpack.c.h.b16 %v572
      %v1328 = vunpack.c.l.b16 %v573
      %v1329 = vunpack.c.h.b16 %v573
      %v1330 = vunpack.c.l.b16 %v574
      %v1331 = vunpack.c.h.b16 %v574
      %v1332 = vunpack.c.l.b16 %v575
      %v1333 = vunpack.c.h.b16 %v575
      %v1334 = vunpack.c.l.b16 %v576
      %v1335 = vunpack.c.h.b16 %v576
      %v1336 = vunpack.c.l.b16 %v577
      %v1337 = vunpack.c.h.b16 %v577
      %v1338 = vunpack.c.l.b16 %v578
      %v1339 = vunpack.c.h.b16 %v578
      %v1340 = vunpack.c.l.b16 %v579
      %v1341 = vunpack.c.h.b16 %v579
      %v1342 = vunpack.c.l.b16 %v580
      %v1343 = vunpack.c.h.b16 %v580
      %v1344 = vunpack.c.l.b16 %v581
      %v1345 = vunpack.c.h.b16 %v581
      %v1346 = vunpack.c.l.b16 %v582
      %v1347 = vunpack.c.h.b16 %v582
      %v1348 = vunpack.c.l.b16 %v583
      %v1349 = vunpack.c.h.b16 %v583
      %v1350 = vunpack.c.l.b16 %v584
      %v1351 = vunpack.c.h.b16 %v584
      %v1352 = vunpack.c.l.b16 %v585
      %v1353 = vunpack.c.h.b16 %v585
      %v1354 = vunpack.c.l.b16 %v586
      %v1355 = vunpack.c.h.b16 %v586
      %v1356 = vunpack.c.l.b16 %v587
      %v1357 = vunpack.c.h.b16 %v587
      %v1358 = vunpack.c.l.b16 %v588
      %v1359 = vunpack.c.h.b16 %v588
      %v1360 = vunpack.c.l.b16 %v589
      %v1361 = vunpack.c.h.b16 %v589
      %v1362 = vunpack.c.l.b16 %v590
      %v1363 = vunpack.c.h.b16 %v590
      %v1364 = vunpack.c.l.b16 %v591
      %v1365 = vunpack.c.h.b16 %v591
      %v1366 = vpack.c.b16 %v886, %v854
      %v1367 = vpack.c.b16 %v887, %v855
      %v1368 = vpack.c.b16 %v888, %v856
      %v1369 = vpack.c.b16 %v889, %v857
      %v1370 = vpack.c.b16 %v890, %v858
      %v1371 = vpack.c.b16 %v891, %v859
      %v1372 = vpack.c.b16 %v892, %v860
      %v1373 = vpack.c.b16 %v893, %v861
      %v1374 = vpack.c.b16 %v894, %v862
      %v1375 = vpack.c.b16 %v895, %v863
      %v1376 = vpack.c.b16 %v896, %v864
      %v1377 = vpack.c.b16 %v897, %v865
      %v1378 = vpack.c.b16 %v898, %v866
      %v1379 = vpack.c.b16 %v899, %v867
      %v1380 = vpack.c.b16 %v900, %v868
      %v1381 = vpack.c.b16 %v901, %v869
      %v1382 = vpack.c.b16 %v902, %v870
      %v1383 = vpack.c.b16 %v903, %v871
      %v1384 = vpack.c.b16 %v904, %v872
      %v1385 = vpack.c.b16 %v905, %v873
      %v1386 = vpack.c.b16 %v906, %v874
      %v1387 = vpack.c.b16 %v907, %v875
      %v1388 = vpack.c.b16 %v908, %v876
      %v1389 = vpack.c.b16 %v909, %v877
      %v1390 = vpack.c.b16 %v910, %v878
      %v1391 = vpack.c.b16 %v911, %v879
      %v1392 = vpack.c.b16 %v912, %v880
      %v1393 = vpack.c.b16 %v913, %v881
      %v1394 = vpack.c.b16 %v914, %v882
      %v1395 = vpack.c.b16 %v915, %v883
      %v1396 = vpack.c.b16 %v916, %v884
      %v1397 = vpack.c.b16 %v917, %v885
      %v1398 = vpack.c.b16 %v950, %v918
      %v1399 = vpack.c.b16 %v951, %v919
      %v1400 = vpack.c.b16 %v952, %v920
      %v1401 = vpack.c.b16 %v953, %v921
      %v1402 = vpack.c.b16 %v954, %v922
      %v1403 = vpack.c.b16 %v955, %v923
      %v1404 = vpack.c.b16 %v956, %v924
      %v1405 = vpack.c.b16 %v957, %v925
      %v1406 = vpack.c.b16 %v958, %v926
      %v1407 = vpack.c.b16 %v959, %v927
      %v1408 = vpack.c.b16 %v960, %v928
      %v1409 = vpack.c.b16 %v961, %v929
      %v1410 = vpack.c.b16 %v962, %v930
      %v1411 = vpack.c.b16 %v963, %v931
      %v1412 = vpack.c.b16 %v964, %v932
      %v1413 = vpack.c.b16 %v965, %v933
      %v1414 = vpack.c.b16 %v966, %v934
      %v1415 = vpack.c.b16 %v967, %v935
      %v1416 = vpack.c.b16 %v968, %v936
      %v1417 = vpack.c.b16 %v969, %v937
      %v1418 = vpack.c.b16 %v970, %v938
      %v1419 = vpack.c.b16 %v971, %v939
      %v1420 = vpack.c.b16 %v972, %v940
      %v1421 = vpack.c.b16 %v973, %v941
      %v1422 = vpack.c.b16 %v974, %v942
      %v1423 = vpack.c.b16 %v975, %v943
      %v1424 = vpack.c.b16 %v976, %v944
      %v1425 = vpack.c.b16 %v977, %v945
      %v1426 = vpack.c.b16 %v978, %v946
      %v1427 = vpack.c.b16 %v979, %v947
      %v1428 = vpack.c.b16 %v980, %v948
      %v1429 = vpack.c.b16 %v981, %v949
      %v1430 = vpack.c.b16 %v1014, %v982
      %v1431 = vpack.c.b16 %v1015, %v983
      %v1432 = vpack.c.b16 %v1016, %v984
      %v1433 = vpack.c.b16 %v1017, %v985
      %v1434 = vpack.c.b16 %v1018, %v986
      %v1435 = vpack.c.b16 %v1019, %v987
      %v1436 = vpack.c.b16 %v1020, %v988
      %v1437 = vpack.c.b16 %v1021, %v989
      %v1438 = vpack.c.b16 %v1022, %v990
      %v1439 = vpack.c.b16 %v1023, %v991
      %v1440 = vpack.c.b16 %v1024, %v992
      %v1441 = vpack.c.b16 %v1025, %v993
      %v1442 = vpack.c.b16 %v1026, %v994
      %v1443 = vpack.c.b16 %v1027, %v995
      %v1444 = vpack.c.b16 %v1028, %v996
      %v1445 = vpack.c.b16 %v1029, %v997
      %v1446 = vpack.c.b16 %v1030, %v998
      %v1447 = vpack.c.b16 %v1031, %v999
      %v1448 = vpack.c.b16 %v1032, %v1000
      %v1449 = vpack.c.b16 %v1033, %v1001
      %v1450 = vpack.c.b16 %v1034, %v1002
      %v1451 = vpack.c.b16 %v1035, %v1003
      %v1452 = vpack.c.b16 %v1036, %v1004
      %v1453 = vpack.c.b16 %v1037, %v1005
      %v1454 = vpack.c.b16 %v1038, %v1006
      %v1455 = vpack.c.b16 %v1039, %v1007
      %v1456 = vpack.c.b16 %v1040, %v1008
      %v1457 = vpack.c.b16 %v1041, %v1009
      %v1458 = vpack.c.b16 %v1042, %v1010
      %v1459 = vpack.c.b16 %v1043, %v1011
      %v1460 = vpack.c.b16 %v1044, %v1012
      %v1461 = vpack.c.b16 %v1045, %v1013
      %v1462 = vpack.c.b16 %v1078, %v1046
      %v1463 = vpack.c.b16 %v1079, %v1047
      %v1464 = vpack.c.b16 %v1080, %v1048
      %v1465 = vpack.c.b16 %v1081, %v1049
      %v1466 = vpack.c.b16 %v1082, %v1050
      %v1467 = vpack.c.b16 %v1083, %v1051
      %v1468 = vpack.c.b16 %v1084, %v1052
      %v1469 = vpack.c.b16 %v1085, %v1053
      %v1470 = vpack.c.b16 %v1086, %v1054
      %v1471 = vpack.c.b16 %v1087, %v1055
      %v1472 = vpack.c.b16 %v1088, %v1056
      %v1473 = vpack.c.b16 %v1089, %v1057
      %v1474 = vpack.c.b16 %v1090, %v1058
      %v1475 = vpack.c.b16 %v1091, %v1059
      %v1476 = vpack.c.b16 %v1092, %v1060
      %v1477 = vpack.c.b16 %v1093, %v1061
      %v1478 = vpack.c.b16 %v1094, %v1062
      %v1479 = vpack.c.b16 %v1095, %v1063
      %v1480 = vpack.c.b16 %v1096, %v1064
      %v1481 = vpack.c.b16 %v1097, %v1065
      %v1482 = vpack.c.b16 %v1098, %v1066
      %v1483 = vpack.c.b16 %v1099, %v1067
      %v1484 = vpack.c.b16 %v1100, %v1068
      %v1485 = vpack.c.b16 %v1101, %v1069
      %v1486 = vpack.c.b16 %v1102, %v1070
      %v1487 = vpack.c.b16 %v1103, %v1071
      %v1488 = vpack.c.b16 %v1104, %v1072
      %v1489 = vpack.c.b16 %v1105, %v1073
      %v1490 = vpack.c.b16 %v1106, %v1074
      %v1491 = vpack.c.b16 %v1107, %v1075
      %v1492 = vpack.c.b16 %v1108, %v1076
      %v1493 = vpack.c.b16 %v1109, %v1077
      %v1494 = vpack.c.b16 %v1142, %v1110
      %v1495 = vpack.c.b16 %v1143, %v1111
      %v1496 = vpack.c.b16 %v1144, %v1112
      %v1497 = vpack.c.b16 %v1145, %v1113
      %v1498 = vpack.c.b16 %v1146, %v1114
      %v1499 = vpack.c.b16 %v1147, %v1115
      %v1500 = vpack.c.b16 %v1148, %v1116
      %v1501 = vpack.c.b16 %v1149, %v1117
      %v1502 = vpack.c.b16 %v1150, %v1118
      %v1503 = vpack.c.b16 %v1151, %v1119
      %v1504 = vpack.c.b16 %v1152, %v1120
      %v1505 = vpack.c.b16 %v1153, %v1121
      %v1506 = vpack.c.b16 %v1154, %v1122
      %v1507 = vpack.c.b16 %v1155, %v1123
      %v1508 = vpack.c.b16 %v1156, %v1124
      %v1509 = vpack.c.b16 %v1157, %v1125
      %v1510 = vpack.c.b16 %v1158, %v1126
      %v1511 = vpack.c.b16 %v1159, %v1127
      %v1512 = vpack.c.b16 %v1160, %v1128
      %v1513 = vpack.c.b16 %v1161, %v1129
      %v1514 = vpack.c.b16 %v1162, %v1130
      %v1515 = vpack.c.b16 %v1163, %v1131
      %v1516 = vpack.c.b16 %v1164, %v1132
      %v1517 = vpack.c.b16 %v1165, %v1133
      %v1518 = vpack.c.b16 %v1166, %v1134
      %v1519 = vpack.c.b16 %v1167, %v1135
      %v1520 = vpack.c.b16 %v1168, %v1136
      %v1521 = vpack.c.b16 %v1169, %v1137
      %v1522 = vpack.c.b16 %v1170, %v1138
      %v1523 = vpack.c.b16 %v1171, %v1139
      %v1524 = vpack.c.b16 %v1172, %v1140
      %v1525 = vpack.c.b16 %v1173, %v1141
      %v1526 = vpack.c.b16 %v1206, %v1174
      %v1527 = vpack.c.b16 %v1207, %v1175
      %v1528 = vpack.c.b16 %v1208, %v1176
      %v1529 = vpack.c.b16 %v1209, %v1177
      %v1530 = vpack.c.b16 %v1210, %v1178
      %v1531 = vpack.c.b16 %v1211, %v1179
      %v1532 = vpack.c.b16 %v1212, %v1180
      %v1533 = vpack.c.b16 %v1213, %v1181
      %v1534 = vpack.c.b16 %v1214, %v1182
      %v1535 = vpack.c.b16 %v1215, %v1183
      %v1536 = vpack.c.b16 %v1216, %v1184
      %v1537 = vpack.c.b16 %v1217, %v1185
      %v1538 = vpack.c.b16 %v1218, %v1186
      %v1539 = vpack.c.b16 %v1219, %v1187
      %v1540 = vpack.c.b16 %v1220, %v1188
      %v1541 = vpack.c.b16 %v1221, %v1189
      %v1542 = vpack.c.b16 %v1222, %v1190
      %v1543 = vpack.c.b16 %v1223, %v1191
      %v1544 = vpack.c.b16 %v1224, %v1192
      %v1545 = vpack.c.b16 %v1225, %v1193
      %v1546 = vpack.c.b16 %v1226, %v1194
      %v1547 = vpack.c.b16 %v1227, %v1195
      %v1548 = vpack.c.b16 %v1228, %v1196
      %v1549 = vpack.c.b16 %v1229, %v1197
      %v1550 = vpack.c.b16 %v1230, %v1198
      %v1551 = vpack.c.b16 %v1231, %v1199
      %v1552 = vpack.c.b16 %v1232, %v1200
      %v1553 = vpack.c.b16 %v1233, %v1201
      %v1554 = vpack.c.b16 %v1234, %v1202
      %v1555 = vpack.c.b16 %v1235, %v1203
      %v1556 = vpack.c.b16 %v1236, %v1204
      %v1557 = vpack.c.b16 %v1237, %v1205
      %v1558 = vpack.c.b16 %v1270, %v1238
      %v1559 = vpack.c.b16 %v1271, %v1239
      %v1560 = vpack.c.b16 %v1272, %v1240
      %v1561 = vpack.c.b16 %v1273, %v1241
      %v1562 = vpack.c.b16 %v1274, %v1242
      %v1563 = vpack.c.b16 %v1275, %v1243
      %v1564 = vpack.c.b16 %v1276, %v1244
      %v1565 = vpack.c.b16 %v1277, %v1245
      %v1566 = vpack.c.b16 %v1278, %v1246
      %v1567 = vpack.c.b16 %v1279, %v1247
      %v1568 = vpack.c.b16 %v1280, %v1248
      %v1569 = vpack.c.b16 %v1281, %v1249
      %v1570 = vpack.c.b16 %v1282, %v1250
      %v1571 = vpack.c.b16 %v1283, %v1251
      %v1572 = vpack.c.b16 %v1284, %v1252
      %v1573 = vpack.c.b16 %v1285, %v1253
      %v1574 = vpack.c.b16 %v1286, %v1254
      %v1575 = vpack.c.b16 %v1287, %v1255
      %v1576 = vpack.c.b16 %v1288, %v1256
      %v1577 = vpack.c.b16 %v1289, %v1257
      %v1578 = vpack.c.b16 %v1290, %v1258
      %v1579 = vpack.c.b16 %v1291, %v1259
      %v1580 = vpack.c.b16 %v1292, %v1260
      %v1581 = vpack.c.b16 %v1293, %v1261
      %v1582 = vpack.c.b16 %v1294, %v1262
      %v1583 = vpack.c.b16 %v1295, %v1263
      %v1584 = vpack.c.b16 %v1296, %v1264
      %v1585 = vpack.c.b16 %v1297, %v1265
      %v1586 = vpack.c.b16 %v1298, %v1266
      %v1587 = vpack.c.b16 %v1299, %v1267
      %v1588 = vpack.c.b16 %v1300, %v1268
      %v1589 = vpack.c.b16 %v1301, %v1269
      %v1590 = vpack.c.b16 %v1334, %v1302
      %v1591 = vpack.c.b16 %v1335, %v1303
      %v1592 = vpack.c.b16 %v1336, %v1304
      %v1593 = vpack.c.b16 %v1337, %v1305
      %v1594 = vpack.c.b16 %v1338, %v1306
      %v1595 = vpack.c.b16 %v1339, %v1307
      %v1596 = vpack.c.b16 %v1340, %v1308
      %v1597 = vpack.c.b16 %v1341, %v1309
      %v1598 = vpack.c.b16 %v1342, %v1310
      %v1599 = vpack.c.b16 %v1343, %v1311
      %v1600 = vpack.c.b16 %v1344, %v1312
      %v1601 = vpack.c.b16 %v1345, %v1313
      %v1602 = vpack.c.b16 %v1346, %v1314
      %v1603 = vpack.c.b16 %v1347, %v1315
      %v1604 = vpack.c.b16 %v1348, %v1316
      %v1605 = vpack.c.b16 %v1349, %v1317
      %v1606 = vpack.c.b16 %v1350, %v1318
      %v1607 = vpack.c.b16 %v1351, %v1319
      %v1608 = vpack.c.b16 %v1352, %v1320
      %v1609 = vpack.c.b16 %v1353, %v1321
      %v1610 = vpack.c.b16 %v1354, %v1322
      %v1611 = vpack.c.b16 %v1355, %v1323
      %v1612 = vpack.c.b16 %v1356, %v1324
      %v1613 = vpack.c.b16 %v1357, %v1325
      %v1614 = vpack.c.b16 %v1358, %v1326
      %v1615 = vpack.c.b16 %v1359, %v1327
      %v1616 = vpack.c.b16 %v1360, %v1328
      %v1617 = vpack.c.b16 %v1361, %v1329
      %v1618 = vpack.c.b16 %v1362, %v1330
      %v1619 = vpack.c.b16 %v1363, %v1331
      %v1620 = vpack.c.b16 %v1364, %v1332
      %v1621 = vpack.c.b16 %v1365, %v1333
      %1878 = vmatprep.subr.bf16.mxu0 %v1367
      %1879 = vmatpush1.bf16.msra.mxu0 %v1366
      %1880 = vmatprep.subr.bf16.mxu0 %v1399
      %1881 = vmatpush1.bf16.msra.mxu0 %v1398
      %1882 = vmatprep.subr.bf16.mxu0 %v1431
      %1883 = vmatpush1.bf16.msra.mxu0 %v1430
      %1884 = vmatprep.subr.bf16.mxu0 %v1463
      %1885 = vmatpush1.bf16.msra.mxu0 %v1462
      %1886 = vmatprep.subr.bf16.mxu0 %v1495
      %1887 = vmatpush1.bf16.msra.mxu0 %v1494
      %1888 = vmatprep.subr.bf16.mxu0 %v1527
      %1889 = vmatpush1.bf16.msra.mxu0 %v1526
      %1890 = vmatprep.subr.bf16.mxu0 %v1559
      %1891 = vmatpush1.bf16.msra.mxu0 %v1558
      %1892 = vmatprep.subr.bf16.mxu0 %v1591
      %1893 = vmatpush1.bf16.msra.mxu0 %v1590
      %1894 = vmatprep.subr.bf16.mxu0 0
      %1895 = vmatpush1.bf16.msra.mxu0 0
      %1896 = vmatprep.subr.bf16.mxu0 0
      %1897 = vmatpush1.bf16.msra.mxu0 0
      %1898 = vmatprep.subr.bf16.mxu0 0
      %1899 = vmatpush1.bf16.msra.mxu0 0
      %1900 = vmatprep.subr.bf16.mxu0 0
      %1901 = vmatpush1.bf16.msra.mxu0 0
      %1902 = vmatprep.subr.bf16.mxu0 0
      %1903 = vmatpush1.bf16.msra.mxu0 0
      %1904 = vmatprep.subr.bf16.mxu0 0
      %1905 = vmatpush1.bf16.msra.mxu0 0
      %1906 = vmatprep.subr.bf16.mxu0 0
      %1907 = vmatpush1.bf16.msra.mxu0 0
      %1908 = vmatprep.subr.bf16.mxu0 0
      %1909 = vmatpush1.bf16.msra.mxu0 0
      %1910 = vmatprep.mubr.bf16.mxu0 0
      %1911 = vmatmul.mubr.bf16.gmra.mrb[0].mxu0 %v335
      %v1912 = vpop.f32.mrb[0].mxu0
      %v1913 = vadd.f32 %v596, %v1912
      %v1914 = vpop.f32.mrb[0].mxu0
      %v1915 = vadd.f32 %v596, %v1914
      %v1916 = vpop.f32.mrb[0].mxu0
      %v1917 = vpop.f32.mrb[0].mxu0
      %1918 = vdwg.mxu0
      %1919 = vmatprep.subr.bf16.mxu0 %v1369
      %1920 = vmatpush1.bf16.msra.mxu0 %v1368
      %1921 = vmatprep.subr.bf16.mxu0 %v1401
      %1922 = vmatpush1.bf16.msra.mxu0 %v1400
      %1923 = vmatprep.subr.bf16.mxu0 %v1433
      %1924 = vmatpush1.bf16.msra.mxu0 %v1432
      %1925 = vmatprep.subr.bf16.mxu0 %v1465
      %1926 = vmatpush1.bf16.msra.mxu0 %v1464
      %1927 = vmatprep.subr.bf16.mxu0 %v1497
      %1928 = vmatpush1.bf16.msra.mxu0 %v1496
      %1929 = vmatprep.subr.bf16.mxu0 %v1529
      %1930 = vmatpush1.bf16.msra.mxu0 %v1528
      %1931 = vmatprep.subr.bf16.mxu0 %v1561
      %1932 = vmatpush1.bf16.msra.mxu0 %v1560
      %1933 = vmatprep.subr.bf16.mxu0 %v1593
      %1934 = vmatpush1.bf16.msra.mxu0 %v1592
      %1935 = vmatprep.subr.bf16.mxu0 0
      %1936 = vmatpush1.bf16.msra.mxu0 0
      %1937 = vmatprep.subr.bf16.mxu0 0
      %1938 = vmatpush1.bf16.msra.mxu0 0
      %1939 = vmatprep.subr.bf16.mxu0 0
      %1940 = vmatpush1.bf16.msra.mxu0 0
      %1941 = vmatprep.subr.bf16.mxu0 0
      %1942 = vmatpush1.bf16.msra.mxu0 0
      %1943 = vmatprep.subr.bf16.mxu0 0
      %1944 = vmatpush1.bf16.msra.mxu0 0
      %1945 = vmatprep.subr.bf16.mxu0 0
      %1946 = vmatpush1.bf16.msra.mxu0 0
      %1947 = vmatprep.subr.bf16.mxu0 0
      %1948 = vmatpush1.bf16.msra.mxu0 0
      %1949 = vmatprep.subr.bf16.mxu0 0
      %1950 = vmatpush1.bf16.msra.mxu0 0
      %1951 = vmatprep.mubr.bf16.mxu0 0
      %1952 = vmatmul.mubr.bf16.gmra.mrb[0].mxu0 %v335
      %v1953 = vpop.f32.mrb[0].mxu0
      %v1954 = vadd.f32 %v596, %v1953
      %v1955 = vpop.f32.mrb[0].mxu0
      %v1956 = vadd.f32 %v596, %v1955
      %v1957 = vpop.f32.mrb[0].mxu0
      %v1958 = vpop.f32.mrb[0].mxu0
      %1959 = vdwg.mxu0
      %1960 = vmatprep.subr.bf16.mxu0 %v1371
      %1961 = vmatpush1.bf16.msra.mxu0 %v1370
      %1962 = vmatprep.subr.bf16.mxu0 %v1403
      %1963 = vmatpush1.bf16.msra.mxu0 %v1402
      %1964 = vmatprep.subr.bf16.mxu0 %v1435
      %1965 = vmatpush1.bf16.msra.mxu0 %v1434
      %1966 = vmatprep.subr.bf16.mxu0 %v1467
      %1967 = vmatpush1.bf16.msra.mxu0 %v1466
      %1968 = vmatprep.subr.bf16.mxu0 %v1499
      %1969 = vmatpush1.bf16.msra.mxu0 %v1498
      %1970 = vmatprep.subr.bf16.mxu0 %v1531
      %1971 = vmatpush1.bf16.msra.mxu0 %v1530
      %1972 = vmatprep.subr.bf16.mxu0 %v1563
      %1973 = vmatpush1.bf16.msra.mxu0 %v1562
      %1974 = vmatprep.subr.bf16.mxu0 %v1595
      %1975 = vmatpush1.bf16.msra.mxu0 %v1594
      %1976 = vmatprep.subr.bf16.mxu0 0
      %1977 = vmatpush1.bf16.msra.mxu0 0
      %1978 = vmatprep.subr.bf16.mxu0 0
      %1979 = vmatpush1.bf16.msra.mxu0 0
      %1980 = vmatprep.subr.bf16.mxu0 0
      %1981 = vmatpush1.bf16.msra.mxu0 0
      %1982 = vmatprep.subr.bf16.mxu0 0
      %1983 = vmatpush1.bf16.msra.mxu0 0
      %1984 = vmatprep.subr.bf16.mxu0 0
      %1985 = vmatpush1.bf16.msra.mxu0 0
      %1986 = vmatprep.subr.bf16.mxu0 0
      %1987 = vmatpush1.bf16.msra.mxu0 0
      %1988 = vmatprep.subr.bf16.mxu0 0
      %1989 = vmatpush1.bf16.msra.mxu0 0
      %1990 = vmatprep.subr.bf16.mxu0 0
      %1991 = vmatpush1.bf16.msra.mxu0 0
      %1992 = vmatprep.mubr.bf16.mxu0 0
      %1993 = vmatmul.mubr.bf16.gmra.mrb[0].mxu0 %v335
      %v1994 = vpop.f32.mrb[0].mxu0
      %v1995 = vadd.f32 %v596, %v1994
      %v1996 = vpop.f32.mrb[0].mxu0
      %v1997 = vadd.f32 %v596, %v1996
      %v1998 = vpop.f32.mrb[0].mxu0
      %v1999 = vpop.f32.mrb[0].mxu0
      %2000 = vdwg.mxu0
      %2001 = vmatprep.subr.bf16.mxu0 %v1373
      %2002 = vmatpush1.bf16.msra.mxu0 %v1372
      %2003 = vmatprep.subr.bf16.mxu0 %v1405
      %2004 = vmatpush1.bf16.msra.mxu0 %v1404
      %2005 = vmatprep.subr.bf16.mxu0 %v1437
      %2006 = vmatpush1.bf16.msra.mxu0 %v1436
      %2007 = vmatprep.subr.bf16.mxu0 %v1469
      %2008 = vmatpush1.bf16.msra.mxu0 %v1468
      %2009 = vmatprep.subr.bf16.mxu0 %v1501
      %2010 = vmatpush1.bf16.msra.mxu0 %v1500
      %2011 = vmatprep.subr.bf16.mxu0 %v1533
      %2012 = vmatpush1.bf16.msra.mxu0 %v1532
      %2013 = vmatprep.subr.bf16.mxu0 %v1565
      %2014 = vmatpush1.bf16.msra.mxu0 %v1564
      %2015 = vmatprep.subr.bf16.mxu0 %v1597
      %2016 = vmatpush1.bf16.msra.mxu0 %v1596
      %2017 = vmatprep.subr.bf16.mxu0 0
      %2018 = vmatpush1.bf16.msra.mxu0 0
      %2019 = vmatprep.subr.bf16.mxu0 0
      %2020 = vmatpush1.bf16.msra.mxu0 0
      %2021 = vmatprep.subr.bf16.mxu0 0
      %2022 = vmatpush1.bf16.msra.mxu0 0
      %2023 = vmatprep.subr.bf16.mxu0 0
      %2024 = vmatpush1.bf16.msra.mxu0 0
      %2025 = vmatprep.subr.bf16.mxu0 0
      %2026 = vmatpush1.bf16.msra.mxu0 0
      %2027 = vmatprep.subr.bf16.mxu0 0
      %2028 = vmatpush1.bf16.msra.mxu0 0
      %2029 = vmatprep.subr.bf16.mxu0 0
      %2030 = vmatpush1.bf16.msra.mxu0 0
      %2031 = vmatprep.subr.bf16.mxu0 0
      %2032 = vmatpush1.bf16.msra.mxu0 0
      %2033 = vmatprep.mubr.bf16.mxu0 0
      %2034 = vmatmul.mubr.bf16.gmra.mrb[0].mxu0 %v335
      %v2035 = vpop.f32.mrb[0].mxu0
      %v2036 = vadd.f32 %v596, %v2035
      %v2037 = vpop.f32.mrb[0].mxu0
      %v2038 = vadd.f32 %v596, %v2037
      %v2039 = vpop.f32.mrb[0].mxu0
      %v2040 = vpop.f32.mrb[0].mxu0
      %2041 = vdwg.mxu0
      %2042 = vmatprep.subr.bf16.mxu0 %v1375
      %2043 = vmatpush1.bf16.msra.mxu0 %v1374
      %2044 = vmatprep.subr.bf16.mxu0 %v1407
      %2045 = vmatpush1.bf16.msra.mxu0 %v1406
      %2046 = vmatprep.subr.bf16.mxu0 %v1439
      %2047 = vmatpush1.bf16.msra.mxu0 %v1438
      %2048 = vmatprep.subr.bf16.mxu0 %v1471
      %2049 = vmatpush1.bf16.msra.mxu0 %v1470
      %2050 = vmatprep.subr.bf16.mxu0 %v1503
      %2051 = vmatpush1.bf16.msra.mxu0 %v1502
      %2052 = vmatprep.subr.bf16.mxu0 %v1535
      %2053 = vmatpush1.bf16.msra.mxu0 %v1534
      %2054 = vmatprep.subr.bf16.mxu0 %v1567
      %2055 = vmatpush1.bf16.msra.mxu0 %v1566
      %2056 = vmatprep.subr.bf16.mxu0 %v1599
      %2057 = vmatpush1.bf16.msra.mxu0 %v1598
      %2058 = vmatprep.subr.bf16.mxu0 0
      %2059 = vmatpush1.bf16.msra.mxu0 0
      %2060 = vmatprep.subr.bf16.mxu0 0
      %2061 = vmatpush1.bf16.msra.mxu0 0
      %2062 = vmatprep.subr.bf16.mxu0 0
      %2063 = vmatpush1.bf16.msra.mxu0 0
      %2064 = vmatprep.subr.bf16.mxu0 0
      %2065 = vmatpush1.bf16.msra.mxu0 0
      %2066 = vmatprep.subr.bf16.mxu0 0
      %2067 = vmatpush1.bf16.msra.mxu0 0
      %2068 = vmatprep.subr.bf16.mxu0 0
      %2069 = vmatpush1.bf16.msra.mxu0 0
      %2070 = vmatprep.subr.bf16.mxu0 0
      %2071 = vmatpush1.bf16.msra.mxu0 0
      %2072 = vmatprep.subr.bf16.mxu0 0
      %2073 = vmatpush1.bf16.msra.mxu0 0
      %2074 = vmatprep.mubr.bf16.mxu0 0
      %2075 = vmatmul.mubr.bf16.gmra.mrb[0].mxu0 %v335
      %v2076 = vpop.f32.mrb[0].mxu0
      %v2077 = vadd.f32 %v596, %v2076
      %v2078 = vpop.f32.mrb[0].mxu0
      %v2079 = vadd.f32 %v596, %v2078
      %v2080 = vpop.f32.mrb[0].mxu0
      %v2081 = vpop.f32.mrb[0].mxu0
      %2082 = vdwg.mxu0
      %2083 = vmatprep.subr.bf16.mxu0 %v1377
      %2084 = vmatpush1.bf16.msra.mxu0 %v1376
      %2085 = vmatprep.subr.bf16.mxu0 %v1409
      %2086 = vmatpush1.bf16.msra.mxu0 %v1408
      %2087 = vmatprep.subr.bf16.mxu0 %v1441
      %2088 = vmatpush1.bf16.msra.mxu0 %v1440
      %2089 = vmatprep.subr.bf16.mxu0 %v1473
      %2090 = vmatpush1.bf16.msra.mxu0 %v1472
      %2091 = vmatprep.subr.bf16.mxu0 %v1505
      %2092 = vmatpush1.bf16.msra.mxu0 %v1504
      %2093 = vmatprep.subr.bf16.mxu0 %v1537
      %2094 = vmatpush1.bf16.msra.mxu0 %v1536
      %2095 = vmatprep.subr.bf16.mxu0 %v1569
      %2096 = vmatpush1.bf16.msra.mxu0 %v1568
      %2097 = vmatprep.subr.bf16.mxu0 %v1601
      %2098 = vmatpush1.bf16.msra.mxu0 %v1600
      %2099 = vmatprep.subr.bf16.mxu0 0
      %2100 = vmatpush1.bf16.msra.mxu0 0
      %2101 = vmatprep.subr.bf16.mxu0 0
      %2102 = vmatpush1.bf16.msra.mxu0 0
      %2103 = vmatprep.subr.bf16.mxu0 0
      %2104 = vmatpush1.bf16.msra.mxu0 0
      %2105 = vmatprep.subr.bf16.mxu0 0
      %2106 = vmatpush1.bf16.msra.mxu0 0
      %2107 = vmatprep.subr.bf16.mxu0 0
      %2108 = vmatpush1.bf16.msra.mxu0 0
      %2109 = vmatprep.subr.bf16.mxu0 0
      %2110 = vmatpush1.bf16.msra.mxu0 0
      %2111 = vmatprep.subr.bf16.mxu0 0
      %2112 = vmatpush1.bf16.msra.mxu0 0
      %2113 = vmatprep.subr.bf16.mxu0 0
      %2114 = vmatpush1.bf16.msra.mxu0 0
      %2115 = vmatprep.mubr.bf16.mxu0 0
      %2116 = vmatmul.mubr.bf16.gmra.mrb[0].mxu0 %v335
      %v2117 = vpop.f32.mrb[0].mxu0
      %v2118 = vadd.f32 %v596, %v2117
      %v2119 = vpop.f32.mrb[0].mxu0
      %v2120 = vadd.f32 %v596, %v2119
      %v2121 = vpop.f32.mrb[0].mxu0
      %v2122 = vpop.f32.mrb[0].mxu0
      %2123 = vdwg.mxu0
      %2124 = vmatprep.subr.bf16.mxu0 %v1379
      %2125 = vmatpush1.bf16.msra.mxu0 %v1378
      %2126 = vmatprep.subr.bf16.mxu0 %v1411
      %2127 = vmatpush1.bf16.msra.mxu0 %v1410
      %2128 = vmatprep.subr.bf16.mxu0 %v1443
      %2129 = vmatpush1.bf16.msra.mxu0 %v1442
      %2130 = vmatprep.subr.bf16.mxu0 %v1475
      %2131 = vmatpush1.bf16.msra.mxu0 %v1474
      %2132 = vmatprep.subr.bf16.mxu0 %v1507
      %2133 = vmatpush1.bf16.msra.mxu0 %v1506
      %2134 = vmatprep.subr.bf16.mxu0 %v1539
      %2135 = vmatpush1.bf16.msra.mxu0 %v1538
      %2136 = vmatprep.subr.bf16.mxu0 %v1571
      %2137 = vmatpush1.bf16.msra.mxu0 %v1570
      %2138 = vmatprep.subr.bf16.mxu0 %v1603
      %2139 = vmatpush1.bf16.msra.mxu0 %v1602
      %2140 = vmatprep.subr.bf16.mxu0 0
      %2141 = vmatpush1.bf16.msra.mxu0 0
      %2142 = vmatprep.subr.bf16.mxu0 0
      %2143 = vmatpush1.bf16.msra.mxu0 0
      %2144 = vmatprep.subr.bf16.mxu0 0
      %2145 = vmatpush1.bf16.msra.mxu0 0
      %2146 = vmatprep.subr.bf16.mxu0 0
      %2147 = vmatpush1.bf16.msra.mxu0 0
      %2148 = vmatprep.subr.bf16.mxu0 0
      %2149 = vmatpush1.bf16.msra.mxu0 0
      %2150 = vmatprep.subr.bf16.mxu0 0
      %2151 = vmatpush1.bf16.msra.mxu0 0
      %2152 = vmatprep.subr.bf16.mxu0 0
      %2153 = vmatpush1.bf16.msra.mxu0 0
      %2154 = vmatprep.subr.bf16.mxu0 0
      %2155 = vmatpush1.bf16.msra.mxu0 0
      %2156 = vmatprep.mubr.bf16.mxu0 0
      %2157 = vmatmul.mubr.bf16.gmra.mrb[0].mxu0 %v335
      %v2158 = vpop.f32.mrb[0].mxu0
      %v2159 = vadd.f32 %v596, %v2158
      %v2160 = vpop.f32.mrb[0].mxu0
      %v2161 = vadd.f32 %v596, %v2160
      %v2162 = vpop.f32.mrb[0].mxu0
      %v2163 = vpop.f32.mrb[0].mxu0
      %2164 = vdwg.mxu0
      %2165 = vmatprep.subr.bf16.mxu0 %v1381
      %2166 = vmatpush1.bf16.msra.mxu0 %v1380
      %2167 = vmatprep.subr.bf16.mxu0 %v1413
      %2168 = vmatpush1.bf16.msra.mxu0 %v1412
      %2169 = vmatprep.subr.bf16.mxu0 %v1445
      %2170 = vmatpush1.bf16.msra.mxu0 %v1444
      %2171 = vmatprep.subr.bf16.mxu0 %v1477
      %2172 = vmatpush1.bf16.msra.mxu0 %v1476
      %2173 = vmatprep.subr.bf16.mxu0 %v1509
      %2174 = vmatpush1.bf16.msra.mxu0 %v1508
      %2175 = vmatprep.subr.bf16.mxu0 %v1541
      %2176 = vmatpush1.bf16.msra.mxu0 %v1540
      %2177 = vmatprep.subr.bf16.mxu0 %v1573
      %2178 = vmatpush1.bf16.msra.mxu0 %v1572
      %2179 = vmatprep.subr.bf16.mxu0 %v1605
      %2180 = vmatpush1.bf16.msra.mxu0 %v1604
      %2181 = vmatprep.subr.bf16.mxu0 0
      %2182 = vmatpush1.bf16.msra.mxu0 0
      %2183 = vmatprep.subr.bf16.mxu0 0
      %2184 = vmatpush1.bf16.msra.mxu0 0
      %2185 = vmatprep.subr.bf16.mxu0 0
      %2186 = vmatpush1.bf16.msra.mxu0 0
      %2187 = vmatprep.subr.bf16.mxu0 0
      %2188 = vmatpush1.bf16.msra.mxu0 0
      %2189 = vmatprep.subr.bf16.mxu0 0
      %2190 = vmatpush1.bf16.msra.mxu0 0
      %2191 = vmatprep.subr.bf16.mxu0 0
      %2192 = vmatpush1.bf16.msra.mxu0 0
      %2193 = vmatprep.subr.bf16.mxu0 0
      %2194 = vmatpush1.bf16.msra.mxu0 0
      %2195 = vmatprep.subr.bf16.mxu0 0
      %2196 = vmatpush1.bf16.msra.mxu0 0
      %2197 = vmatprep.mubr.bf16.mxu0 0
      %2198 = vmatmul.mubr.bf16.gmra.mrb[0].mxu0 %v335
      %v2199 = vpop.f32.mrb[0].mxu0
      %v2200 = vadd.f32 %v596, %v2199
      %v2201 = vpop.f32.mrb[0].mxu0
      %v2202 = vadd.f32 %v596, %v2201
      %v2203 = vpop.f32.mrb[0].mxu0
      %v2204 = vpop.f32.mrb[0].mxu0
      %2205 = vdwg.mxu0
      %2206 = vmatprep.subr.bf16.mxu0 %v1383
      %2207 = vmatpush1.bf16.msra.mxu0 %v1382
      %2208 = vmatprep.subr.bf16.mxu0 %v1415
      %2209 = vmatpush1.bf16.msra.mxu0 %v1414
      %2210 = vmatprep.subr.bf16.mxu0 %v1447
      %2211 = vmatpush1.bf16.msra.mxu0 %v1446
      %2212 = vmatprep.subr.bf16.mxu0 %v1479
      %2213 = vmatpush1.bf16.msra.mxu0 %v1478
      %2214 = vmatprep.subr.bf16.mxu0 %v1511
      %2215 = vmatpush1.bf16.msra.mxu0 %v1510
      %2216 = vmatprep.subr.bf16.mxu0 %v1543
      %2217 = vmatpush1.bf16.msra.mxu0 %v1542
      %2218 = vmatprep.subr.bf16.mxu0 %v1575
      %2219 = vmatpush1.bf16.msra.mxu0 %v1574
      %2220 = vmatprep.subr.bf16.mxu0 %v1607
      %2221 = vmatpush1.bf16.msra.mxu0 %v1606
      %2222 = vmatprep.subr.bf16.mxu0 0
      %2223 = vmatpush1.bf16.msra.mxu0 0
      %2224 = vmatprep.subr.bf16.mxu0 0
      %2225 = vmatpush1.bf16.msra.mxu0 0
      %2226 = vmatprep.subr.bf16.mxu0 0
      %2227 = vmatpush1.bf16.msra.mxu0 0
      %2228 = vmatprep.subr.bf16.mxu0 0
      %2229 = vmatpush1.bf16.msra.mxu0 0
      %2230 = vmatprep.subr.bf16.mxu0 0
      %2231 = vmatpush1.bf16.msra.mxu0 0
      %2232 = vmatprep.subr.bf16.mxu0 0
      %2233 = vmatpush1.bf16.msra.mxu0 0
      %2234 = vmatprep.subr.bf16.mxu0 0
      %2235 = vmatpush1.bf16.msra.mxu0 0
      %2236 = vmatprep.subr.bf16.mxu0 0
      %2237 = vmatpush1.bf16.msra.mxu0 0
      %2238 = vmatprep.mubr.bf16.mxu0 0
      %2239 = vmatmul.mubr.bf16.gmra.mrb[0].mxu0 %v335
      %v2240 = vpop.f32.mrb[0].mxu0
      %v2241 = vadd.f32 %v596, %v2240
      %v2242 = vpop.f32.mrb[0].mxu0
      %v2243 = vadd.f32 %v596, %v2242
      %v2244 = vpop.f32.mrb[0].mxu0
      %v2245 = vpop.f32.mrb[0].mxu0
      %2246 = vdwg.mxu0
      %2247 = vmatprep.subr.bf16.mxu0 %v1385
      %2248 = vmatpush1.bf16.msra.mxu0 %v1384
      %2249 = vmatprep.subr.bf16.mxu0 %v1417
      %2250 = vmatpush1.bf16.msra.mxu0 %v1416
      %2251 = vmatprep.subr.bf16.mxu0 %v1449
      %2252 = vmatpush1.bf16.msra.mxu0 %v1448
      %2253 = vmatprep.subr.bf16.mxu0 %v1481
      %2254 = vmatpush1.bf16.msra.mxu0 %v1480
      %2255 = vmatprep.subr.bf16.mxu0 %v1513
      %2256 = vmatpush1.bf16.msra.mxu0 %v1512
      %2257 = vmatprep.subr.bf16.mxu0 %v1545
      %2258 = vmatpush1.bf16.msra.mxu0 %v1544
      %2259 = vmatprep.subr.bf16.mxu0 %v1577
      %2260 = vmatpush1.bf16.msra.mxu0 %v1576
      %2261 = vmatprep.subr.bf16.mxu0 %v1609
      %2262 = vmatpush1.bf16.msra.mxu0 %v1608
      %2263 = vmatprep.subr.bf16.mxu0 0
      %2264 = vmatpush1.bf16.msra.mxu0 0
      %2265 = vmatprep.subr.bf16.mxu0 0
      %2266 = vmatpush1.bf16.msra.mxu0 0
      %2267 = vmatprep.subr.bf16.mxu0 0
      %2268 = vmatpush1.bf16.msra.mxu0 0
      %2269 = vmatprep.subr.bf16.mxu0 0
      %2270 = vmatpush1.bf16.msra.mxu0 0
      %2271 = vmatprep.subr.bf16.mxu0 0
      %2272 = vmatpush1.bf16.msra.mxu0 0
      %2273 = vmatprep.subr.bf16.mxu0 0
      %2274 = vmatpush1.bf16.msra.mxu0 0
      %2275 = vmatprep.subr.bf16.mxu0 0
      %2276 = vmatpush1.bf16.msra.mxu0 0
      %2277 = vmatprep.subr.bf16.mxu0 0
      %2278 = vmatpush1.bf16.msra.mxu0 0
      %2279 = vmatprep.mubr.bf16.mxu0 0
      %2280 = vmatmul.mubr.bf16.gmra.mrb[0].mxu0 %v335
      %v2281 = vpop.f32.mrb[0].mxu0
      %v2282 = vadd.f32 %v596, %v2281
      %v2283 = vpop.f32.mrb[0].mxu0
      %v2284 = vadd.f32 %v596, %v2283
      %v2285 = vpop.f32.mrb[0].mxu0
      %v2286 = vpop.f32.mrb[0].mxu0
      %2287 = vdwg.mxu0
      %2288 = vmatprep.subr.bf16.mxu0 %v1387
      %2289 = vmatpush1.bf16.msra.mxu0 %v1386
      %2290 = vmatprep.subr.bf16.mxu0 %v1419
      %2291 = vmatpush1.bf16.msra.mxu0 %v1418
      %2292 = vmatprep.subr.bf16.mxu0 %v1451
      %2293 = vmatpush1.bf16.msra.mxu0 %v1450
      %2294 = vmatprep.subr.bf16.mxu0 %v1483
      %2295 = vmatpush1.bf16.msra.mxu0 %v1482
      %2296 = vmatprep.subr.bf16.mxu0 %v1515
      %2297 = vmatpush1.bf16.msra.mxu0 %v1514
      %2298 = vmatprep.subr.bf16.mxu0 %v1547
      %2299 = vmatpush1.bf16.msra.mxu0 %v1546
      %2300 = vmatprep.subr.bf16.mxu0 %v1579
      %2301 = vmatpush1.bf16.msra.mxu0 %v1578
      %2302 = vmatprep.subr.bf16.mxu0 %v1611
      %2303 = vmatpush1.bf16.msra.mxu0 %v1610
      %2304 = vmatprep.subr.bf16.mxu0 0
      %2305 = vmatpush1.bf16.msra.mxu0 0
      %2306 = vmatprep.subr.bf16.mxu0 0
      %2307 = vmatpush1.bf16.msra.mxu0 0
      %2308 = vmatprep.subr.bf16.mxu0 0
      %2309 = vmatpush1.bf16.msra.mxu0 0
      %2310 = vmatprep.subr.bf16.mxu0 0
      %2311 = vmatpush1.bf16.msra.mxu0 0
      %2312 = vmatprep.subr.bf16.mxu0 0
      %2313 = vmatpush1.bf16.msra.mxu0 0
      %2314 = vmatprep.subr.bf16.mxu0 0
      %2315 = vmatpush1.bf16.msra.mxu0 0
      %2316 = vmatprep.subr.bf16.mxu0 0
      %2317 = vmatpush1.bf16.msra.mxu0 0
      %2318 = vmatprep.subr.bf16.mxu0 0
      %2319 = vmatpush1.bf16.msra.mxu0 0
      %2320 = vmatprep.mubr.bf16.mxu0 0
      %2321 = vmatmul.mubr.bf16.gmra.mrb[0].mxu0 %v335
      %v2322 = vpop.f32.mrb[0].mxu0
      %v2323 = vadd.f32 %v596, %v2322
      %v2324 = vpop.f32.mrb[0].mxu0
      %v2325 = vadd.f32 %v596, %v2324
      %v2326 = vpop.f32.mrb[0].mxu0
      %v2327 = vpop.f32.mrb[0].mxu0
      %2328 = vdwg.mxu0
      %2329 = vmatprep.subr.bf16.mxu0 %v1389
      %2330 = vmatpush1.bf16.msra.mxu0 %v1388
      %2331 = vmatprep.subr.bf16.mxu0 %v1421
      %2332 = vmatpush1.bf16.msra.mxu0 %v1420
      %2333 = vmatprep.subr.bf16.mxu0 %v1453
      %2334 = vmatpush1.bf16.msra.mxu0 %v1452
      %2335 = vmatprep.subr.bf16.mxu0 %v1485
      %2336 = vmatpush1.bf16.msra.mxu0 %v1484
      %2337 = vmatprep.subr.bf16.mxu0 %v1517
      %2338 = vmatpush1.bf16.msra.mxu0 %v1516
      %2339 = vmatprep.subr.bf16.mxu0 %v1549
      %2340 = vmatpush1.bf16.msra.mxu0 %v1548
      %2341 = vmatprep.subr.bf16.mxu0 %v1581
      %2342 = vmatpush1.bf16.msra.mxu0 %v1580
      %2343 = vmatprep.subr.bf16.mxu0 %v1613
      %2344 = vmatpush1.bf16.msra.mxu0 %v1612
      %2345 = vmatprep.subr.bf16.mxu0 0
      %2346 = vmatpush1.bf16.msra.mxu0 0
      %2347 = vmatprep.subr.bf16.mxu0 0
      %2348 = vmatpush1.bf16.msra.mxu0 0
      %2349 = vmatprep.subr.bf16.mxu0 0
      %2350 = vmatpush1.bf16.msra.mxu0 0
      %2351 = vmatprep.subr.bf16.mxu0 0
      %2352 = vmatpush1.bf16.msra.mxu0 0
      %2353 = vmatprep.subr.bf16.mxu0 0
      %2354 = vmatpush1.bf16.msra.mxu0 0
      %2355 = vmatprep.subr.bf16.mxu0 0
      %2356 = vmatpush1.bf16.msra.mxu0 0
      %2357 = vmatprep.subr.bf16.mxu0 0
      %2358 = vmatpush1.bf16.msra.mxu0 0
      %2359 = vmatprep.subr.bf16.mxu0 0
      %2360 = vmatpush1.bf16.msra.mxu0 0
      %2361 = vmatprep.mubr.bf16.mxu0 0
      %2362 = vmatmul.mubr.bf16.gmra.mrb[0].mxu0 %v335
      %v2363 = vpop.f32.mrb[0].mxu0
      %v2364 = vadd.f32 %v596, %v2363
      %v2365 = vpop.f32.mrb[0].mxu0
      %v2366 = vadd.f32 %v596, %v2365
      %v2367 = vpop.f32.mrb[0].mxu0
      %v2368 = vpop.f32.mrb[0].mxu0
      %2369 = vdwg.mxu0
      %2370 = vmatprep.subr.bf16.mxu0 %v1391
      %2371 = vmatpush1.bf16.msra.mxu0 %v1390
      %2372 = vmatprep.subr.bf16.mxu0 %v1423
      %2373 = vmatpush1.bf16.msra.mxu0 %v1422
      %2374 = vmatprep.subr.bf16.mxu0 %v1455
      %2375 = vmatpush1.bf16.msra.mxu0 %v1454
      %2376 = vmatprep.subr.bf16.mxu0 %v1487
      %2377 = vmatpush1.bf16.msra.mxu0 %v1486
      %2378 = vmatprep.subr.bf16.mxu0 %v1519
      %2379 = vmatpush1.bf16.msra.mxu0 %v1518
      %2380 = vmatprep.subr.bf16.mxu0 %v1551
      %2381 = vmatpush1.bf16.msra.mxu0 %v1550
      %2382 = vmatprep.subr.bf16.mxu0 %v1583
      %2383 = vmatpush1.bf16.msra.mxu0 %v1582
      %2384 = vmatprep.subr.bf16.mxu0 %v1615
      %2385 = vmatpush1.bf16.msra.mxu0 %v1614
      %2386 = vmatprep.subr.bf16.mxu0 0
      %2387 = vmatpush1.bf16.msra.mxu0 0
      %2388 = vmatprep.subr.bf16.mxu0 0
      %2389 = vmatpush1.bf16.msra.mxu0 0
      %2390 = vmatprep.subr.bf16.mxu0 0
      %2391 = vmatpush1.bf16.msra.mxu0 0
      %2392 = vmatprep.subr.bf16.mxu0 0
      %2393 = vmatpush1.bf16.msra.mxu0 0
      %2394 = vmatprep.subr.bf16.mxu0 0
      %2395 = vmatpush1.bf16.msra.mxu0 0
      %2396 = vmatprep.subr.bf16.mxu0 0
      %2397 = vmatpush1.bf16.msra.mxu0 0
      %2398 = vmatprep.subr.bf16.mxu0 0
      %2399 = vmatpush1.bf16.msra.mxu0 0
      %2400 = vmatprep.subr.bf16.mxu0 0
      %2401 = vmatpush1.bf16.msra.mxu0 0
      %2402 = vmatprep.mubr.bf16.mxu0 0
      %2403 = vmatmul.mubr.bf16.gmra.mrb[0].mxu0 %v335
      %v2404 = vpop.f32.mrb[0].mxu0
      %v2405 = vadd.f32 %v596, %v2404
      %v2406 = vpop.f32.mrb[0].mxu0
      %v2407 = vadd.f32 %v596, %v2406
      %v2408 = vpop.f32.mrb[0].mxu0
      %v2409 = vpop.f32.mrb[0].mxu0
      %2410 = vdwg.mxu0
      %2411 = vmatprep.subr.bf16.mxu0 %v1393
      %2412 = vmatpush1.bf16.msra.mxu0 %v1392
      %2413 = vmatprep.subr.bf16.mxu0 %v1425
      %2414 = vmatpush1.bf16.msra.mxu0 %v1424
      %2415 = vmatprep.subr.bf16.mxu0 %v1457
      %2416 = vmatpush1.bf16.msra.mxu0 %v1456
      %2417 = vmatprep.subr.bf16.mxu0 %v1489
      %2418 = vmatpush1.bf16.msra.mxu0 %v1488
      %2419 = vmatprep.subr.bf16.mxu0 %v1521
      %2420 = vmatpush1.bf16.msra.mxu0 %v1520
      %2421 = vmatprep.subr.bf16.mxu0 %v1553
      %2422 = vmatpush1.bf16.msra.mxu0 %v1552
      %2423 = vmatprep.subr.bf16.mxu0 %v1585
      %2424 = vmatpush1.bf16.msra.mxu0 %v1584
      %2425 = vmatprep.subr.bf16.mxu0 %v1617
      %2426 = vmatpush1.bf16.msra.mxu0 %v1616
      %2427 = vmatprep.subr.bf16.mxu0 0
      %2428 = vmatpush1.bf16.msra.mxu0 0
      %2429 = vmatprep.subr.bf16.mxu0 0
      %2430 = vmatpush1.bf16.msra.mxu0 0
      %2431 = vmatprep.subr.bf16.mxu0 0
      %2432 = vmatpush1.bf16.msra.mxu0 0
      %2433 = vmatprep.subr.bf16.mxu0 0
      %2434 = vmatpush1.bf16.msra.mxu0 0
      %2435 = vmatprep.subr.bf16.mxu0 0
      %2436 = vmatpush1.bf16.msra.mxu0 0
      %2437 = vmatprep.subr.bf16.mxu0 0
      %2438 = vmatpush1.bf16.msra.mxu0 0
      %2439 = vmatprep.subr.bf16.mxu0 0
      %2440 = vmatpush1.bf16.msra.mxu0 0
      %2441 = vmatprep.subr.bf16.mxu0 0
      %2442 = vmatpush1.bf16.msra.mxu0 0
      %2443 = vmatprep.mubr.bf16.mxu0 0
      %2444 = vmatmul.mubr.bf16.gmra.mrb[0].mxu0 %v335
      %v2445 = vpop.f32.mrb[0].mxu0
      %v2446 = vadd.f32 %v596, %v2445
      %v2447 = vpop.f32.mrb[0].mxu0
      %v2448 = vadd.f32 %v596, %v2447
      %v2449 = vpop.f32.mrb[0].mxu0
      %v2450 = vpop.f32.mrb[0].mxu0
      %2451 = vdwg.mxu0
      %2452 = vmatprep.subr.bf16.mxu0 %v1395
      %2453 = vmatpush1.bf16.msra.mxu0 %v1394
      %2454 = vmatprep.subr.bf16.mxu0 %v1427
      %2455 = vmatpush1.bf16.msra.mxu0 %v1426
      %2456 = vmatprep.subr.bf16.mxu0 %v1459
      %2457 = vmatpush1.bf16.msra.mxu0 %v1458
      %2458 = vmatprep.subr.bf16.mxu0 %v1491
      %2459 = vmatpush1.bf16.msra.mxu0 %v1490
      %2460 = vmatprep.subr.bf16.mxu0 %v1523
      %2461 = vmatpush1.bf16.msra.mxu0 %v1522
      %2462 = vmatprep.subr.bf16.mxu0 %v1555
      %2463 = vmatpush1.bf16.msra.mxu0 %v1554
      %2464 = vmatprep.subr.bf16.mxu0 %v1587
      %2465 = vmatpush1.bf16.msra.mxu0 %v1586
      %2466 = vmatprep.subr.bf16.mxu0 %v1619
      %2467 = vmatpush1.bf16.msra.mxu0 %v1618
      %2468 = vmatprep.subr.bf16.mxu0 0
      %2469 = vmatpush1.bf16.msra.mxu0 0
      %2470 = vmatprep.subr.bf16.mxu0 0
      %2471 = vmatpush1.bf16.msra.mxu0 0
      %2472 = vmatprep.subr.bf16.mxu0 0
      %2473 = vmatpush1.bf16.msra.mxu0 0
      %2474 = vmatprep.subr.bf16.mxu0 0
      %2475 = vmatpush1.bf16.msra.mxu0 0
      %2476 = vmatprep.subr.bf16.mxu0 0
      %2477 = vmatpush1.bf16.msra.mxu0 0
      %2478 = vmatprep.subr.bf16.mxu0 0
      %2479 = vmatpush1.bf16.msra.mxu0 0
      %2480 = vmatprep.subr.bf16.mxu0 0
      %2481 = vmatpush1.bf16.msra.mxu0 0
      %2482 = vmatprep.subr.bf16.mxu0 0
      %2483 = vmatpush1.bf16.msra.mxu0 0
      %2484 = vmatprep.mubr.bf16.mxu0 0
      %2485 = vmatmul.mubr.bf16.gmra.mrb[0].mxu0 %v335
      %v2486 = vpop.f32.mrb[0].mxu0
      %v2487 = vadd.f32 %v596, %v2486
      %v2488 = vpop.f32.mrb[0].mxu0
      %v2489 = vadd.f32 %v596, %v2488
      %v2490 = vpop.f32.mrb[0].mxu0
      %v2491 = vpop.f32.mrb[0].mxu0
      %2492 = vdwg.mxu0
      %2493 = vmatprep.subr.bf16.mxu0 %v1397
      %2494 = vmatpush1.bf16.msra.mxu0 %v1396
      %2495 = vmatprep.subr.bf16.mxu0 %v1429
      %2496 = vmatpush1.bf16.msra.mxu0 %v1428
      %2497 = vmatprep.subr.bf16.mxu0 %v1461
      %2498 = vmatpush1.bf16.msra.mxu0 %v1460
      %2499 = vmatprep.subr.bf16.mxu0 %v1493
      %2500 = vmatpush1.bf16.msra.mxu0 %v1492
      %2501 = vmatprep.subr.bf16.mxu0 %v1525
      %2502 = vmatpush1.bf16.msra.mxu0 %v1524
      %2503 = vmatprep.subr.bf16.mxu0 %v1557
      %2504 = vmatpush1.bf16.msra.mxu0 %v1556
      %2505 = vmatprep.subr.bf16.mxu0 %v1589
      %2506 = vmatpush1.bf16.msra.mxu0 %v1588
      %2507 = vmatprep.subr.bf16.mxu0 %v1621
      %2508 = vmatpush1.bf16.msra.mxu0 %v1620
      %2509 = vmatprep.subr.bf16.mxu0 0
      %2510 = vmatpush1.bf16.msra.mxu0 0
      %2511 = vmatprep.subr.bf16.mxu0 0
      %2512 = vmatpush1.bf16.msra.mxu0 0
      %2513 = vmatprep.subr.bf16.mxu0 0
      %2514 = vmatpush1.bf16.msra.mxu0 0
      %2515 = vmatprep.subr.bf16.mxu0 0
      %2516 = vmatpush1.bf16.msra.mxu0 0
      %2517 = vmatprep.subr.bf16.mxu0 0
      %2518 = vmatpush1.bf16.msra.mxu0 0
      %2519 = vmatprep.subr.bf16.mxu0 0
      %2520 = vmatpush1.bf16.msra.mxu0 0
      %2521 = vmatprep.subr.bf16.mxu0 0
      %2522 = vmatpush1.bf16.msra.mxu0 0
      %2523 = vmatprep.subr.bf16.mxu0 0
      %2524 = vmatpush1.bf16.msra.mxu0 0
      %2525 = vmatprep.mubr.bf16.mxu0 0
      %2526 = vmatmul.mubr.bf16.gmra.mrb[0].mxu0 %v335
      %v2527 = vpop.f32.mrb[0].mxu0
      %v2528 = vadd.f32 %v596, %v2527
      %v2529 = vpop.f32.mrb[0].mxu0
      %v2530 = vadd.f32 %v596, %v2529
      %v2531 = vpop.f32.mrb[0].mxu0
      %v2532 = vpop.f32.mrb[0].mxu0
      %2533 = vdwg.mxu0
      %vm2534 = vcmp.gt.f32.partialorder %v1913, 0.0
      %vm2535 = vcmp.gt.f32.partialorder %v1915, 0.0
      %vm2536 = vcmp.gt.f32.partialorder %v1954, 0.0
      %vm2537 = vcmp.gt.f32.partialorder %v1956, 0.0
      %vm2538 = vcmp.gt.f32.partialorder %v1995, 0.0
      %vm2539 = vcmp.gt.f32.partialorder %v1997, 0.0
      %vm2540 = vcmp.gt.f32.partialorder %v2036, 0.0
      %vm2541 = vcmp.gt.f32.partialorder %v2038, 0.0
      %vm2542 = vcmp.gt.f32.partialorder %v2077, 0.0
      %vm2543 = vcmp.gt.f32.partialorder %v2079, 0.0
      %vm2544 = vcmp.gt.f32.partialorder %v2118, 0.0
      %vm2545 = vcmp.gt.f32.partialorder %v2120, 0.0
      %vm2546 = vcmp.gt.f32.partialorder %v2159, 0.0
      %vm2547 = vcmp.gt.f32.partialorder %v2161, 0.0
      %vm2548 = vcmp.gt.f32.partialorder %v2200, 0.0
      %vm2549 = vcmp.gt.f32.partialorder %v2202, 0.0
      %vm2550 = vcmp.gt.f32.partialorder %v2241, 0.0
      %vm2551 = vcmp.gt.f32.partialorder %v2243, 0.0
      %vm2552 = vcmp.gt.f32.partialorder %v2282, 0.0
      %vm2553 = vcmp.gt.f32.partialorder %v2284, 0.0
      %vm2554 = vcmp.gt.f32.partialorder %v2323, 0.0
      %vm2555 = vcmp.gt.f32.partialorder %v2325, 0.0
      %vm2556 = vcmp.gt.f32.partialorder %v2364, 0.0
      %vm2557 = vcmp.gt.f32.partialorder %v2366, 0.0
      %vm2558 = vcmp.gt.f32.partialorder %v2405, 0.0
      %vm2559 = vcmp.gt.f32.partialorder %v2407, 0.0
      %vm2560 = vcmp.gt.f32.partialorder %v2446, 0.0
      %vm2561 = vcmp.gt.f32.partialorder %v2448, 0.0
      %vm2562 = vcmp.gt.f32.partialorder %v2487, 0.0
      %vm2563 = vcmp.gt.f32.partialorder %v2489, 0.0
      %vm2564 = vcmp.gt.f32.partialorder %v2528, 0.0
      %vm2565 = vcmp.gt.f32.partialorder %v2530, 0.0
      %v2566 = vmul.f32 %v1913, 0.2
      %v2567 = vmul.f32 %v1915, 0.2
      %v2568 = vmul.f32 %v1954, 0.2
      %v2569 = vmul.f32 %v1956, 0.2
      %v2570 = vmul.f32 %v1995, 0.2
      %v2571 = vmul.f32 %v1997, 0.2
      %v2572 = vmul.f32 %v2036, 0.2
      %v2573 = vmul.f32 %v2038, 0.2
      %v2574 = vmul.f32 %v2077, 0.2
      %v2575 = vmul.f32 %v2079, 0.2
      %v2576 = vmul.f32 %v2118, 0.2
      %v2577 = vmul.f32 %v2120, 0.2
      %v2578 = vmul.f32 %v2159, 0.2
      %v2579 = vmul.f32 %v2161, 0.2
      %v2580 = vmul.f32 %v2200, 0.2
      %v2581 = vmul.f32 %v2202, 0.2
      %v2582 = vmul.f32 %v2241, 0.2
      %v2583 = vmul.f32 %v2243, 0.2
      %v2584 = vmul.f32 %v2282, 0.2
      %v2585 = vmul.f32 %v2284, 0.2
      %v2586 = vmul.f32 %v2323, 0.2
      %v2587 = vmul.f32 %v2325, 0.2
      %v2588 = vmul.f32 %v2364, 0.2
      %v2589 = vmul.f32 %v2366, 0.2
      %v2590 = vmul.f32 %v2405, 0.2
      %v2591 = vmul.f32 %v2407, 0.2
      %v2592 = vmul.f32 %v2446, 0.2
      %v2593 = vmul.f32 %v2448, 0.2
      %v2594 = vmul.f32 %v2487, 0.2
      %v2595 = vmul.f32 %v2489, 0.2
      %v2596 = vmul.f32 %v2528, 0.2
      %v2597 = vmul.f32 %v2530, 0.2
      %v2598 = vsel %vm2534, %v1913, %v2566
      %v2599 = vsel %vm2535, %v1915, %v2567
      %v2600 = vsel %vm2536, %v1954, %v2568
      %v2601 = vsel %vm2537, %v1956, %v2569
      %v2602 = vsel %vm2538, %v1995, %v2570
      %v2603 = vsel %vm2539, %v1997, %v2571
      %v2604 = vsel %vm2540, %v2036, %v2572
      %v2605 = vsel %vm2541, %v2038, %v2573
      %v2606 = vsel %vm2542, %v2077, %v2574
      %v2607 = vsel %vm2543, %v2079, %v2575
      %v2608 = vsel %vm2544, %v2118, %v2576
      %v2609 = vsel %vm2545, %v2120, %v2577
      %v2610 = vsel %vm2546, %v2159, %v2578
      %v2611 = vsel %vm2547, %v2161, %v2579
      %v2612 = vsel %vm2548, %v2200, %v2580
      %v2613 = vsel %vm2549, %v2202, %v2581
      %v2614 = vsel %vm2550, %v2241, %v2582
      %v2615 = vsel %vm2551, %v2243, %v2583
      %v2616 = vsel %vm2552, %v2282, %v2584
      %v2617 = vsel %vm2553, %v2284, %v2585
      %v2618 = vsel %vm2554, %v2323, %v2586
      %v2619 = vsel %vm2555, %v2325, %v2587
      %v2620 = vsel %vm2556, %v2364, %v2588
      %v2621 = vsel %vm2557, %v2366, %v2589
      %v2622 = vsel %vm2558, %v2405, %v2590
      %v2623 = vsel %vm2559, %v2407, %v2591
      %v2624 = vsel %vm2560, %v2446, %v2592
      %v2625 = vsel %vm2561, %v2448, %v2593
      %v2626 = vsel %vm2562, %v2487, %v2594
      %v2627 = vsel %vm2563, %v2489, %v2595
      %v2628 = vsel %vm2564, %v2528, %v2596
      %v2629 = vsel %vm2565, %v2530, %v2597
      %v2630 = vld [vmem:[%s322] sm:$0xff]
      %v2631 = vld [vmem:[%s322 + $0x8] sm:$0xff]
      %v2632 = vld [vmem:[%s322 + $0x10] sm:$0xff]
      %v2633 = vld [vmem:[%s322 + $0x18] sm:$0xff]
      %v2638 = vlaneseq
      %v2639 = vshrl.u32 %v2638, 7
      %v2640 = vsub.s32 0, %v2639
      %v2641 = vrot.slane %v2630, %v2640
      %v2642 = vlaneseq
      %v2643 = vshrl.u32 %v2642, 7
      %v2644 = vsub.s32 1, %v2643
      %v2645 = vrot.slane %v2630, %v2644
      %v2646 = vlaneseq
      %v2647 = vshrl.u32 %v2646, 7
      %v2648 = vsub.s32 2, %v2647
      %v2649 = vrot.slane %v2630, %v2648
      %v2650 = vlaneseq
      %v2651 = vshrl.u32 %v2650, 7
      %v2652 = vsub.s32 3, %v2651
      %v2653 = vrot.slane %v2630, %v2652
      %v2654 = vlaneseq
      %v2655 = vshrl.u32 %v2654, 7
      %v2656 = vsub.s32 4, %v2655
      %v2657 = vrot.slane %v2630, %v2656
      %v2658 = vlaneseq
      %v2659 = vshrl.u32 %v2658, 7
      %v2660 = vsub.s32 5, %v2659
      %v2661 = vrot.slane %v2630, %v2660
      %v2662 = vlaneseq
      %v2663 = vshrl.u32 %v2662, 7
      %v2664 = vsub.s32 6, %v2663
      %v2665 = vrot.slane %v2630, %v2664
      %v2666 = vlaneseq
      %v2667 = vshrl.u32 %v2666, 7
      %v2668 = vsub.s32 7, %v2667
      %v2669 = vrot.slane %v2630, %v2668
      %v2670 = vlaneseq
      %v2671 = vshrl.u32 %v2670, 7
      %v2672 = vsub.s32 0, %v2671
      %v2673 = vrot.slane %v2631, %v2672
      %v2674 = vlaneseq
      %v2675 = vshrl.u32 %v2674, 7
      %v2676 = vsub.s32 1, %v2675
      %v2677 = vrot.slane %v2631, %v2676
      %v2678 = vlaneseq
      %v2679 = vshrl.u32 %v2678, 7
      %v2680 = vsub.s32 2, %v2679
      %v2681 = vrot.slane %v2631, %v2680
      %v2682 = vlaneseq
      %v2683 = vshrl.u32 %v2682, 7
      %v2684 = vsub.s32 3, %v2683
      %v2685 = vrot.slane %v2631, %v2684
      %v2686 = vlaneseq
      %v2687 = vshrl.u32 %v2686, 7
      %v2688 = vsub.s32 4, %v2687
      %v2689 = vrot.slane %v2631, %v2688
      %v2690 = vlaneseq
      %v2691 = vshrl.u32 %v2690, 7
      %v2692 = vsub.s32 5, %v2691
      %v2693 = vrot.slane %v2631, %v2692
      %v2694 = vlaneseq
      %v2695 = vshrl.u32 %v2694, 7
      %v2696 = vsub.s32 6, %v2695
      %v2697 = vrot.slane %v2631, %v2696
      %v2698 = vlaneseq
      %v2699 = vshrl.u32 %v2698, 7
      %v2700 = vsub.s32 7, %v2699
      %v2701 = vrot.slane %v2631, %v2700
      %v2702 = vlaneseq
      %v2703 = vshrl.u32 %v2702, 7
      %v2704 = vsub.s32 0, %v2703
      %v2705 = vrot.slane %v2632, %v2704
      %v2706 = vlaneseq
      %v2707 = vshrl.u32 %v2706, 7
      %v2708 = vsub.s32 1, %v2707
      %v2709 = vrot.slane %v2632, %v2708
      %v2710 = vlaneseq
      %v2711 = vshrl.u32 %v2710, 7
      %v2712 = vsub.s32 2, %v2711
      %v2713 = vrot.slane %v2632, %v2712
      %v2714 = vlaneseq
      %v2715 = vshrl.u32 %v2714, 7
      %v2716 = vsub.s32 3, %v2715
      %v2717 = vrot.slane %v2632, %v2716
      %v2718 = vlaneseq
      %v2719 = vshrl.u32 %v2718, 7
      %v2720 = vsub.s32 4, %v2719
      %v2721 = vrot.slane %v2632, %v2720
      %v2722 = vlaneseq
      %v2723 = vshrl.u32 %v2722, 7
      %v2724 = vsub.s32 5, %v2723
      %v2725 = vrot.slane %v2632, %v2724
      %v2726 = vlaneseq
      %v2727 = vshrl.u32 %v2726, 7
      %v2728 = vsub.s32 6, %v2727
      %v2729 = vrot.slane %v2632, %v2728
      %v2730 = vlaneseq
      %v2731 = vshrl.u32 %v2730, 7
      %v2732 = vsub.s32 7, %v2731
      %v2733 = vrot.slane %v2632, %v2732
      %v2734 = vlaneseq
      %v2735 = vshrl.u32 %v2734, 7
      %v2736 = vsub.s32 0, %v2735
      %v2737 = vrot.slane %v2633, %v2736
      %v2738 = vlaneseq
      %v2739 = vshrl.u32 %v2738, 7
      %v2740 = vsub.s32 1, %v2739
      %v2741 = vrot.slane %v2633, %v2740
      %v2742 = vlaneseq
      %v2743 = vshrl.u32 %v2742, 7
      %v2744 = vsub.s32 2, %v2743
      %v2745 = vrot.slane %v2633, %v2744
      %v2746 = vlaneseq
      %v2747 = vshrl.u32 %v2746, 7
      %v2748 = vsub.s32 3, %v2747
      %v2749 = vrot.slane %v2633, %v2748
      %v2750 = vlaneseq
      %v2751 = vshrl.u32 %v2750, 7
      %v2752 = vsub.s32 4, %v2751
      %v2753 = vrot.slane %v2633, %v2752
      %v2754 = vlaneseq
      %v2755 = vshrl.u32 %v2754, 7
      %v2756 = vsub.s32 5, %v2755
      %v2757 = vrot.slane %v2633, %v2756
      %v2758 = vlaneseq
      %v2759 = vshrl.u32 %v2758, 7
      %v2760 = vsub.s32 6, %v2759
      %v2761 = vrot.slane %v2633, %v2760
      %v2762 = vlaneseq
      %v2763 = vshrl.u32 %v2762, 7
      %v2764 = vsub.s32 7, %v2763
      %v2765 = vrot.slane %v2633, %v2764
      %v2798 = vmul.f32 %v2598, %v2641
      %v2799 = vmul.f32 %v2599, %v2645
      %v2800 = vmul.f32 %v2600, %v2649
      %v2801 = vmul.f32 %v2601, %v2653
      %v2802 = vmul.f32 %v2602, %v2657
      %v2803 = vmul.f32 %v2603, %v2661
      %v2804 = vmul.f32 %v2604, %v2665
      %v2805 = vmul.f32 %v2605, %v2669
      %v2806 = vmul.f32 %v2606, %v2673
      %v2807 = vmul.f32 %v2607, %v2677
      %v2808 = vmul.f32 %v2608, %v2681
      %v2809 = vmul.f32 %v2609, %v2685
      %v2810 = vmul.f32 %v2610, %v2689
      %v2811 = vmul.f32 %v2611, %v2693
      %v2812 = vmul.f32 %v2612, %v2697
      %v2813 = vmul.f32 %v2613, %v2701
      %v2814 = vmul.f32 %v2614, %v2705
      %v2815 = vmul.f32 %v2615, %v2709
      %v2816 = vmul.f32 %v2616, %v2713
      %v2817 = vmul.f32 %v2617, %v2717
      %v2818 = vmul.f32 %v2618, %v2721
      %v2819 = vmul.f32 %v2619, %v2725
      %v2820 = vmul.f32 %v2620, %v2729
      %v2821 = vmul.f32 %v2621, %v2733
      %v2822 = vmul.f32 %v2622, %v2737
      %v2823 = vmul.f32 %v2623, %v2741
      %v2824 = vmul.f32 %v2624, %v2745
      %v2825 = vmul.f32 %v2625, %v2749
      %v2826 = vmul.f32 %v2626, %v2753
      %v2827 = vmul.f32 %v2627, %v2757
      %v2828 = vmul.f32 %v2628, %v2761
      %v2829 = vmul.f32 %v2629, %v2765
      %v2830 = vpack.c.bf16 %v2799, %v2798
      %v2831 = vpack.c.bf16 %v2801, %v2800
      %v2832 = vpack.c.bf16 %v2803, %v2802
      %v2833 = vpack.c.bf16 %v2805, %v2804
      %v2834 = vpack.c.bf16 %v2807, %v2806
      %v2835 = vpack.c.bf16 %v2809, %v2808
      %v2836 = vpack.c.bf16 %v2811, %v2810
      %v2837 = vpack.c.bf16 %v2813, %v2812
      %v2838 = vpack.c.bf16 %v2815, %v2814
      %v2839 = vpack.c.bf16 %v2817, %v2816
      %v2840 = vpack.c.bf16 %v2819, %v2818
      %v2841 = vpack.c.bf16 %v2821, %v2820
      %v2842 = vpack.c.bf16 %v2823, %v2822
      %v2843 = vpack.c.bf16 %v2825, %v2824
      %v2844 = vpack.c.bf16 %v2827, %v2826
      %v2845 = vpack.c.bf16 %v2829, %v2828
      %v2846 = vld [vmem:[#allocation2] sm:$0xff]
      %v2847 = vld [vmem:[#allocation2 + $0x8] sm:$0xff]
      %v2848 = vld [vmem:[%s327] sm:$0xff]
      %v2849 = vld [vmem:[%s327 + $0x8] sm:$0xff]
      %v2852 = vunpack.c.l.b16 %v2848
      %v2853 = vunpack.c.h.b16 %v2848
      %v2854 = vunpack.c.l.b16 %v2849
      %v2855 = vunpack.c.h.b16 %v2849
      %v2856 = vpack.c.b16 %v2854, %v2852
      %v2857 = vpack.c.b16 %v2855, %v2853
      %2860 = vmatprep.subr.bf16.mxu0 0
      %2861 = vmatpush1.bf16.msra.mxu0 %v2830
      %2862 = vmatprep.subr.bf16.mxu0 0
      %2863 = vmatpush1.bf16.msra.mxu0 %v2831
      %2864 = vmatprep.subr.bf16.mxu0 0
      %2865 = vmatpush1.bf16.msra.mxu0 %v2832
      %2866 = vmatprep.subr.bf16.mxu0 0
      %2867 = vmatpush1.bf16.msra.mxu0 %v2833
      %2868 = vmatprep.subr.bf16.mxu0 0
      %2869 = vmatpush1.bf16.msra.mxu0 %v2834
      %2870 = vmatprep.subr.bf16.mxu0 0
      %2871 = vmatpush1.bf16.msra.mxu0 %v2835
      %2872 = vmatprep.subr.bf16.mxu0 0
      %2873 = vmatpush1.bf16.msra.mxu0 %v2836
      %2874 = vmatprep.subr.bf16.mxu0 0
      %2875 = vmatpush1.bf16.msra.mxu0 %v2837
      %2876 = vmatprep.subr.bf16.mxu0 0
      %2877 = vmatpush1.bf16.msra.mxu0 %v2838
      %2878 = vmatprep.subr.bf16.mxu0 0
      %2879 = vmatpush1.bf16.msra.mxu0 %v2839
      %2880 = vmatprep.subr.bf16.mxu0 0
      %2881 = vmatpush1.bf16.msra.mxu0 %v2840
      %2882 = vmatprep.subr.bf16.mxu0 0
      %2883 = vmatpush1.bf16.msra.mxu0 %v2841
      %2884 = vmatprep.subr.bf16.mxu0 0
      %2885 = vmatpush1.bf16.msra.mxu0 %v2842
      %2886 = vmatprep.subr.bf16.mxu0 0
      %2887 = vmatpush1.bf16.msra.mxu0 %v2843
      %2888 = vmatprep.subr.bf16.mxu0 0
      %2889 = vmatpush1.bf16.msra.mxu0 %v2844
      %2890 = vmatprep.subr.bf16.mxu0 0
      %2891 = vmatpush1.bf16.msra.mxu0 %v2845
      %2892 = vmatprep.mubr.bf16.mxu0 %v2857
      %2893 = vmatmul.mubr.bf16.gmra.mrb[0].mxu0 %v2856
      %v2894 = vpop.f32.mrb[0].mxu0
      %v2895 = vadd.f32 0.0, %v2894
      %v2896 = vpop.f32.mrb[0].mxu0
      %v2897 = vpop.f32.mrb[0].mxu0
      %v2898 = vadd.f32 0.0, %v2897
      %v2899 = vpop.f32.mrb[0].mxu0
      %2900 = vdwg.mxu0
      %v2901 = vadd.f32 %v2846, %v2895
      %v2902 = vadd.f32 %v2847, %v2898
      %2903 = vst [vmem:[#allocation2] sm:$0xff] %v2901
      %2904 = vst [vmem:[#allocation2 + $0x8] sm:$0xff] %v2902
      %p2905 = scmp.eq.s32.totalorder %s19, 1
      // Predicated region
      $region57: #{discriminator_forward.1} parent=51 // pred_check
        %p2906 = pneg %p2905
      $region58: #{discriminator_forward.1} parent=51 // pred_check_branch
        %2908 = sbr.rel (%p2906) target = $region60
      $region59: #{discriminator_forward.1} parent=51 // pred_region
        %v2909 = vld [vmem:[#allocation2] sm:$0xff]
        %v2910 = vld [vmem:[#allocation2 + $0x8] sm:$0xff]
        %2911 = vadd.xlane.f32.xlu0 %v2909
        %v2912 = vpop.xlane.xlu0 %2911
        %2913 = vadd.xlane.f32.xlu0 %v2910
        %v2914 = vpop.xlane.xlu0 %2913
        %v2915 = vrcp.pop 128.0
        %v2916 = vmul.f32 %v2912, %v2915
        %v2917 = vmul.f32 %v2914, %v2915
        %v2918 = vsub.f32 %v2909, %v2916
        %v2919 = vsub.f32 %v2910, %v2917
        %v2920 = vmul.f32 %v2918, %v2918
        %v2921 = vmul.f32 %v2919, %v2919
        %2922 = vadd.xlane.f32.xlu0 %v2920
        %v2923 = vpop.xlane.xlu0 %2922
        %2924 = vadd.xlane.f32.xlu0 %v2921
        %v2925 = vpop.xlane.xlu0 %2924
        %v2926 = vmul.f32 %v2923, %v2915
        %v2927 = vmul.f32 %v2925, %v2915
        %v2928 = vadd.f32 %v2926, 1e-05
        %v2929 = vadd.f32 %v2927, 1e-05
        %v2930 = vrsqrt.pop %v2928
        %v2931 = vrsqrt.pop %v2929
        %v2932 = vmul.f32 %v2918, %v2930
        %v2933 = vmul.f32 %v2919, %v2931
        %vm2934 = vcmp.gt.f32.partialorder %v2932, 0.0
        %vm2935 = vcmp.gt.f32.partialorder %v2933, 0.0
        %v2936 = vmul.f32 %v2932, 0.2
        %v2937 = vmul.f32 %v2933, 0.2
        %v2938 = vsel %vm2934, %v2932, %v2936
        %v2939 = vsel %vm2935, %v2933, %v2937
        %v2940 = vld [vmem:[%s6] sm:$0xff]
        %v2941 = vld [vmem:[%s6 + $0x8] sm:$0xff]
        %v2942 = vld [vmem:[%s6 + $0x10] sm:$0xff]
        %v2943 = vld [vmem:[%s6 + $0x18] sm:$0xff]
        %v2944 = vld [vmem:[%s6 + $0x20] sm:$0xff]
        %v2945 = vld [vmem:[%s6 + $0x28] sm:$0xff]
        %v2946 = vld [vmem:[%s6 + $0x30] sm:$0xff]
        %v2947 = vld [vmem:[%s6 + $0x38] sm:$0xff]
        %v2948 = vld [vmem:[%s6 + $0x40] sm:$0xff]
        %v2949 = vld [vmem:[%s6 + $0x48] sm:$0xff]
        %v2950 = vld [vmem:[%s6 + $0x50] sm:$0xff]
        %v2951 = vld [vmem:[%s6 + $0x58] sm:$0xff]
        %v2952 = vld [vmem:[%s6 + $0x60] sm:$0xff]
        %v2953 = vld [vmem:[%s6 + $0x68] sm:$0xff]
        %v2954 = vld [vmem:[%s6 + $0x70] sm:$0xff]
        %v2955 = vld [vmem:[%s6 + $0x78] sm:$0xff]
        %v2956 = vld [vmem:[%s5] sm:$0xff]
        %v2957 = vld [vmem:[%s5 + $0x8] sm:$0xff]
        %v2958 = vmul.f32 %v2956, %v2938
        %v2959 = vmul.f32 %v2957, %v2939
        %2960 = vmatprep.subr.mxu0 0.0
        %2961 = vmatpush1.msra.mxu0 %v2940
        %2962 = vmatprep.subr.mxu0 0.0
        %2963 = vmatpush1.msra.mxu0 %v2941
        %2964 = vmatprep.subr.mxu0 0.0
        %2965 = vmatpush1.msra.mxu0 %v2942
        %2966 = vmatprep.subr.mxu0 0.0
        %2967 = vmatpush1.msra.mxu0 %v2943
        %2968 = vmatprep.subr.mxu0 0.0
        %2969 = vmatpush1.msra.mxu0 %v2944
        %2970 = vmatprep.subr.mxu0 0.0
        %2971 = vmatpush1.msra.mxu0 %v2945
        %2972 = vmatprep.subr.mxu0 0.0
        %2973 = vmatpush1.msra.mxu0 %v2946
        %2974 = vmatprep.subr.mxu0 0.0
        %2975 = vmatpush1.msra.mxu0 %v2947
        %2976 = vmatprep.subr.mxu0 0.0
        %2977 = vmatpush1.msra.mxu0 %v2948
        %2978 = vmatprep.subr.mxu0 0.0
        %2979 = vmatpush1.msra.mxu0 %v2949
        %2980 = vmatprep.subr.mxu0 0.0
        %2981 = vmatpush1.msra.mxu0 %v2950
        %2982 = vmatprep.subr.mxu0 0.0
        %2983 = vmatpush1.msra.mxu0 %v2951
        %2984 = vmatprep.subr.mxu0 0.0
        %2985 = vmatpush1.msra.mxu0 %v2952
        %2986 = vmatprep.subr.mxu0 0.0
        %2987 = vmatpush1.msra.mxu0 %v2953
        %2988 = vmatprep.subr.mxu0 0.0
        %2989 = vmatpush1.msra.mxu0 %v2954
        %2990 = vmatprep.subr.mxu0 0.0
        %2991 = vmatpush1.msra.mxu0 %v2955
        %2992 = vmatprep.subr.mxu0 0.0
        %2993 = vmatpush1.msra.mxu0 0.0
        %2994 = vmatprep.subr.mxu0 0.0
        %2995 = vmatpush1.msra.mxu0 0.0
        %2996 = vmatprep.subr.mxu0 0.0
        %2997 = vmatpush1.msra.mxu0 0.0
        %2998 = vmatprep.subr.mxu0 0.0
        %2999 = vmatpush1.msra.mxu0 0.0
        %3000 = vmatprep.subr.mxu0 0.0
        %3001 = vmatpush1.msra.mxu0 0.0
        %3002 = vmatprep.subr.mxu0 0.0
        %3003 = vmatpush1.msra.mxu0 0.0
        %3004 = vmatprep.subr.mxu0 0.0
        %3005 = vmatpush1.msra.mxu0 0.0
        %3006 = vmatprep.subr.mxu0 0.0
        %3007 = vmatpush1.msra.mxu0 0.0
        %3008 = vmatprep.subr.mxu0 0.0
        %3009 = vmatpush1.msra.mxu0 0.0
        %3010 = vmatprep.subr.mxu0 0.0
        %3011 = vmatpush1.msra.mxu0 0.0
        %3012 = vmatprep.subr.mxu0 0.0
        %3013 = vmatpush1.msra.mxu0 0.0
        %3014 = vmatprep.subr.mxu0 0.0
        %3015 = vmatpush1.msra.mxu0 0.0
        %3016 = vmatprep.subr.mxu0 0.0
        %3017 = vmatpush1.msra.mxu0 0.0
        %3018 = vmatprep.subr.mxu0 0.0
        %3019 = vmatpush1.msra.mxu0 0.0
        %3020 = vmatprep.subr.mxu0 0.0
        %3021 = vmatpush1.msra.mxu0 0.0
        %3022 = vmatprep.subr.mxu0 0.0
        %3023 = vmatpush1.msra.mxu0 0.0
        %3024 = vmatprep.mubr.f32.mxu0 0.0
        %3025 = vmatmul.mubr.f32.gmra.mrb[0].mxu0 %v2958
        %v3026 = vpop.f32.mrb[0].mxu0
        %v3027 = vadd.f32 0.0, %v3026
        %v3028 = vpop.f32.mrb[0].mxu0
        %3029 = vmatprep.mubr.f32.mxu0 0.0
        %3030 = vmatmul.mubr.f32.gmra.mrb[0].mxu0 %v2959
        %v3031 = vpop.f32.mrb[0].mxu0
        %v3032 = vadd.f32 0.0, %v3031
        %v3033 = vpop.f32.mrb[0].mxu0
        %3034 = vdwg.mxu0
        %v3035 = vadd.f32 %v3027, %v3032
        %v3036 = vrot.slane %v3035, 4
        %v3037 = vadd.f32 %v3035, %v3036
        %v3038 = vrot.slane %v3037, 2
        %v3039 = vadd.f32 %v3037, %v3038
        %v3040 = vrot.slane %v3039, 1
        %v3041 = vadd.f32 %v3039, %v3040
        %s3042 = scalar_lea.vmem %s5, 16
        %v3043 = vld [vmem:[%s3042] sm:$0xff]
        %v3044 = vld [vmem:[%s3042 + $0x8] sm:$0xff]
        %v3045 = vmul.f32 %v3043, %v2938
        %v3046 = vmul.f32 %v3044, %v2939
        %3047 = vmatprep.subr.mxu0 0.0
        %3048 = vmatpush1.msra.mxu0 %v2940
        %3049 = vmatprep.subr.mxu0 0.0
        %3050 = vmatpush1.msra.mxu0 %v2941
        %3051 = vmatprep.subr.mxu0 0.0
        %3052 = vmatpush1.msra.mxu0 %v2942
        %3053 = vmatprep.subr.mxu0 0.0
        %3054 = vmatpush1.msra.mxu0 %v2943
        %3055 = vmatprep.subr.mxu0 0.0
        %3056 = vmatpush1.msra.mxu0 %v2944
        %3057 = vmatprep.subr.mxu0 0.0
        %3058 = vmatpush1.msra.mxu0 %v2945
        %3059 = vmatprep.subr.mxu0 0.0
        %3060 = vmatpush1.msra.mxu0 %v2946
        %3061 = vmatprep.subr.mxu0 0.0
        %3062 = vmatpush1.msra.mxu0 %v2947
        %3063 = vmatprep.subr.mxu0 0.0
        %3064 = vmatpush1.msra.mxu0 %v2948
        %3065 = vmatprep.subr.mxu0 0.0
        %3066 = vmatpush1.msra.mxu0 %v2949
        %3067 = vmatprep.subr.mxu0 0.0
        %3068 = vmatpush1.msra.mxu0 %v2950
        %3069 = vmatprep.subr.mxu0 0.0
        %3070 = vmatpush1.msra.mxu0 %v2951
        %3071 = vmatprep.subr.mxu0 0.0
        %3072 = vmatpush1.msra.mxu0 %v2952
        %3073 = vmatprep.subr.mxu0 0.0
        %3074 = vmatpush1.msra.mxu0 %v2953
        %3075 = vmatprep.subr.mxu0 0.0
        %3076 = vmatpush1.msra.mxu0 %v2954
        %3077 = vmatprep.subr.mxu0 0.0
        %3078 = vmatpush1.msra.mxu0 %v2955
        %3079 = vmatprep.subr.mxu0 0.0
        %3080 = vmatpush1.msra.mxu0 0.0
        %3081 = vmatprep.subr.mxu0 0.0
        %3082 = vmatpush1.msra.mxu0 0.0
        %3083 = vmatprep.subr.mxu0 0.0
        %3084 = vmatpush1.msra.mxu0 0.0
        %3085 = vmatprep.subr.mxu0 0.0
        %3086 = vmatpush1.msra.mxu0 0.0
        %3087 = vmatprep.subr.mxu0 0.0
        %3088 = vmatpush1.msra.mxu0 0.0
        %3089 = vmatprep.subr.mxu0 0.0
        %3090 = vmatpush1.msra.mxu0 0.0
        %3091 = vmatprep.subr.mxu0 0.0
        %3092 = vmatpush1.msra.mxu0 0.0
        %3093 = vmatprep.subr.mxu0 0.0
        %3094 = vmatpush1.msra.mxu0 0.0
        %3095 = vmatprep.subr.mxu0 0.0
        %3096 = vmatpush1.msra.mxu0 0.0
        %3097 = vmatprep.subr.mxu0 0.0
        %3098 = vmatpush1.msra.mxu0 0.0
        %3099 = vmatprep.subr.mxu0 0.0
        %3100 = vmatpush1.msra.mxu0 0.0
        %3101 = vmatprep.subr.mxu0 0.0
        %3102 = vmatpush1.msra.mxu0 0.0
        %3103 = vmatprep.subr.mxu0 0.0
        %3104 = vmatpush1.msra.mxu0 0.0
        %3105 = vmatprep.subr.mxu0 0.0
        %3106 = vmatpush1.msra.mxu0 0.0
        %3107 = vmatprep.subr.mxu0 0.0
        %3108 = vmatpush1.msra.mxu0 0.0
        %3109 = vmatprep.subr.mxu0 0.0
        %3110 = vmatpush1.msra.mxu0 0.0
        %3111 = vmatprep.mubr.f32.mxu0 0.0
        %3112 = vmatmul.mubr.f32.gmra.mrb[0].mxu0 %v3045
        %v3113 = vpop.f32.mrb[0].mxu0
        %v3114 = vadd.f32 0.0, %v3113
        %v3115 = vpop.f32.mrb[0].mxu0
        %3116 = vmatprep.mubr.f32.mxu0 0.0
        %3117 = vmatmul.mubr.f32.gmra.mrb[0].mxu0 %v3046
        %v3118 = vpop.f32.mrb[0].mxu0
        %v3119 = vadd.f32 0.0, %v3118
        %v3120 = vpop.f32.mrb[0].mxu0
        %3121 = vdwg.mxu0
        %v3122 = vadd.f32 %v3114, %v3119
        %v3123 = vrot.slane %v3122, 4
        %v3124 = vadd.f32 %v3122, %v3123
        %v3125 = vrot.slane %v3124, 2
        %v3126 = vadd.f32 %v3124, %v3125
        %v3127 = vrot.slane %v3126, 1
        %v3128 = vadd.f32 %v3126, %v3127
        %s3129 = scalar_lea.vmem %s5, 32
        %v3130 = vld [vmem:[%s3129] sm:$0xff]
        %v3131 = vld [vmem:[%s3129 + $0x8] sm:$0xff]
        %v3132 = vmul.f32 %v3130, %v2938
        %v3133 = vmul.f32 %v3131, %v2939
        %3134 = vmatprep.subr.mxu0 0.0
        %3135 = vmatpush1.msra.mxu0 %v2940
        %3136 = vmatprep.subr.mxu0 0.0
        %3137 = vmatpush1.msra.mxu0 %v2941
        %3138 = vmatprep.subr.mxu0 0.0
        %3139 = vmatpush1.msra.mxu0 %v2942
        %3140 = vmatprep.subr.mxu0 0.0
        %3141 = vmatpush1.msra.mxu0 %v2943
        %3142 = vmatprep.subr.mxu0 0.0
        %3143 = vmatpush1.msra.mxu0 %v2944
        %3144 = vmatprep.subr.mxu0 0.0
        %3145 = vmatpush1.msra.mxu0 %v2945
        %3146 = vmatprep.subr.mxu0 0.0
        %3147 = vmatpush1.msra.mxu0 %v2946
        %3148 = vmatprep.subr.mxu0 0.0
        %3149 = vmatpush1.msra.mxu0 %v2947
        %3150 = vmatprep.subr.mxu0 0.0
        %3151 = vmatpush1.msra.mxu0 %v2948
        %3152 = vmatprep.subr.mxu0 0.0
        %3153 = vmatpush1.msra.mxu0 %v2949
        %3154 = vmatprep.subr.mxu0 0.0
        %3155 = vmatpush1.msra.mxu0 %v2950
        %3156 = vmatprep.subr.mxu0 0.0
        %3157 = vmatpush1.msra.mxu0 %v2951
        %3158 = vmatprep.subr.mxu0 0.0
        %3159 = vmatpush1.msra.mxu0 %v2952
        %3160 = vmatprep.subr.mxu0 0.0
        %3161 = vmatpush1.msra.mxu0 %v2953
        %3162 = vmatprep.subr.mxu0 0.0
        %3163 = vmatpush1.msra.mxu0 %v2954
        %3164 = vmatprep.subr.mxu0 0.0
        %3165 = vmatpush1.msra.mxu0 %v2955
        %3166 = vmatprep.subr.mxu0 0.0
        %3167 = vmatpush1.msra.mxu0 0.0
        %3168 = vmatprep.subr.mxu0 0.0
        %3169 = vmatpush1.msra.mxu0 0.0
        %3170 = vmatprep.subr.mxu0 0.0
        %3171 = vmatpush1.msra.mxu0 0.0
        %3172 = vmatprep.subr.mxu0 0.0
        %3173 = vmatpush1.msra.mxu0 0.0
        %3174 = vmatprep.subr.mxu0 0.0
        %3175 = vmatpush1.msra.mxu0 0.0
        %3176 = vmatprep.subr.mxu0 0.0
        %3177 = vmatpush1.msra.mxu0 0.0
        %3178 = vmatprep.subr.mxu0 0.0
        %3179 = vmatpush1.msra.mxu0 0.0
        %3180 = vmatprep.subr.mxu0 0.0
        %3181 = vmatpush1.msra.mxu0 0.0
        %3182 = vmatprep.subr.mxu0 0.0
        %3183 = vmatpush1.msra.mxu0 0.0
        %3184 = vmatprep.subr.mxu0 0.0
        %3185 = vmatpush1.msra.mxu0 0.0
        %3186 = vmatprep.subr.mxu0 0.0
        %3187 = vmatpush1.msra.mxu0 0.0
        %3188 = vmatprep.subr.mxu0 0.0
        %3189 = vmatpush1.msra.mxu0 0.0
        %3190 = vmatprep.subr.mxu0 0.0
        %3191 = vmatpush1.msra.mxu0 0.0
        %3192 = vmatprep.subr.mxu0 0.0
        %3193 = vmatpush1.msra.mxu0 0.0
        %3194 = vmatprep.subr.mxu0 0.0
        %3195 = vmatpush1.msra.mxu0 0.0
        %3196 = vmatprep.subr.mxu0 0.0
        %3197 = vmatpush1.msra.mxu0 0.0
        %3198 = vmatprep.mubr.f32.mxu0 0.0
        %3199 = vmatmul.mubr.f32.gmra.mrb[0].mxu0 %v3132
        %v3200 = vpop.f32.mrb[0].mxu0
        %v3201 = vadd.f32 0.0, %v3200
        %v3202 = vpop.f32.mrb[0].mxu0
        %3203 = vmatprep.mubr.f32.mxu0 0.0
        %3204 = vmatmul.mubr.f32.gmra.mrb[0].mxu0 %v3133
        %v3205 = vpop.f32.mrb[0].mxu0
        %v3206 = vadd.f32 0.0, %v3205
        %v3207 = vpop.f32.mrb[0].mxu0
        %3208 = vdwg.mxu0
        %v3209 = vadd.f32 %v3201, %v3206
        %v3210 = vrot.slane %v3209, 4
        %v3211 = vadd.f32 %v3209, %v3210
        %v3212 = vrot.slane %v3211, 2
        %v3213 = vadd.f32 %v3211, %v3212
        %v3214 = vrot.slane %v3213, 1
        %v3215 = vadd.f32 %v3213, %v3214
        %s3216 = scalar_lea.vmem %s5, 48
        %v3217 = vld [vmem:[%s3216] sm:$0xff]
        %v3218 = vld [vmem:[%s3216 + $0x8] sm:$0xff]
        %v3219 = vmul.f32 %v3217, %v2938
        %v3220 = vmul.f32 %v3218, %v2939
        %3221 = vmatprep.subr.mxu0 0.0
        %3222 = vmatpush1.msra.mxu0 %v2940
        %3223 = vmatprep.subr.mxu0 0.0
        %3224 = vmatpush1.msra.mxu0 %v2941
        %3225 = vmatprep.subr.mxu0 0.0
        %3226 = vmatpush1.msra.mxu0 %v2942
        %3227 = vmatprep.subr.mxu0 0.0
        %3228 = vmatpush1.msra.mxu0 %v2943
        %3229 = vmatprep.subr.mxu0 0.0
        %3230 = vmatpush1.msra.mxu0 %v2944
        %3231 = vmatprep.subr.mxu0 0.0
        %3232 = vmatpush1.msra.mxu0 %v2945
        %3233 = vmatprep.subr.mxu0 0.0
        %3234 = vmatpush1.msra.mxu0 %v2946
        %3235 = vmatprep.subr.mxu0 0.0
        %3236 = vmatpush1.msra.mxu0 %v2947
        %3237 = vmatprep.subr.mxu0 0.0
        %3238 = vmatpush1.msra.mxu0 %v2948
        %3239 = vmatprep.subr.mxu0 0.0
        %3240 = vmatpush1.msra.mxu0 %v2949
        %3241 = vmatprep.subr.mxu0 0.0
        %3242 = vmatpush1.msra.mxu0 %v2950
        %3243 = vmatprep.subr.mxu0 0.0
        %3244 = vmatpush1.msra.mxu0 %v2951
        %3245 = vmatprep.subr.mxu0 0.0
        %3246 = vmatpush1.msra.mxu0 %v2952
        %3247 = vmatprep.subr.mxu0 0.0
        %3248 = vmatpush1.msra.mxu0 %v2953
        %3249 = vmatprep.subr.mxu0 0.0
        %3250 = vmatpush1.msra.mxu0 %v2954
        %3251 = vmatprep.subr.mxu0 0.0
        %3252 = vmatpush1.msra.mxu0 %v2955
        %3253 = vmatprep.subr.mxu0 0.0
        %3254 = vmatpush1.msra.mxu0 0.0
        %3255 = vmatprep.subr.mxu0 0.0
        %3256 = vmatpush1.msra.mxu0 0.0
        %3257 = vmatprep.subr.mxu0 0.0
        %3258 = vmatpush1.msra.mxu0 0.0
        %3259 = vmatprep.subr.mxu0 0.0
        %3260 = vmatpush1.msra.mxu0 0.0
        %3261 = vmatprep.subr.mxu0 0.0
        %3262 = vmatpush1.msra.mxu0 0.0
        %3263 = vmatprep.subr.mxu0 0.0
        %3264 = vmatpush1.msra.mxu0 0.0
        %3265 = vmatprep.subr.mxu0 0.0
        %3266 = vmatpush1.msra.mxu0 0.0
        %3267 = vmatprep.subr.mxu0 0.0
        %3268 = vmatpush1.msra.mxu0 0.0
        %3269 = vmatprep.subr.mxu0 0.0
        %3270 = vmatpush1.msra.mxu0 0.0
        %3271 = vmatprep.subr.mxu0 0.0
        %3272 = vmatpush1.msra.mxu0 0.0
        %3273 = vmatprep.subr.mxu0 0.0
        %3274 = vmatpush1.msra.mxu0 0.0
        %3275 = vmatprep.subr.mxu0 0.0
        %3276 = vmatpush1.msra.mxu0 0.0
        %3277 = vmatprep.subr.mxu0 0.0
        %3278 = vmatpush1.msra.mxu0 0.0
        %3279 = vmatprep.subr.mxu0 0.0
        %3280 = vmatpush1.msra.mxu0 0.0
        %3281 = vmatprep.subr.mxu0 0.0
        %3282 = vmatpush1.msra.mxu0 0.0
        %3283 = vmatprep.subr.mxu0 0.0
        %3284 = vmatpush1.msra.mxu0 0.0
        %3285 = vmatprep.mubr.f32.mxu0 0.0
        %3286 = vmatmul.mubr.f32.gmra.mrb[0].mxu0 %v3219
        %v3287 = vpop.f32.mrb[0].mxu0
        %v3288 = vadd.f32 0.0, %v3287
        %v3289 = vpop.f32.mrb[0].mxu0
        %3290 = vmatprep.mubr.f32.mxu0 0.0
        %3291 = vmatmul.mubr.f32.gmra.mrb[0].mxu0 %v3220
        %v3292 = vpop.f32.mrb[0].mxu0
        %v3293 = vadd.f32 0.0, %v3292
        %v3294 = vpop.f32.mrb[0].mxu0
        %3295 = vdwg.mxu0
        %v3296 = vadd.f32 %v3288, %v3293
        %v3297 = vrot.slane %v3296, 4
        %v3298 = vadd.f32 %v3296, %v3297
        %v3299 = vrot.slane %v3298, 2
        %v3300 = vadd.f32 %v3298, %v3299
        %v3301 = vrot.slane %v3300, 1
        %v3302 = vadd.f32 %v3300, %v3301
        %vm3303 = vcmask 1040384
        %v3304 = vsel %vm3303, %v3041, %v3128
        %vm3305 = vcmask 1041408
        %v3306 = vsel %vm3305, %v3304, %v3215
        %vm3307 = vcmask 1042432
        %v3308 = vsel %vm3307, %v3306, %v3302
        %v3309 = vld [vmem:[%s7] sm:$0xf]
        %3311 = vset.pattern.permute.xlu0 0
        %3312 = vperm.xlu0 %3311, %v3309
        %v3313 = vpop.permute.xlu0 %3312
        %v3315 = vadd.f32 %v3308, %v3313
        %v3316 = vxor.u32 %v3315, 2147483648
        %v3317 = vmul.f32 %v3316, 1.442695
        %v3318 = vpow.pop %v3317
        %v3319 = vadd.f32 %v3318, 1.0
        %v3320 = vrcp.pop %v3319
        %v3321 = vmul.f32 1.0, %v3320
        %3322 = vst [vmem:[%s8] sm:$0xf] %v3321
      $region60: #{discriminator_forward.1} parent=51 // pred_fallthru
        _
      // Predicated region
      $region61: #{discriminator_forward.1} parent=51 // pred_check
        %p3323 = pneg %p215
      $region62: #{discriminator_forward.1} parent=51 // pred_check_branch
        %3325 = sbr.rel (%p3323) target = $region64
      $region63: #{discriminator_forward.1} parent=51 // pred_region
        _
      $region64: #{discriminator_forward.1} parent=51 // pred_fallthru
        _
      // Predicated region
      $region65: #{discriminator_forward.1} parent=51 // pred_check
        %p3326 = pneg %p215
      $region66: #{discriminator_forward.1} parent=51 // pred_check_branch
        %3328 = sbr.rel (%p3326) target = $region68
      $region67: #{discriminator_forward.1} parent=51 // pred_region
        _
      $region68: #{discriminator_forward.1} parent=51 // pred_fallthru
        _
    $region52: #{discriminator_forward.1} parent=5 // pred_fallthru
      _
    %p3329 = scmp.le.s32.totalorder 2, %s14
    // Predicated region
    $region69: #{discriminator_forward.1} parent=5 // pred_check
      %p3330 = pneg %p3329
    $region70: #{discriminator_forward.1} parent=5 // pred_check_branch
      %3332 = sbr.rel (%p3330) target = $region72
    $region71: #{discriminator_forward.1} parent=5 // pred_region
      %s3333 = ssub.s32 %s14, 2
    $region72: #{discriminator_forward.1} parent=5 // pred_fallthru
      _
  $region6: #{discriminator_forward.1} parent=0 // loop_footer
    %s18 = sadd.s32 1, %s14
  $region7: #{discriminator_forward.1} parent=0 // loop_footer_branch
    %13 = sbr.rel target = $region3
  $region8: #{discriminator_forward.1} parent=0 // loop_exit
    _

</llo_original>
